<compile_context>
chip_gen: v7x
topology: tpu7x:2x2x1
jax: 0.10.0
libtpu: 0.0.40
codegen_flags: <defaults>
</compile_context>

<pallas_src>
import functools

import jax
import jax.numpy as jnp
from jax import lax
from jax.experimental import pallas as pl
from jax.experimental.pallas import tpu as pltpu


def _cross_attn_kernel(tok_ref, lq_ref, wq3_ref, bq3_ref, wk3_ref, bk3_ref,
                       wv3_ref, bv3_ref, wo3_ref, bo_ref, out_ref,
                       k_sc, v_sc, *, heads, scale):
    """One learned-query tile of the forward pass.

    K/V projections are computed once (grid step 0) into persistent VMEM
    scratch; every matmul is head-batched (batch dim leading), bf16 operands
    with f32 accumulation.
    """
    f32 = jnp.float32
    bf16 = jnp.bfloat16
    t, dm = tok_ref.shape
    tv = lq_ref.shape[0]

    # 'hrd,hkd->hrk': batch dim leading, contract minor dims of both operands.
    contract_minor = (((2,), (2,)), ((0,), (0,)))

    # --- K / V projections: computed once, cached in scratch across the grid.
    @pl.when(pl.program_id(0) == 0)
    def _():
        tok_b = jnp.broadcast_to(tok_ref[...][None], (heads, t, dm))
        k3 = lax.dot_general(tok_b, wk3_ref[...], contract_minor,
                             preferred_element_type=f32) + bk3_ref[...]
        v3 = lax.dot_general(tok_b, wv3_ref[...], contract_minor,
                             preferred_element_type=f32) + bv3_ref[...]
        k_sc[...] = k3.astype(bf16)
        v_sc[...] = v3.astype(bf16)

    # --- Q projection for this learned-query tile: [H, TV, D] in f32.
    lq_b = jnp.broadcast_to(lq_ref[...][None], (heads, tv, dm))
    q3 = lax.dot_general(lq_b, wq3_ref[...], contract_minor,
                         preferred_element_type=f32) + bq3_ref[...]

    # --- Attention scores, head-batched: [H, TV, T], f32 accumulation.
    scores = lax.dot_general(q3.astype(bf16), k_sc[...], contract_minor,
                             preferred_element_type=f32) * scale

    # --- Softmax over keys in f32; reciprocal on the EUP.
    m = jnp.max(scores, axis=-1, keepdims=True)
    p = jnp.exp(scores - m)
    denom = jnp.sum(p, axis=-1, keepdims=True)
    probs = p * pl.reciprocal(denom, approx=True)

    # --- Context: 'hvt,htd->hvd'  ->  [H, TV, D].
    ctx = lax.dot_general(probs.astype(bf16), v_sc[...],
                          (((2,), (1,)), ((0,), (0,))),
                          preferred_element_type=f32)

    # --- Output projection with Wo pre-arranged as [H, Dm_out, D]; the head
    #     sum replaces the old concat + single big matmul.
    partial = lax.dot_general(ctx.astype(bf16), wo3_ref[...], contract_minor,
                              preferred_element_type=f32)        # [H, TV, Dm]
    out = jnp.sum(partial, axis=0) + bo_ref[...]                 # [TV, Dm]
    out_ref[...] = out.astype(out_ref.dtype)


def prepare_params(params, *, heads):
    """One-time layout/dtype prep (module-init time, NOT per forward).

    Produces head-major bf16 weight slabs so the kernel never transposes,
    reshapes or slices.  Only a single weight transpose (Wo) is ever
    materialized, and only once.
    """
    lq = params["learned_queries"]
    _, dm = lq.shape
    assert dm % heads == 0, "llm_dim must be divisible by heads"
    d = dm // heads
    bf16 = jnp.bfloat16

    def split_out(w):   # [Dm_out, Dm_in] -> [H, D, Dm_in]   (pure reshape)
        return w.reshape(heads, d, dm).astype(bf16)

    def split_bias(b):  # [Dm] -> [H, 1, D]
        return b.reshape(heads, 1, d).astype(jnp.float32)

    # Wo: [Dm_out, (H D)] -> [H, Dm_out, D]   (one-time transpose at init).
    wo3 = jnp.transpose(params["o_w"].reshape(dm, heads, d), (1, 0, 2)).astype(bf16)

    return {
        "lq": lq.astype(bf16),                                     # [V, Dm]
        "wq3": split_out(params["q_w"]), "bq3": split_bias(params["q_b"]),
        "wk3": split_out(params["k_w"]), "bk3": split_bias(params["k_b"]),
        "wv3": split_out(params["v_w"]), "bv3": split_bias(params["v_b"]),
        "wo3": wo3,
        "bo": params["o_b"].reshape(1, dm).astype(jnp.float32),    # [1, Dm]
    }


def cross_attention_reducer(token_input, prepped):
    """token_input: [T, llm_dim] float32. prepped: output of prepare_params()."""
    wq3 = prepped["wq3"]
    heads, head_dim, dm = wq3.shape
    lq = prepped["lq"]
    v_rows = lq.shape[0]
    t = token_input.shape[0]
    scale = head_dim ** -0.5

    # Learned-query row tile: multiple of 8 sublanes (or the full extent).
    tv = 8 if v_rows % 8 == 0 else v_rows
    grid = (v_rows // tv,)

    tok_b = token_input.astype(jnp.bfloat16)   # only per-call prep

    def whole(shape):
        zeros = (0,) * len(shape)
        return pl.BlockSpec(shape, lambda i: zeros)   # same block every step

    in_specs = [
        whole((t, dm)),                                 # token_input (bf16)
        pl.BlockSpec((tv, dm), lambda i: (i, 0)),       # learned queries tile
        whole(prepped["wq3"].shape), whole(prepped["bq3"].shape),
        whole(prepped["wk3"].shape), whole(prepped["bk3"].shape),
        whole(prepped["wv3"].shape), whole(prepped["bv3"].shape),
        whole(prepped["wo3"].shape), whole(prepped["bo"].shape),
    ]

    # K/V cached in persistent VMEM scratch (bf16), computed on grid step 0.
    scratch_shapes = [
        pltpu.VMEM((heads, t, head_dim), jnp.bfloat16),   # k_sc
        pltpu.VMEM((heads, t, head_dim), jnp.bfloat16),   # v_sc
    ]

    flops = (2 * v_rows * dm * dm              # q projection
             + 4 * t * dm * dm                 # k/v projection (once)
             + 4 * v_rows * t * dm             # scores + context
             + 2 * v_rows * dm * dm)           # output projection
    bytes_accessed = (2 * (t * dm + v_rows * dm + 4 * dm * dm)   # bf16 in
                      + 4 * (4 * dm + v_rows * dm))              # f32 biases + out
    cost = pl.CostEstimate(flops=flops,
                           transcendentals=heads * v_rows * t,
                           bytes_accessed=bytes_accessed)

    kernel = functools.partial(_cross_attn_kernel, heads=heads, scale=scale)

    return pl.pallas_call(
        kernel,
        out_shape=jax.ShapeDtypeStruct((v_rows, dm), jnp.float32),
        grid=grid,
        in_specs=in_specs,
        out_specs=pl.BlockSpec((tv, dm), lambda i: (i, 0)),
        scratch_shapes=scratch_shapes,
        compiler_params=pltpu.CompilerParams(
            # "arbitrary": sequential grid order guarantees the step-0 K/V
            # scratch init happens-before every consuming step (megacore-safe).
            dimension_semantics=("arbitrary",)),
        cost_estimate=cost,
    )(tok_b, lq,
      prepped["wq3"], prepped["bq3"], prepped["wk3"], prepped["bk3"],
      prepped["wv3"], prepped["bv3"], prepped["wo3"], prepped["bo"])


def init_params(key, llm_dim, vocab_num):
    """Deterministic synthetic parameters matching the module's __init__ shapes
    (PyTorch layout: Linear weights are [out, in], float32)."""
    ks = jax.random.split(key, 9)
    return {
        "learned_queries": jax.random.normal(ks[0], (vocab_num, llm_dim), jnp.float32),
        "q_w": jax.random.normal(ks[1], (llm_dim, llm_dim), jnp.float32) * 0.05,
        "q_b": jax.random.normal(ks[2], (llm_dim,), jnp.float32) * 0.05,
        "k_w": jax.random.normal(ks[3], (llm_dim, llm_dim), jnp.float32) * 0.05,
        "k_b": jax.random.normal(ks[4], (llm_dim,), jnp.float32) * 0.05,
        "v_w": jax.random.normal(ks[5], (llm_dim, llm_dim), jnp.float32) * 0.05,
        "v_b": jax.random.normal(ks[6], (llm_dim,), jnp.float32) * 0.05,
        "o_w": jax.random.normal(ks[7], (llm_dim, llm_dim), jnp.float32) * 0.05,
        "o_b": jax.random.normal(ks[8], (llm_dim,), jnp.float32) * 0.05,
    }


def reference_forward(token_input, params, *, heads):
    """Pure-JAX f32 reference mirroring the PyTorch forward exactly."""
    lq = params["learned_queries"]
    v_rows, dm = lq.shape
    t = token_input.shape[0]
    d = dm // heads
    scale = d ** -0.5
    q = lq @ params["q_w"].T + params["q_b"]
    k = token_input @ params["k_w"].T + params["k_b"]
    v = token_input @ params["v_w"].T + params["v_b"]
    q = q.reshape(v_rows, heads, d).transpose(1, 0, 2)   # [H, V, D]
    k = k.reshape(t, heads, d).transpose(1, 0, 2)        # [H, T, D]
    v = v.reshape(t, heads, d).transpose(1, 0, 2)        # [H, T, D]
    scores = jnp.einsum("hvd,htd->hvt", q, k) * scale
    probs = jax.nn.softmax(scores, axis=-1)
    out = jnp.einsum("hvt,htd->hvd", probs, v)
    out = out.transpose(1, 0, 2).reshape(v_rows, dm)
    return out @ params["o_w"].T + params["o_b"]


if __name__ == "__main__":
    # Small shapes consistent with the module: llm_dim=32, heads=8 (head_dim=4),
    # vocab_num=16 learned queries, T=8 input tokens.
    LLM_DIM = 32
    HEADS = 8
    VOCAB_NUM = 16
    T = 8

    key = jax.random.PRNGKey(0)
    pkey, xkey = jax.random.split(key)
    params = init_params(pkey, LLM_DIM, VOCAB_NUM)
    token_input = jax.random.normal(xkey, (T, LLM_DIM), jnp.float32)

    prepped = prepare_params(params, heads=HEADS)   # one-time layout/dtype prep
    out = cross_attention_reducer(token_input, prepped)
    out = jax.block_until_ready(out)

    ref = reference_forward(token_input, params, heads=HEADS)
    assert out.shape == (VOCAB_NUM, LLM_DIM), out.shape
    # bf16 MXU operands + approx (EUP) reciprocal -> compare against the pure
    # f32 reference with a correspondingly looser tolerance.
    err = float(jnp.max(jnp.abs(out - ref)))
    assert err < 5e-2, f"mismatch vs reference: max abs err {err}"

    print("KERNEL_OK")
</pallas_src>

<mosaic_0001>
module attributes {stable_mosaic.version = 11 : i64} {
  func.func @_cross_attn_kernel(%arg0: i32, %arg1: memref<8x32xbf16, #tpu.memory_space<vmem>>, %arg2: memref<8x32xbf16, #tpu.memory_space<vmem>>, %arg3: memref<8x4x32xbf16, #tpu.memory_space<vmem>>, %arg4: memref<8x1x4xf32, #tpu.memory_space<vmem>>, %arg5: memref<8x4x32xbf16, #tpu.memory_space<vmem>>, %arg6: memref<8x1x4xf32, #tpu.memory_space<vmem>>, %arg7: memref<8x4x32xbf16, #tpu.memory_space<vmem>>, %arg8: memref<8x1x4xf32, #tpu.memory_space<vmem>>, %arg9: memref<8x32x4xbf16, #tpu.memory_space<vmem>>, %arg10: memref<1x32xf32, #tpu.memory_space<vmem>>, %arg11: memref<8x32xf32, #tpu.memory_space<vmem>>, %arg12: memref<8x8x4xbf16, #tpu.memory_space<vmem>>, %arg13: memref<8x8x4xbf16, #tpu.memory_space<vmem>>) attributes {dimension_semantics = [#tpu.dimension_semantics<arbitrary>], iteration_bounds = array<i64: 2>, scalar_prefetch = 0 : i64, scratch_operands = 2 : i64, tpu.core_type = #tpu.core_type<tc>, window_params = [{pipeline_mode = #tpu.pipeline_mode<synchronous>, transform_indices = @transform_0, window_bounds = array<i64: 8, 32>}, {transform_indices = @transform_1, window_bounds = array<i64: 8, 32>}, {pipeline_mode = #tpu.pipeline_mode<synchronous>, transform_indices = @transform_2, window_bounds = array<i64: 8, 4, 32>}, {pipeline_mode = #tpu.pipeline_mode<synchronous>, transform_indices = @transform_3, window_bounds = array<i64: 8, 1, 4>}, {pipeline_mode = #tpu.pipeline_mode<synchronous>, transform_indices = @transform_4, window_bounds = array<i64: 8, 4, 32>}, {pipeline_mode = #tpu.pipeline_mode<synchronous>, transform_indices = @transform_5, window_bounds = array<i64: 8, 1, 4>}, {pipeline_mode = #tpu.pipeline_mode<synchronous>, transform_indices = @transform_6, window_bounds = array<i64: 8, 4, 32>}, {pipeline_mode = #tpu.pipeline_mode<synchronous>, transform_indices = @transform_7, window_bounds = array<i64: 8, 1, 4>}, {pipeline_mode = #tpu.pipeline_mode<synchronous>, transform_indices = @transform_8, window_bounds = array<i64: 8, 32, 4>}, {pipeline_mode = #tpu.pipeline_mode<synchronous>, transform_indices = @transform_9, window_bounds = array<i64: 1, 32>}, {transform_indices = @transform_10, window_bounds = array<i64: 8, 32>}]} {
    %c0_i32 = arith.constant 0 : i32
    %0 = arith.cmpi eq, %arg0, %c0_i32 : i32
    %1 = arith.extui %0 : i1 to i32
    %c0_i32_0 = arith.constant 0 : i32
    %2 = arith.cmpi ne, %1, %c0_i32_0 : i32
    scf.if %2 {
      %c0_28 = arith.constant 0 : index
      %c0_29 = arith.constant 0 : index
      %38 = vector.load %arg1[%c0_28, %c0_29] : memref<8x32xbf16, #tpu.memory_space<vmem>>, vector<8x32xbf16>
      %39 = vector.shape_cast %38 : vector<8x32xbf16> to vector<1x8x32xbf16>
      %40 = vector.shape_cast %39 : vector<1x8x32xbf16> to vector<1x8x32xbf16>
      %41 = vector.broadcast %40 : vector<1x8x32xbf16> to vector<8x8x32xbf16>
      %c0_30 = arith.constant 0 : index
      %c0_31 = arith.constant 0 : index
      %c0_32 = arith.constant 0 : index
      %42 = vector.load %arg5[%c0_30, %c0_31, %c0_32] : memref<8x4x32xbf16, #tpu.memory_space<vmem>>, vector<8x4x32xbf16>
      %cst_33 = arith.constant dense<0.000000e+00> : vector<8x8x4xf32>
      %43 = tpu.matmul %41, %42, %cst_33 {dimension_numbers = #tpu.dot_dimension_numbers<[2], [2], [1], [1], [0, 0, 0, 1, 1, 1], [0], [0]>} : vector<8x8x32xbf16>, vector<8x4x32xbf16>, vector<8x8x4xf32> -> vector<8x8x4xf32>
      %c0_34 = arith.constant 0 : index
      %c0_35 = arith.constant 0 : index
      %c0_36 = arith.constant 0 : index
      %44 = vector.load %arg6[%c0_34, %c0_35, %c0_36] : memref<8x1x4xf32, #tpu.memory_space<vmem>>, vector<8x1x4xf32>
      %45 = vector.broadcast %44 : vector<8x1x4xf32> to vector<8x8x4xf32>
      %46 = arith.addf %43, %45 : vector<8x8x4xf32>
      %c0_37 = arith.constant 0 : index
      %c0_38 = arith.constant 0 : index
      %c0_39 = arith.constant 0 : index
      %47 = vector.load %arg7[%c0_37, %c0_38, %c0_39] : memref<8x4x32xbf16, #tpu.memory_space<vmem>>, vector<8x4x32xbf16>
      %cst_40 = arith.constant dense<0.000000e+00> : vector<8x8x4xf32>
      %48 = tpu.matmul %41, %47, %cst_40 {dimension_numbers = #tpu.dot_dimension_numbers<[2], [2], [1], [1], [0, 0, 0, 1, 1, 1], [0], [0]>} : vector<8x8x32xbf16>, vector<8x4x32xbf16>, vector<8x8x4xf32> -> vector<8x8x4xf32>
      %c0_41 = arith.constant 0 : index
      %c0_42 = arith.constant 0 : index
      %c0_43 = arith.constant 0 : index
      %49 = vector.load %arg8[%c0_41, %c0_42, %c0_43] : memref<8x1x4xf32, #tpu.memory_space<vmem>>, vector<8x1x4xf32>
      %50 = vector.broadcast %49 : vector<8x1x4xf32> to vector<8x8x4xf32>
      %51 = arith.addf %48, %50 : vector<8x8x4xf32>
      %52 = arith.truncf %46 : vector<8x8x4xf32> to vector<8x8x4xbf16>
      %c0_44 = arith.constant 0 : index
      %c0_45 = arith.constant 0 : index
      %c0_46 = arith.constant 0 : index
      %53 = vector.load %arg12[%c0_44, %c0_45, %c0_46] : memref<8x8x4xbf16, #tpu.memory_space<vmem>>, vector<8x8x4xbf16>
      tpu.vector_store %arg12[%c0_44, %c0_45, %c0_46], %52 {strides = array<i32>} : memref<8x8x4xbf16, #tpu.memory_space<vmem>>, vector<8x8x4xbf16>,
      %54 = arith.truncf %51 : vector<8x8x4xf32> to vector<8x8x4xbf16>
      %c0_47 = arith.constant 0 : index
      %c0_48 = arith.constant 0 : index
      %c0_49 = arith.constant 0 : index
      %55 = vector.load %arg13[%c0_47, %c0_48, %c0_49] : memref<8x8x4xbf16, #tpu.memory_space<vmem>>, vector<8x8x4xbf16>
      tpu.vector_store %arg13[%c0_47, %c0_48, %c0_49], %54 {strides = array<i32>} : memref<8x8x4xbf16, #tpu.memory_space<vmem>>, vector<8x8x4xbf16>,
    } else {
    }
    %c0 = arith.constant 0 : index
    %c0_1 = arith.constant 0 : index
    %3 = vector.load %arg2[%c0, %c0_1] : memref<8x32xbf16, #tpu.memory_space<vmem>>, vector<8x32xbf16>
    %4 = vector.shape_cast %3 : vector<8x32xbf16> to vector<1x8x32xbf16>
    %5 = vector.shape_cast %4 : vector<1x8x32xbf16> to vector<1x8x32xbf16>
    %6 = vector.broadcast %5 : vector<1x8x32xbf16> to vector<8x8x32xbf16>
    %c0_2 = arith.constant 0 : index
    %c0_3 = arith.constant 0 : index
    %c0_4 = arith.constant 0 : index
    %7 = vector.load %arg3[%c0_2, %c0_3, %c0_4] : memref<8x4x32xbf16, #tpu.memory_space<vmem>>, vector<8x4x32xbf16>
    %cst = arith.constant dense<0.000000e+00> : vector<8x8x4xf32>
    %8 = tpu.matmul %6, %7, %cst {dimension_numbers = #tpu.dot_dimension_numbers<[2], [2], [1], [1], [0, 0, 0, 1, 1, 1], [0], [0]>} : vector<8x8x32xbf16>, vector<8x4x32xbf16>, vector<8x8x4xf32> -> vector<8x8x4xf32>
    %c0_5 = arith.constant 0 : index
    %c0_6 = arith.constant 0 : index
    %c0_7 = arith.constant 0 : index
    %9 = vector.load %arg4[%c0_5, %c0_6, %c0_7] : memref<8x1x4xf32, #tpu.memory_space<vmem>>, vector<8x1x4xf32>
    %10 = vector.broadcast %9 : vector<8x1x4xf32> to vector<8x8x4xf32>
    %11 = arith.addf %8, %10 : vector<8x8x4xf32>
    %12 = arith.truncf %11 : vector<8x8x4xf32> to vector<8x8x4xbf16>
    %c0_8 = arith.constant 0 : index
    %c0_9 = arith.constant 0 : index
    %c0_10 = arith.constant 0 : index
    %13 = vector.load %arg12[%c0_8, %c0_9, %c0_10] : memref<8x8x4xbf16, #tpu.memory_space<vmem>>, vector<8x8x4xbf16>
    %cst_11 = arith.constant dense<0.000000e+00> : vector<8x8x8xf32>
    %14 = tpu.matmul %12, %13, %cst_11 {dimension_numbers = #tpu.dot_dimension_numbers<[2], [2], [1], [1], [0, 0, 0, 1, 1, 1], [0], [0]>} : vector<8x8x4xbf16>, vector<8x8x4xbf16>, vector<8x8x8xf32> -> vector<8x8x8xf32>
    %cst_12 = arith.constant 5.000000e-01 : f32
    %15 = vector.broadcast %cst_12 : f32 to vector<8x8x8xf32>
    %16 = arith.mulf %14, %15 : vector<8x8x8xf32>
    %cst_13 = arith.constant dense<0xFF800000> : vector<8x8xf32>
    %17 = vector.multi_reduction <maximumf>, %16, %cst_13 [2] : vector<8x8x8xf32> to vector<8x8xf32>
    %18 = vector.shape_cast %17 : vector<8x8xf32> to vector<8x8x1xf32>
    %19 = vector.broadcast %18 : vector<8x8x1xf32> to vector<8x8x8xf32>
    %20 = arith.subf %16, %19 : vector<8x8x8xf32>
    %21 = math.exp %20 : vector<8x8x8xf32>
    %cst_14 = arith.constant dense<0.000000e+00> : vector<8x8xf32>
    %22 = vector.multi_reduction <add>, %21, %cst_14 [2] : vector<8x8x8xf32> to vector<8x8xf32>
    %23 = vector.shape_cast %22 : vector<8x8xf32> to vector<8x8x1xf32>
    %24 = tpu.reciprocal %23 {approx = true} : vector<8x8x1xf32> -> vector<8x8x1xf32>
    %25 = vector.broadcast %24 : vector<8x8x1xf32> to vector<8x8x8xf32>
    %26 = arith.mulf %21, %25 : vector<8x8x8xf32>
    %27 = arith.truncf %26 : vector<8x8x8xf32> to vector<8x8x8xbf16>
    %c0_15 = arith.constant 0 : index
    %c0_16 = arith.constant 0 : index
    %c0_17 = arith.constant 0 : index
    %28 = vector.load %arg13[%c0_15, %c0_16, %c0_17] : memref<8x8x4xbf16, #tpu.memory_space<vmem>>, vector<8x8x4xbf16>
    %cst_18 = arith.constant dense<0.000000e+00> : vector<8x8x4xf32>
    %29 = tpu.matmul %27, %28, %cst_18 {dimension_numbers = #tpu.dot_dimension_numbers<[2], [1], [1], [2], [0, 0, 0, 1, 1, 2], [0], [0]>} : vector<8x8x8xbf16>, vector<8x8x4xbf16>, vector<8x8x4xf32> -> vector<8x8x4xf32>
    %30 = arith.truncf %29 : vector<8x8x4xf32> to vector<8x8x4xbf16>
    %c0_19 = arith.constant 0 : index
    %c0_20 = arith.constant 0 : index
    %c0_21 = arith.constant 0 : index
    %31 = vector.load %arg9[%c0_19, %c0_20, %c0_21] : memref<8x32x4xbf16, #tpu.memory_space<vmem>>, vector<8x32x4xbf16>
    %cst_22 = arith.constant dense<0.000000e+00> : vector<8x8x32xf32>
    %32 = tpu.matmul %30, %31, %cst_22 {dimension_numbers = #tpu.dot_dimension_numbers<[2], [2], [1], [1], [0, 0, 0, 1, 1, 1], [0], [0]>} : vector<8x8x4xbf16>, vector<8x32x4xbf16>, vector<8x8x32xf32> -> vector<8x8x32xf32>
    %cst_23 = arith.constant dense<0.000000e+00> : vector<8x32xf32>
    %33 = vector.multi_reduction <add>, %32, %cst_23 [0] : vector<8x8x32xf32> to vector<8x32xf32>
    %c0_24 = arith.constant 0 : index
    %c0_25 = arith.constant 0 : index
    %34 = vector.load %arg10[%c0_24, %c0_25] : memref<1x32xf32, #tpu.memory_space<vmem>>, vector<1x32xf32>
    %35 = vector.broadcast %34 : vector<1x32xf32> to vector<8x32xf32>
    %36 = arith.addf %33, %35 : vector<8x32xf32>
    %c0_26 = arith.constant 0 : index
    %c0_27 = arith.constant 0 : index
    %37 = vector.load %arg11[%c0_26, %c0_27] : memref<8x32xf32, #tpu.memory_space<vmem>>, vector<8x32xf32>
    tpu.vector_store %arg11[%c0_26, %c0_27], %36 {strides = array<i32>} : memref<8x32xf32, #tpu.memory_space<vmem>>, vector<8x32xf32>,
    return
  }
  func.func @transform_0(%arg0: i32) -> (i32, i32) {
    %c0_i32 = arith.constant 0 : i32
    %c0_i32_0 = arith.constant 0 : i32
    %c0_i32_1 = arith.constant 0 : i32
    return %c0_i32, %c0_i32_0 : i32, i32
  }
  func.func @transform_1(%arg0: i32) -> (i32, i32) {
    %c0_i32 = arith.constant 0 : i32
    %c0_i32_0 = arith.constant 0 : i32
    return %arg0, %c0_i32 : i32, i32
  }
  func.func @transform_2(%arg0: i32) -> (i32, i32, i32) {
    %c0_i32 = arith.constant 0 : i32
    %c0_i32_0 = arith.constant 0 : i32
    %c0_i32_1 = arith.constant 0 : i32
    %c0_i32_2 = arith.constant 0 : i32
    return %c0_i32, %c0_i32_0, %c0_i32_1 : i32, i32, i32
  }
  func.func @transform_3(%arg0: i32) -> (i32, i32, i32) {
    %c0_i32 = arith.constant 0 : i32
    %c0_i32_0 = arith.constant 0 : i32
    %c0_i32_1 = arith.constant 0 : i32
    %c0_i32_2 = arith.constant 0 : i32
    return %c0_i32, %c0_i32_0, %c0_i32_1 : i32, i32, i32
  }
  func.func @transform_4(%arg0: i32) -> (i32, i32, i32) {
    %c0_i32 = arith.constant 0 : i32
    %c0_i32_0 = arith.constant 0 : i32
    %c0_i32_1 = arith.constant 0 : i32
    %c0_i32_2 = arith.constant 0 : i32
    return %c0_i32, %c0_i32_0, %c0_i32_1 : i32, i32, i32
  }
  func.func @transform_5(%arg0: i32) -> (i32, i32, i32) {
    %c0_i32 = arith.constant 0 : i32
    %c0_i32_0 = arith.constant 0 : i32
    %c0_i32_1 = arith.constant 0 : i32
    %c0_i32_2 = arith.constant 0 : i32
    return %c0_i32, %c0_i32_0, %c0_i32_1 : i32, i32, i32
  }
  func.func @transform_6(%arg0: i32) -> (i32, i32, i32) {
    %c0_i32 = arith.constant 0 : i32
    %c0_i32_0 = arith.constant 0 : i32
    %c0_i32_1 = arith.constant 0 : i32
    %c0_i32_2 = arith.constant 0 : i32
    return %c0_i32, %c0_i32_0, %c0_i32_1 : i32, i32, i32
  }
  func.func @transform_7(%arg0: i32) -> (i32, i32, i32) {
    %c0_i32 = arith.constant 0 : i32
    %c0_i32_0 = arith.constant 0 : i32
    %c0_i32_1 = arith.constant 0 : i32
    %c0_i32_2 = arith.constant 0 : i32
    return %c0_i32, %c0_i32_0, %c0_i32_1 : i32, i32, i32
  }
  func.func @transform_8(%arg0: i32) -> (i32, i32, i32) {
    %c0_i32 = arith.constant 0 : i32
    %c0_i32_0 = arith.constant 0 : i32
    %c0_i32_1 = arith.constant 0 : i32
    %c0_i32_2 = arith.constant 0 : i32
    return %c0_i32, %c0_i32_0, %c0_i32_1 : i32, i32, i32
  }
  func.func @transform_9(%arg0: i32) -> (i32, i32) {
    %c0_i32 = arith.constant 0 : i32
    %c0_i32_0 = arith.constant 0 : i32
    %c0_i32_1 = arith.constant 0 : i32
    return %c0_i32, %c0_i32_0 : i32, i32
  }
  func.func @transform_10(%arg0: i32) -> (i32, i32) {
    %c0_i32 = arith.constant 0 : i32
    %c0_i32_0 = arith.constant 0 : i32
    return %arg0, %c0_i32 : i32, i32
  }
}

</mosaic_0001>

<llo_original>
// kernel: tpu_custom_call.1
$region0: #{tpu_custom_call.1}
  #allocation0 [shape = 'u32[]', space=smem, size = 0x4, offset = 0x4, fixed_abs, tag = 'smem constant byte address 0x4 - core index']
  #allocation1 [shape = 'u32[144,128]{1,0:T(1,128)}', space=vmem, size = 0x12000, scoped, tag = 'internal scratch']
  #allocation2 [shape = 'bf16[8,8,4]{2,1,0:T(8,128)(2,1)}', space=vmem, size = 0x4000, scoped, tag = 'scratch operand']
  #allocation3 [shape = 'bf16[8,8,4]{2,1,0:T(8,128)(2,1)}', space=vmem, size = 0x4000, scoped, tag = 'scratch operand']
  %s0 = inlined_call_operand.vmem [shape: bf16[8,32], index: 0, kind: input, shape index: {}]
  %s1 = inlined_call_operand.vmem [shape: bf16[16,32], index: 1, kind: input, shape index: {}]
  %s2 = inlined_call_operand.vmem [shape: bf16[8,4,32], index: 2, kind: input, shape index: {}]
  %s3 = inlined_call_operand.vmem [shape: f32[8,1,4], index: 3, kind: input, shape index: {}]
  %s4 = inlined_call_operand.vmem [shape: bf16[8,4,32], index: 4, kind: input, shape index: {}]
  %s5 = inlined_call_operand.vmem [shape: f32[8,1,4], index: 5, kind: input, shape index: {}]
  %s6 = inlined_call_operand.vmem [shape: bf16[8,4,32], index: 6, kind: input, shape index: {}]
  %s7 = inlined_call_operand.vmem [shape: f32[8,1,4], index: 7, kind: input, shape index: {}]
  %s8 = inlined_call_operand.vmem [shape: bf16[8,32,4], index: 8, kind: input, shape index: {}]
  %s9 = inlined_call_operand.vmem [shape: f32[1,32], index: 9, kind: input, shape index: {}]
  %s10 = inlined_call_operand.hbm [shape: f32[16,32], index: 10, kind: output, shape index: {}]
  %s11 = sld [smem:[#allocation0]]
  $region77: #{tpu_custom_call.1} parent=0
    _
  %s13 = ssub.s32 1, %s11
  %s14 = scalar_select 0, %s13, %s11
  $region1: #{tpu_custom_call.1} parent=0
    #allocation4 [shape = 'u8[8192]{0}', space=vmem, size = 0x2000, scoped, tag = 'output window, operand 0']
    #allocation5 [shape = 's32[2]{0}', space=sflag, size = 0x8, scoped, tag = 'scoped memory for tpu_custom_call.1']
    %15 = vsyncpa [#allocation5], 0
    %s16 = scalar_lea.sflag [#allocation5], 1
    %17 = vsyncpa %s16, 0
    loop: start=0, step=1, limit=4
    $region2: #{tpu_custom_call.1} parent=1 // loop_pre_header
      _
    $region3: #{tpu_custom_call.1} parent=1 // loop_header
      %s19 = sphi 0, %s23
      %p20 = scmp.ge.s32.totalorder %s19, 4
      %s27 = sphi 0, %s27
      %s29 = sphi 0, %s27
      %s30 = sphi 0, %s29
      %s44 = sphi 0, %s30
      %s50 = sphi 0, %s52
      %s53 = sphi 0, %s50
      %s54 = sphi 0, %s53
      %s70 = sphi 0, %s54
      %s74 = sphi 0, %s74
      %s76 = sphi 0, %s74
      %s77 = sphi 0, %s76
      %s91 = sphi 0, %s77
      %s95 = sphi 0, %s95
      %s97 = sphi 0, %s95
      %s98 = sphi 0, %s97
      %s112 = sphi 0, %s98
      %s116 = sphi 0, %s116
      %s118 = sphi 0, %s116
      %s119 = sphi 0, %s118
      %s133 = sphi 0, %s119
      %s137 = sphi 0, %s137
      %s139 = sphi 0, %s137
      %s140 = sphi 0, %s139
      %s154 = sphi 0, %s140
      %s158 = sphi 0, %s158
      %s160 = sphi 0, %s158
      %s161 = sphi 0, %s160
      %s175 = sphi 0, %s161
      %s179 = sphi 0, %s179
      %s181 = sphi 0, %s179
      %s182 = sphi 0, %s181
      %s196 = sphi 0, %s182
      %s200 = sphi 0, %s200
      %s202 = sphi 0, %s200
      %s203 = sphi 0, %s202
      %s217 = sphi 0, %s203
      %s221 = sphi 0, %s221
      %s223 = sphi 0, %s221
      %s224 = sphi 0, %s223
      %s238 = sphi 0, %s224
      %s244 = sphi 0, %s246
      %s247 = sphi 0, %s244
      %s248 = sphi 0, %s247
      %s264 = sphi 0, %s248
    $region4: #{tpu_custom_call.1} parent=1 // loop_header_branch
      %22 = sbr.rel (%p20) target = $region8
    $region5: #{tpu_custom_call.1} parent=1 // loop_body
      %s24 = ssub.s32 %s19, 1
      %s25 = ssub.s32 %s19, 2
      %s26 = sadd.s32 %s19, 1
      %s28 = sadd.s32 %s27, 1
      %p31 = scmp.eq.s32.totalorder %s19, 1
      %p32 = scmp.ne.s32.totalorder %s27, %s29
      %p33 = scmp.eq.s32.totalorder %s19, 0
      %p34 = por %p32, %p33
      %p35 = scmp.ne.s32.totalorder %s27, %s29
      %p36 = scmp.eq.s32.totalorder %s24, 1
      %p37 = por %p35, %p36
      %p38 = scmp.ne.s32.totalorder %s29, %s30
      %p39 = scmp.eq.s32.totalorder %s24, 0
      %p40 = por %p38, %p39
      %p41 = scmp.ne.s32.totalorder %s29, %s30
      %p42 = scmp.eq.s32.totalorder %s25, 1
      %p43 = por %p41, %p42
      %p45 = scmp.ne.s32.totalorder %s30, %s44
      %p46 = scmp.eq.s32.totalorder %s25, 0
      %p47 = por %p45, %p46
      %s48 = ssub.s32 %s19, %s26
      %p49 = scmp.eq.s32.totalorder %s48, 0
      %s51 = sadd.s32 %s50, 1
      %s52 = scalar_select %p49, %s50, %s51
      %p55 = pneg %p49
      %p56 = scmp.eq.s32.totalorder %s19, 1
      %p57 = por %p55, %p56
      %p58 = scmp.ne.s32.totalorder %s50, %s53
      %p59 = scmp.eq.s32.totalorder %s19, 0
      %p60 = por %p58, %p59
      %p61 = scmp.ne.s32.totalorder %s50, %s53
      %p62 = scmp.eq.s32.totalorder %s24, 1
      %p63 = por %p61, %p62
      %p64 = scmp.ne.s32.totalorder %s53, %s54
      %p65 = scmp.eq.s32.totalorder %s24, 0
      %p66 = por %p64, %p65
      %p67 = scmp.ne.s32.totalorder %s53, %s54
      %p68 = scmp.eq.s32.totalorder %s25, 1
      %p69 = por %p67, %p68
      %p71 = scmp.ne.s32.totalorder %s54, %s70
      %p72 = scmp.eq.s32.totalorder %s25, 0
      %p73 = por %p71, %p72
      %s75 = sadd.s32 %s74, 1
      %p78 = scmp.eq.s32.totalorder %s19, 1
      %p79 = scmp.ne.s32.totalorder %s74, %s76
      %p80 = scmp.eq.s32.totalorder %s19, 0
      %p81 = por %p79, %p80
      %p82 = scmp.ne.s32.totalorder %s74, %s76
      %p83 = scmp.eq.s32.totalorder %s24, 1
      %p84 = por %p82, %p83
      %p85 = scmp.ne.s32.totalorder %s76, %s77
      %p86 = scmp.eq.s32.totalorder %s24, 0
      %p87 = por %p85, %p86
      %p88 = scmp.ne.s32.totalorder %s76, %s77
      %p89 = scmp.eq.s32.totalorder %s25, 1
      %p90 = por %p88, %p89
      %p92 = scmp.ne.s32.totalorder %s77, %s91
      %p93 = scmp.eq.s32.totalorder %s25, 0
      %p94 = por %p92, %p93
      %s96 = sadd.s32 %s95, 1
      %p99 = scmp.eq.s32.totalorder %s19, 1
      %p100 = scmp.ne.s32.totalorder %s95, %s97
      %p101 = scmp.eq.s32.totalorder %s19, 0
      %p102 = por %p100, %p101
      %p103 = scmp.ne.s32.totalorder %s95, %s97
      %p104 = scmp.eq.s32.totalorder %s24, 1
      %p105 = por %p103, %p104
      %p106 = scmp.ne.s32.totalorder %s97, %s98
      %p107 = scmp.eq.s32.totalorder %s24, 0
      %p108 = por %p106, %p107
      %p109 = scmp.ne.s32.totalorder %s97, %s98
      %p110 = scmp.eq.s32.totalorder %s25, 1
      %p111 = por %p109, %p110
      %p113 = scmp.ne.s32.totalorder %s98, %s112
      %p114 = scmp.eq.s32.totalorder %s25, 0
      %p115 = por %p113, %p114
      %s117 = sadd.s32 %s116, 1
      %p120 = scmp.eq.s32.totalorder %s19, 1
      %p121 = scmp.ne.s32.totalorder %s116, %s118
      %p122 = scmp.eq.s32.totalorder %s19, 0
      %p123 = por %p121, %p122
      %p124 = scmp.ne.s32.totalorder %s116, %s118
      %p125 = scmp.eq.s32.totalorder %s24, 1
      %p126 = por %p124, %p125
      %p127 = scmp.ne.s32.totalorder %s118, %s119
      %p128 = scmp.eq.s32.totalorder %s24, 0
      %p129 = por %p127, %p128
      %p130 = scmp.ne.s32.totalorder %s118, %s119
      %p131 = scmp.eq.s32.totalorder %s25, 1
      %p132 = por %p130, %p131
      %p134 = scmp.ne.s32.totalorder %s119, %s133
      %p135 = scmp.eq.s32.totalorder %s25, 0
      %p136 = por %p134, %p135
      %s138 = sadd.s32 %s137, 1
      %p141 = scmp.eq.s32.totalorder %s19, 1
      %p142 = scmp.ne.s32.totalorder %s137, %s139
      %p143 = scmp.eq.s32.totalorder %s19, 0
      %p144 = por %p142, %p143
      %p145 = scmp.ne.s32.totalorder %s137, %s139
      %p146 = scmp.eq.s32.totalorder %s24, 1
      %p147 = por %p145, %p146
      %p148 = scmp.ne.s32.totalorder %s139, %s140
      %p149 = scmp.eq.s32.totalorder %s24, 0
      %p150 = por %p148, %p149
      %p151 = scmp.ne.s32.totalorder %s139, %s140
      %p152 = scmp.eq.s32.totalorder %s25, 1
      %p153 = por %p151, %p152
      %p155 = scmp.ne.s32.totalorder %s140, %s154
      %p156 = scmp.eq.s32.totalorder %s25, 0
      %p157 = por %p155, %p156
      %s159 = sadd.s32 %s158, 1
      %p162 = scmp.eq.s32.totalorder %s19, 1
      %p163 = scmp.ne.s32.totalorder %s158, %s160
      %p164 = scmp.eq.s32.totalorder %s19, 0
      %p165 = por %p163, %p164
      %p166 = scmp.ne.s32.totalorder %s158, %s160
      %p167 = scmp.eq.s32.totalorder %s24, 1
      %p168 = por %p166, %p167
      %p169 = scmp.ne.s32.totalorder %s160, %s161
      %p170 = scmp.eq.s32.totalorder %s24, 0
      %p171 = por %p169, %p170
      %p172 = scmp.ne.s32.totalorder %s160, %s161
      %p173 = scmp.eq.s32.totalorder %s25, 1
      %p174 = por %p172, %p173
      %p176 = scmp.ne.s32.totalorder %s161, %s175
      %p177 = scmp.eq.s32.totalorder %s25, 0
      %p178 = por %p176, %p177
      %s180 = sadd.s32 %s179, 1
      %p183 = scmp.eq.s32.totalorder %s19, 1
      %p184 = scmp.ne.s32.totalorder %s179, %s181
      %p185 = scmp.eq.s32.totalorder %s19, 0
      %p186 = por %p184, %p185
      %p187 = scmp.ne.s32.totalorder %s179, %s181
      %p188 = scmp.eq.s32.totalorder %s24, 1
      %p189 = por %p187, %p188
      %p190 = scmp.ne.s32.totalorder %s181, %s182
      %p191 = scmp.eq.s32.totalorder %s24, 0
      %p192 = por %p190, %p191
      %p193 = scmp.ne.s32.totalorder %s181, %s182
      %p194 = scmp.eq.s32.totalorder %s25, 1
      %p195 = por %p193, %p194
      %p197 = scmp.ne.s32.totalorder %s182, %s196
      %p198 = scmp.eq.s32.totalorder %s25, 0
      %p199 = por %p197, %p198
      %s201 = sadd.s32 %s200, 1
      %p204 = scmp.eq.s32.totalorder %s19, 1
      %p205 = scmp.ne.s32.totalorder %s200, %s202
      %p206 = scmp.eq.s32.totalorder %s19, 0
      %p207 = por %p205, %p206
      %p208 = scmp.ne.s32.totalorder %s200, %s202
      %p209 = scmp.eq.s32.totalorder %s24, 1
      %p210 = por %p208, %p209
      %p211 = scmp.ne.s32.totalorder %s202, %s203
      %p212 = scmp.eq.s32.totalorder %s24, 0
      %p213 = por %p211, %p212
      %p214 = scmp.ne.s32.totalorder %s202, %s203
      %p215 = scmp.eq.s32.totalorder %s25, 1
      %p216 = por %p214, %p215
      %p218 = scmp.ne.s32.totalorder %s203, %s217
      %p219 = scmp.eq.s32.totalorder %s25, 0
      %p220 = por %p218, %p219
      %s222 = sadd.s32 %s221, 1
      %p225 = scmp.eq.s32.totalorder %s19, 1
      %p226 = scmp.ne.s32.totalorder %s221, %s223
      %p227 = scmp.eq.s32.totalorder %s19, 0
      %p228 = por %p226, %p227
      %p229 = scmp.ne.s32.totalorder %s221, %s223
      %p230 = scmp.eq.s32.totalorder %s24, 1
      %p231 = por %p229, %p230
      %p232 = scmp.ne.s32.totalorder %s223, %s224
      %p233 = scmp.eq.s32.totalorder %s24, 0
      %p234 = por %p232, %p233
      %p235 = scmp.ne.s32.totalorder %s223, %s224
      %p236 = scmp.eq.s32.totalorder %s25, 1
      %p237 = por %p235, %p236
      %p239 = scmp.ne.s32.totalorder %s224, %s238
      %p240 = scmp.eq.s32.totalorder %s25, 0
      %p241 = por %p239, %p240
      %s242 = ssub.s32 %s19, %s26
      %p243 = scmp.eq.s32.totalorder %s242, 0
      %s245 = sadd.s32 %s244, 1
      %s246 = scalar_select %p243, %s244, %s245
      %p249 = pneg %p243
      %p250 = scmp.eq.s32.totalorder %s19, 1
      %p251 = por %p249, %p250
      %p252 = scmp.ne.s32.totalorder %s244, %s247
      %p253 = scmp.eq.s32.totalorder %s19, 0
      %p254 = por %p252, %p253
      %p255 = scmp.ne.s32.totalorder %s244, %s247
      %p256 = scmp.eq.s32.totalorder %s24, 1
      %p257 = por %p255, %p256
      %p258 = scmp.ne.s32.totalorder %s247, %s248
      %p259 = scmp.eq.s32.totalorder %s24, 0
      %p260 = por %p258, %p259
      %p261 = scmp.ne.s32.totalorder %s247, %s248
      %p262 = scmp.eq.s32.totalorder %s25, 1
      %p263 = por %p261, %p262
      %p265 = scmp.ne.s32.totalorder %s248, %s264
      %p266 = scmp.eq.s32.totalorder %s25, 0
      %p267 = por %p265, %p266
      %p268 = scmp.le.s32.totalorder 1, %s19
      %p269 = scmp.lt.s32.totalorder %s19, 3
      %p270 = pnand %p268, %p269
      %p271 = pneg %p270
      // Predicated region
      $region9: #{tpu_custom_call.1} parent=5 // pred_check
        _
      $region10: #{tpu_custom_call.1} parent=5 // pred_check_branch
        %273 = sbr.rel (%p270) target = $region12
      $region11: #{tpu_custom_call.1} parent=5 // pred_region
        %s274 = ssub.s32 %s19, 1
        // Predicated region
        $region13: #{tpu_custom_call.1} parent=11 // pred_check
          %p275 = pneg %p40
        $region14: #{tpu_custom_call.1} parent=11 // pred_check_branch
          %277 = sbr.rel (%p275) target = $region16
        $region15: #{tpu_custom_call.1} parent=11 // pred_region
          _
        $region16: #{tpu_custom_call.1} parent=11 // pred_fallthru
          _
        // Predicated region
        $region17: #{tpu_custom_call.1} parent=11 // pred_check
          %p278 = pneg %p87
        $region18: #{tpu_custom_call.1} parent=11 // pred_check_branch
          %280 = sbr.rel (%p278) target = $region20
        $region19: #{tpu_custom_call.1} parent=11 // pred_region
          _
        $region20: #{tpu_custom_call.1} parent=11 // pred_fallthru
          _
        // Predicated region
        $region21: #{tpu_custom_call.1} parent=11 // pred_check
          %p281 = pneg %p108
        $region22: #{tpu_custom_call.1} parent=11 // pred_check_branch
          %283 = sbr.rel (%p281) target = $region24
        $region23: #{tpu_custom_call.1} parent=11 // pred_region
          _
        $region24: #{tpu_custom_call.1} parent=11 // pred_fallthru
          _
        // Predicated region
        $region25: #{tpu_custom_call.1} parent=11 // pred_check
          %p284 = pneg %p129
        $region26: #{tpu_custom_call.1} parent=11 // pred_check_branch
          %286 = sbr.rel (%p284) target = $region28
        $region27: #{tpu_custom_call.1} parent=11 // pred_region
          _
        $region28: #{tpu_custom_call.1} parent=11 // pred_fallthru
          _
        // Predicated region
        $region29: #{tpu_custom_call.1} parent=11 // pred_check
          %p287 = pneg %p150
        $region30: #{tpu_custom_call.1} parent=11 // pred_check_branch
          %289 = sbr.rel (%p287) target = $region32
        $region31: #{tpu_custom_call.1} parent=11 // pred_region
          _
        $region32: #{tpu_custom_call.1} parent=11 // pred_fallthru
          _
        // Predicated region
        $region33: #{tpu_custom_call.1} parent=11 // pred_check
          %p290 = pneg %p171
        $region34: #{tpu_custom_call.1} parent=11 // pred_check_branch
          %292 = sbr.rel (%p290) target = $region36
        $region35: #{tpu_custom_call.1} parent=11 // pred_region
          _
        $region36: #{tpu_custom_call.1} parent=11 // pred_fallthru
          _
        // Predicated region
        $region37: #{tpu_custom_call.1} parent=11 // pred_check
          %p293 = pneg %p192
        $region38: #{tpu_custom_call.1} parent=11 // pred_check_branch
          %295 = sbr.rel (%p293) target = $region40
        $region39: #{tpu_custom_call.1} parent=11 // pred_region
          _
        $region40: #{tpu_custom_call.1} parent=11 // pred_fallthru
          _
        // Predicated region
        $region41: #{tpu_custom_call.1} parent=11 // pred_check
          %p296 = pneg %p213
        $region42: #{tpu_custom_call.1} parent=11 // pred_check_branch
          %298 = sbr.rel (%p296) target = $region44
        $region43: #{tpu_custom_call.1} parent=11 // pred_region
          _
        $region44: #{tpu_custom_call.1} parent=11 // pred_fallthru
          _
        // Predicated region
        $region45: #{tpu_custom_call.1} parent=11 // pred_check
          %p299 = pneg %p234
        $region46: #{tpu_custom_call.1} parent=11 // pred_check_branch
          %301 = sbr.rel (%p299) target = $region48
        $region47: #{tpu_custom_call.1} parent=11 // pred_region
          _
        $region48: #{tpu_custom_call.1} parent=11 // pred_fallthru
          _
      $region12: #{tpu_custom_call.1} parent=5 // pred_fallthru
        _
      %p302 = scmp.lt.s32.totalorder %s19, 2
      // Predicated region
      $region49: #{tpu_custom_call.1} parent=5 // pred_check
        %p303 = pneg %p302
      $region50: #{tpu_custom_call.1} parent=5 // pred_check_branch
        %305 = sbr.rel (%p303) target = $region52
      $region51: #{tpu_custom_call.1} parent=5 // pred_region
        // Predicated region
        $region53: #{tpu_custom_call.1} parent=51 // pred_check
          %p306 = pneg %p60
        $region54: #{tpu_custom_call.1} parent=51 // pred_check_branch
          %308 = sbr.rel (%p306) target = $region56
        $region55: #{tpu_custom_call.1} parent=51 // pred_region
          %p309 = scmp.lt.s32.totalorder %s19, 1
          %s310 = scalar_select %p309, %s19, 1
          %s311 = smul.addr %s310, 4
          %s312 = scalar_lea.vmem %s1, %s311
        $region56: #{tpu_custom_call.1} parent=51 // pred_fallthru
          _
      $region52: #{tpu_custom_call.1} parent=5 // pred_fallthru
        _
      %p313 = scmp.le.s32.totalorder 1, %s19
      %p314 = scmp.lt.s32.totalorder %s19, 3
      %p315 = pnand %p313, %p314
      %p316 = pneg %p315
      // Predicated region
      $region57: #{tpu_custom_call.1} parent=5 // pred_check
        _
      $region58: #{tpu_custom_call.1} parent=5 // pred_check_branch
        %318 = sbr.rel (%p315) target = $region60
      $region59: #{tpu_custom_call.1} parent=5 // pred_region
        %s319 = ssub.s32 %s19, 1
        %p320 = pneg %p40
        %p321 = pneg %p37
        %p322 = scmp.lt.s32.totalorder %s24, 1
        %s323 = scalar_select %p322, %s24, 1
        %s324 = smul.addr %s323, 4
        %s325 = scalar_lea.vmem %s1, %s324
        %p326 = pneg %p66
        %p327 = pneg %p63
        %p328 = pneg %p87
        %p329 = pneg %p84
        %p330 = pneg %p108
        %p331 = pneg %p105
        %p332 = pneg %p129
        %p333 = pneg %p126
        %p334 = pneg %p150
        %p335 = pneg %p147
        %p336 = pneg %p171
        %p337 = pneg %p168
        %p338 = pneg %p192
        %p339 = pneg %p189
        %p340 = pneg %p213
        %p341 = pneg %p210
        %p342 = pneg %p234
        %p343 = pneg %p231
        %p344 = pneg %p260
        %p345 = pneg %p257
        %s346 = sand.u32 %s247, 1
        %s347 = scalar_lea.sflag [#allocation5], %s346
        %s348 = sand.u32 %s247, 1
        %s349 = smul.addr %s348, 8
        %s350 = scalar_lea.vmem [#allocation4], %s349
        %p351 = scmp.lt.s32.totalorder %s24, 1
        %s352 = scalar_select %p351, %s24, 1
        %s353 = smul.addr %s352, 4
        %s354 = scalar_lea.vmem %s1, %s353
        %p356 = scmp.eq.s32.totalorder %s24, 0
        // Predicated region
        $region61: #{tpu_custom_call.1} parent=59 // pred_check
          %p357 = pneg %p356
        $region62: #{tpu_custom_call.1} parent=59 // pred_check_branch
          %359 = sbr.rel (%p357) target = $region64
        $region63: #{tpu_custom_call.1} parent=59 // pred_region
          %v360 = vld [vmem:[%s0] sm:$0xf]
          %v361 = vld [vmem:[%s4] sm:$0x3]
          %v362 = vld [vmem:[%s4 + $0x2] sm:$0x3]
          %v363 = vld [vmem:[%s4 + $0x4] sm:$0x3]
          %v364 = vld [vmem:[%s4 + $0x6] sm:$0x3]
          %v365 = vld [vmem:[%s4 + $0x8] sm:$0x3]
          %v366 = vld [vmem:[%s4 + $0xa] sm:$0x3]
          %v367 = vld [vmem:[%s4 + $0xc] sm:$0x3]
          %v368 = vld [vmem:[%s4 + $0xe] sm:$0x3]
          %v369 = vld [vmem:[%s5] sm:$0x1]
          %v370 = vld [vmem:[%s5 + $0x1] sm:$0x1]
          %v371 = vld [vmem:[%s5 + $0x2] sm:$0x1]
          %v372 = vld [vmem:[%s5 + $0x3] sm:$0x1]
          %v373 = vld [vmem:[%s5 + $0x4] sm:$0x1]
          %v374 = vld [vmem:[%s5 + $0x5] sm:$0x1]
          %v375 = vld [vmem:[%s5 + $0x6] sm:$0x1]
          %v376 = vld [vmem:[%s5 + $0x7] sm:$0x1]
          %v385 = vlaneseq
          %v386 = vshrl.u32 %v385, 7
          %v387 = vsub.s32 0, %v386
          %v388 = vrot.slane %v369, %v387
          %v389 = vlaneseq
          %v390 = vshrl.u32 %v389, 7
          %v391 = vsub.s32 0, %v390
          %v392 = vrot.slane %v370, %v391
          %v393 = vlaneseq
          %v394 = vshrl.u32 %v393, 7
          %v395 = vsub.s32 0, %v394
          %v396 = vrot.slane %v371, %v395
          %v397 = vlaneseq
          %v398 = vshrl.u32 %v397, 7
          %v399 = vsub.s32 0, %v398
          %v400 = vrot.slane %v372, %v399
          %v401 = vlaneseq
          %v402 = vshrl.u32 %v401, 7
          %v403 = vsub.s32 0, %v402
          %v404 = vrot.slane %v373, %v403
          %v405 = vlaneseq
          %v406 = vshrl.u32 %v405, 7
          %v407 = vsub.s32 0, %v406
          %v408 = vrot.slane %v374, %v407
          %v409 = vlaneseq
          %v410 = vshrl.u32 %v409, 7
          %v411 = vsub.s32 0, %v410
          %v412 = vrot.slane %v375, %v411
          %v413 = vlaneseq
          %v414 = vshrl.u32 %v413, 7
          %v415 = vsub.s32 0, %v414
          %v416 = vrot.slane %v376, %v415
          %vm425 = vcmask 261120
          %v427 = vsel %vm425, %v360, 0
          %v430 = vsel %vm425, %v361, 0
          %432 = vmatprep.subr.bf16.mxu0 0
          %433 = vmatpush1.bf16.xpose.msra.mxu0 %v430
          %434 = vmatprep.subr.bf16.mxu0 0
          %435 = vmatpush1.bf16.xpose.msra.mxu0 0
          %436 = vmatprep.subr.bf16.mxu0 0
          %437 = vmatpush1.bf16.xpose.msra.mxu0 0
          %438 = vmatprep.subr.bf16.mxu0 0
          %439 = vmatpush1.bf16.xpose.msra.mxu0 0
          %440 = vmatprep.subr.bf16.mxu0 0
          %441 = vmatpush1.bf16.xpose.msra.mxu0 0
          %442 = vmatprep.subr.bf16.mxu0 0
          %443 = vmatpush1.bf16.xpose.msra.mxu0 0
          %444 = vmatprep.subr.bf16.mxu0 0
          %445 = vmatpush1.bf16.xpose.msra.mxu0 0
          %446 = vmatprep.subr.bf16.mxu0 0
          %447 = vmatpush1.bf16.xpose.msra.mxu0 0
          %448 = vmatprep.subr.bf16.mxu0 0
          %449 = vmatpush1.bf16.xpose.msra.mxu0 0
          %450 = vmatprep.subr.bf16.mxu0 0
          %451 = vmatpush1.bf16.xpose.msra.mxu0 0
          %452 = vmatprep.subr.bf16.mxu0 0
          %453 = vmatpush1.bf16.xpose.msra.mxu0 0
          %454 = vmatprep.subr.bf16.mxu0 0
          %455 = vmatpush1.bf16.xpose.msra.mxu0 0
          %456 = vmatprep.subr.bf16.mxu0 0
          %457 = vmatpush1.bf16.xpose.msra.mxu0 0
          %458 = vmatprep.subr.bf16.mxu0 0
          %459 = vmatpush1.bf16.xpose.msra.mxu0 0
          %460 = vmatprep.subr.bf16.mxu0 0
          %461 = vmatpush1.bf16.xpose.msra.mxu0 0
          %462 = vmatprep.subr.bf16.mxu0 0
          %463 = vmatpush1.bf16.xpose.msra.mxu0 0
          %464 = vmatprep.mubr.bf16.mxu0 0
          %465 = vmatmul.mubr.bf16.gmra.mrb[0].mxu0 %v427
          %v466 = vpop.f32.mrb[0].mxu0
          %v467 = vadd.f32 %v388, %v466
          %v468 = vpop.f32.mrb[0].mxu0
          %v469 = vpop.f32.mrb[0].mxu0
          %v470 = vpop.f32.mrb[0].mxu0
          %471 = vdwg.mxu0
          %v473 = vsel %vm425, %v362, 0
          %475 = vmatprep.subr.bf16.mxu0 0
          %476 = vmatpush1.bf16.xpose.msra.mxu0 %v473
          %477 = vmatprep.subr.bf16.mxu0 0
          %478 = vmatpush1.bf16.xpose.msra.mxu0 0
          %479 = vmatprep.subr.bf16.mxu0 0
          %480 = vmatpush1.bf16.xpose.msra.mxu0 0
          %481 = vmatprep.subr.bf16.mxu0 0
          %482 = vmatpush1.bf16.xpose.msra.mxu0 0
          %483 = vmatprep.subr.bf16.mxu0 0
          %484 = vmatpush1.bf16.xpose.msra.mxu0 0
          %485 = vmatprep.subr.bf16.mxu0 0
          %486 = vmatpush1.bf16.xpose.msra.mxu0 0
          %487 = vmatprep.subr.bf16.mxu0 0
          %488 = vmatpush1.bf16.xpose.msra.mxu0 0
          %489 = vmatprep.subr.bf16.mxu0 0
          %490 = vmatpush1.bf16.xpose.msra.mxu0 0
          %491 = vmatprep.subr.bf16.mxu0 0
          %492 = vmatpush1.bf16.xpose.msra.mxu0 0
          %493 = vmatprep.subr.bf16.mxu0 0
          %494 = vmatpush1.bf16.xpose.msra.mxu0 0
          %495 = vmatprep.subr.bf16.mxu0 0
          %496 = vmatpush1.bf16.xpose.msra.mxu0 0
          %497 = vmatprep.subr.bf16.mxu0 0
          %498 = vmatpush1.bf16.xpose.msra.mxu0 0
          %499 = vmatprep.subr.bf16.mxu0 0
          %500 = vmatpush1.bf16.xpose.msra.mxu0 0
          %501 = vmatprep.subr.bf16.mxu0 0
          %502 = vmatpush1.bf16.xpose.msra.mxu0 0
          %503 = vmatprep.subr.bf16.mxu0 0
          %504 = vmatpush1.bf16.xpose.msra.mxu0 0
          %505 = vmatprep.subr.bf16.mxu0 0
          %506 = vmatpush1.bf16.xpose.msra.mxu0 0
          %507 = vmatprep.mubr.bf16.mxu0 0
          %508 = vmatmul.mubr.bf16.gmra.mrb[0].mxu0 %v427
          %v509 = vpop.f32.mrb[0].mxu0
          %v510 = vadd.f32 %v392, %v509
          %v511 = vpop.f32.mrb[0].mxu0
          %v512 = vpop.f32.mrb[0].mxu0
          %v513 = vpop.f32.mrb[0].mxu0
          %514 = vdwg.mxu0
          %v516 = vsel %vm425, %v363, 0
          %518 = vmatprep.subr.bf16.mxu0 0
          %519 = vmatpush1.bf16.xpose.msra.mxu0 %v516
          %520 = vmatprep.subr.bf16.mxu0 0
          %521 = vmatpush1.bf16.xpose.msra.mxu0 0
          %522 = vmatprep.subr.bf16.mxu0 0
          %523 = vmatpush1.bf16.xpose.msra.mxu0 0
          %524 = vmatprep.subr.bf16.mxu0 0
          %525 = vmatpush1.bf16.xpose.msra.mxu0 0
          %526 = vmatprep.subr.bf16.mxu0 0
          %527 = vmatpush1.bf16.xpose.msra.mxu0 0
          %528 = vmatprep.subr.bf16.mxu0 0
          %529 = vmatpush1.bf16.xpose.msra.mxu0 0
          %530 = vmatprep.subr.bf16.mxu0 0
          %531 = vmatpush1.bf16.xpose.msra.mxu0 0
          %532 = vmatprep.subr.bf16.mxu0 0
          %533 = vmatpush1.bf16.xpose.msra.mxu0 0
          %534 = vmatprep.subr.bf16.mxu0 0
          %535 = vmatpush1.bf16.xpose.msra.mxu0 0
          %536 = vmatprep.subr.bf16.mxu0 0
          %537 = vmatpush1.bf16.xpose.msra.mxu0 0
          %538 = vmatprep.subr.bf16.mxu0 0
          %539 = vmatpush1.bf16.xpose.msra.mxu0 0
          %540 = vmatprep.subr.bf16.mxu0 0
          %541 = vmatpush1.bf16.xpose.msra.mxu0 0
          %542 = vmatprep.subr.bf16.mxu0 0
          %543 = vmatpush1.bf16.xpose.msra.mxu0 0
          %544 = vmatprep.subr.bf16.mxu0 0
          %545 = vmatpush1.bf16.xpose.msra.mxu0 0
          %546 = vmatprep.subr.bf16.mxu0 0
          %547 = vmatpush1.bf16.xpose.msra.mxu0 0
          %548 = vmatprep.subr.bf16.mxu0 0
          %549 = vmatpush1.bf16.xpose.msra.mxu0 0
          %550 = vmatprep.mubr.bf16.mxu0 0
          %551 = vmatmul.mubr.bf16.gmra.mrb[0].mxu0 %v427
          %v552 = vpop.f32.mrb[0].mxu0
          %v553 = vadd.f32 %v396, %v552
          %v554 = vpop.f32.mrb[0].mxu0
          %v555 = vpop.f32.mrb[0].mxu0
          %v556 = vpop.f32.mrb[0].mxu0
          %557 = vdwg.mxu0
          %v559 = vsel %vm425, %v364, 0
          %561 = vmatprep.subr.bf16.mxu0 0
          %562 = vmatpush1.bf16.xpose.msra.mxu0 %v559
          %563 = vmatprep.subr.bf16.mxu0 0
          %564 = vmatpush1.bf16.xpose.msra.mxu0 0
          %565 = vmatprep.subr.bf16.mxu0 0
          %566 = vmatpush1.bf16.xpose.msra.mxu0 0
          %567 = vmatprep.subr.bf16.mxu0 0
          %568 = vmatpush1.bf16.xpose.msra.mxu0 0
          %569 = vmatprep.subr.bf16.mxu0 0
          %570 = vmatpush1.bf16.xpose.msra.mxu0 0
          %571 = vmatprep.subr.bf16.mxu0 0
          %572 = vmatpush1.bf16.xpose.msra.mxu0 0
          %573 = vmatprep.subr.bf16.mxu0 0
          %574 = vmatpush1.bf16.xpose.msra.mxu0 0
          %575 = vmatprep.subr.bf16.mxu0 0
          %576 = vmatpush1.bf16.xpose.msra.mxu0 0
          %577 = vmatprep.subr.bf16.mxu0 0
          %578 = vmatpush1.bf16.xpose.msra.mxu0 0
          %579 = vmatprep.subr.bf16.mxu0 0
          %580 = vmatpush1.bf16.xpose.msra.mxu0 0
          %581 = vmatprep.subr.bf16.mxu0 0
          %582 = vmatpush1.bf16.xpose.msra.mxu0 0
          %583 = vmatprep.subr.bf16.mxu0 0
          %584 = vmatpush1.bf16.xpose.msra.mxu0 0
          %585 = vmatprep.subr.bf16.mxu0 0
          %586 = vmatpush1.bf16.xpose.msra.mxu0 0
          %587 = vmatprep.subr.bf16.mxu0 0
          %588 = vmatpush1.bf16.xpose.msra.mxu0 0
          %589 = vmatprep.subr.bf16.mxu0 0
          %590 = vmatpush1.bf16.xpose.msra.mxu0 0
          %591 = vmatprep.subr.bf16.mxu0 0
          %592 = vmatpush1.bf16.xpose.msra.mxu0 0
          %593 = vmatprep.mubr.bf16.mxu0 0
          %594 = vmatmul.mubr.bf16.gmra.mrb[0].mxu0 %v427
          %v595 = vpop.f32.mrb[0].mxu0
          %v596 = vadd.f32 %v400, %v595
          %v597 = vpop.f32.mrb[0].mxu0
          %v598 = vpop.f32.mrb[0].mxu0
          %v599 = vpop.f32.mrb[0].mxu0
          %600 = vdwg.mxu0
          %v602 = vsel %vm425, %v365, 0
          %604 = vmatprep.subr.bf16.mxu0 0
          %605 = vmatpush1.bf16.xpose.msra.mxu0 %v602
          %606 = vmatprep.subr.bf16.mxu0 0
          %607 = vmatpush1.bf16.xpose.msra.mxu0 0
          %608 = vmatprep.subr.bf16.mxu0 0
          %609 = vmatpush1.bf16.xpose.msra.mxu0 0
          %610 = vmatprep.subr.bf16.mxu0 0
          %611 = vmatpush1.bf16.xpose.msra.mxu0 0
          %612 = vmatprep.subr.bf16.mxu0 0
          %613 = vmatpush1.bf16.xpose.msra.mxu0 0
          %614 = vmatprep.subr.bf16.mxu0 0
          %615 = vmatpush1.bf16.xpose.msra.mxu0 0
          %616 = vmatprep.subr.bf16.mxu0 0
          %617 = vmatpush1.bf16.xpose.msra.mxu0 0
          %618 = vmatprep.subr.bf16.mxu0 0
          %619 = vmatpush1.bf16.xpose.msra.mxu0 0
          %620 = vmatprep.subr.bf16.mxu0 0
          %621 = vmatpush1.bf16.xpose.msra.mxu0 0
          %622 = vmatprep.subr.bf16.mxu0 0
          %623 = vmatpush1.bf16.xpose.msra.mxu0 0
          %624 = vmatprep.subr.bf16.mxu0 0
          %625 = vmatpush1.bf16.xpose.msra.mxu0 0
          %626 = vmatprep.subr.bf16.mxu0 0
          %627 = vmatpush1.bf16.xpose.msra.mxu0 0
          %628 = vmatprep.subr.bf16.mxu0 0
          %629 = vmatpush1.bf16.xpose.msra.mxu0 0
          %630 = vmatprep.subr.bf16.mxu0 0
          %631 = vmatpush1.bf16.xpose.msra.mxu0 0
          %632 = vmatprep.subr.bf16.mxu0 0
          %633 = vmatpush1.bf16.xpose.msra.mxu0 0
          %634 = vmatprep.subr.bf16.mxu0 0
          %635 = vmatpush1.bf16.xpose.msra.mxu0 0
          %636 = vmatprep.mubr.bf16.mxu0 0
          %637 = vmatmul.mubr.bf16.gmra.mrb[0].mxu0 %v427
          %v638 = vpop.f32.mrb[0].mxu0
          %v639 = vadd.f32 %v404, %v638
          %v640 = vpop.f32.mrb[0].mxu0
          %v641 = vpop.f32.mrb[0].mxu0
          %v642 = vpop.f32.mrb[0].mxu0
          %643 = vdwg.mxu0
          %v645 = vsel %vm425, %v366, 0
          %647 = vmatprep.subr.bf16.mxu0 0
          %648 = vmatpush1.bf16.xpose.msra.mxu0 %v645
          %649 = vmatprep.subr.bf16.mxu0 0
          %650 = vmatpush1.bf16.xpose.msra.mxu0 0
          %651 = vmatprep.subr.bf16.mxu0 0
          %652 = vmatpush1.bf16.xpose.msra.mxu0 0
          %653 = vmatprep.subr.bf16.mxu0 0
          %654 = vmatpush1.bf16.xpose.msra.mxu0 0
          %655 = vmatprep.subr.bf16.mxu0 0
          %656 = vmatpush1.bf16.xpose.msra.mxu0 0
          %657 = vmatprep.subr.bf16.mxu0 0
          %658 = vmatpush1.bf16.xpose.msra.mxu0 0
          %659 = vmatprep.subr.bf16.mxu0 0
          %660 = vmatpush1.bf16.xpose.msra.mxu0 0
          %661 = vmatprep.subr.bf16.mxu0 0
          %662 = vmatpush1.bf16.xpose.msra.mxu0 0
          %663 = vmatprep.subr.bf16.mxu0 0
          %664 = vmatpush1.bf16.xpose.msra.mxu0 0
          %665 = vmatprep.subr.bf16.mxu0 0
          %666 = vmatpush1.bf16.xpose.msra.mxu0 0
          %667 = vmatprep.subr.bf16.mxu0 0
          %668 = vmatpush1.bf16.xpose.msra.mxu0 0
          %669 = vmatprep.subr.bf16.mxu0 0
          %670 = vmatpush1.bf16.xpose.msra.mxu0 0
          %671 = vmatprep.subr.bf16.mxu0 0
          %672 = vmatpush1.bf16.xpose.msra.mxu0 0
          %673 = vmatprep.subr.bf16.mxu0 0
          %674 = vmatpush1.bf16.xpose.msra.mxu0 0
          %675 = vmatprep.subr.bf16.mxu0 0
          %676 = vmatpush1.bf16.xpose.msra.mxu0 0
          %677 = vmatprep.subr.bf16.mxu0 0
          %678 = vmatpush1.bf16.xpose.msra.mxu0 0
          %679 = vmatprep.mubr.bf16.mxu0 0
          %680 = vmatmul.mubr.bf16.gmra.mrb[0].mxu0 %v427
          %v681 = vpop.f32.mrb[0].mxu0
          %v682 = vadd.f32 %v408, %v681
          %v683 = vpop.f32.mrb[0].mxu0
          %v684 = vpop.f32.mrb[0].mxu0
          %v685 = vpop.f32.mrb[0].mxu0
          %686 = vdwg.mxu0
          %v688 = vsel %vm425, %v367, 0
          %690 = vmatprep.subr.bf16.mxu0 0
          %691 = vmatpush1.bf16.xpose.msra.mxu0 %v688
          %692 = vmatprep.subr.bf16.mxu0 0
          %693 = vmatpush1.bf16.xpose.msra.mxu0 0
          %694 = vmatprep.subr.bf16.mxu0 0
          %695 = vmatpush1.bf16.xpose.msra.mxu0 0
          %696 = vmatprep.subr.bf16.mxu0 0
          %697 = vmatpush1.bf16.xpose.msra.mxu0 0
          %698 = vmatprep.subr.bf16.mxu0 0
          %699 = vmatpush1.bf16.xpose.msra.mxu0 0
          %700 = vmatprep.subr.bf16.mxu0 0
          %701 = vmatpush1.bf16.xpose.msra.mxu0 0
          %702 = vmatprep.subr.bf16.mxu0 0
          %703 = vmatpush1.bf16.xpose.msra.mxu0 0
          %704 = vmatprep.subr.bf16.mxu0 0
          %705 = vmatpush1.bf16.xpose.msra.mxu0 0
          %706 = vmatprep.subr.bf16.mxu0 0
          %707 = vmatpush1.bf16.xpose.msra.mxu0 0
          %708 = vmatprep.subr.bf16.mxu0 0
          %709 = vmatpush1.bf16.xpose.msra.mxu0 0
          %710 = vmatprep.subr.bf16.mxu0 0
          %711 = vmatpush1.bf16.xpose.msra.mxu0 0
          %712 = vmatprep.subr.bf16.mxu0 0
          %713 = vmatpush1.bf16.xpose.msra.mxu0 0
          %714 = vmatprep.subr.bf16.mxu0 0
          %715 = vmatpush1.bf16.xpose.msra.mxu0 0
          %716 = vmatprep.subr.bf16.mxu0 0
          %717 = vmatpush1.bf16.xpose.msra.mxu0 0
          %718 = vmatprep.subr.bf16.mxu0 0
          %719 = vmatpush1.bf16.xpose.msra.mxu0 0
          %720 = vmatprep.subr.bf16.mxu0 0
          %721 = vmatpush1.bf16.xpose.msra.mxu0 0
          %722 = vmatprep.mubr.bf16.mxu0 0
          %723 = vmatmul.mubr.bf16.gmra.mrb[0].mxu0 %v427
          %v724 = vpop.f32.mrb[0].mxu0
          %v725 = vadd.f32 %v412, %v724
          %v726 = vpop.f32.mrb[0].mxu0
          %v727 = vpop.f32.mrb[0].mxu0
          %v728 = vpop.f32.mrb[0].mxu0
          %729 = vdwg.mxu0
          %v731 = vsel %vm425, %v368, 0
          %733 = vmatprep.subr.bf16.mxu0 0
          %734 = vmatpush1.bf16.xpose.msra.mxu0 %v731
          %735 = vmatprep.subr.bf16.mxu0 0
          %736 = vmatpush1.bf16.xpose.msra.mxu0 0
          %737 = vmatprep.subr.bf16.mxu0 0
          %738 = vmatpush1.bf16.xpose.msra.mxu0 0
          %739 = vmatprep.subr.bf16.mxu0 0
          %740 = vmatpush1.bf16.xpose.msra.mxu0 0
          %741 = vmatprep.subr.bf16.mxu0 0
          %742 = vmatpush1.bf16.xpose.msra.mxu0 0
          %743 = vmatprep.subr.bf16.mxu0 0
          %744 = vmatpush1.bf16.xpose.msra.mxu0 0
          %745 = vmatprep.subr.bf16.mxu0 0
          %746 = vmatpush1.bf16.xpose.msra.mxu0 0
          %747 = vmatprep.subr.bf16.mxu0 0
          %748 = vmatpush1.bf16.xpose.msra.mxu0 0
          %749 = vmatprep.subr.bf16.mxu0 0
          %750 = vmatpush1.bf16.xpose.msra.mxu0 0
          %751 = vmatprep.subr.bf16.mxu0 0
          %752 = vmatpush1.bf16.xpose.msra.mxu0 0
          %753 = vmatprep.subr.bf16.mxu0 0
          %754 = vmatpush1.bf16.xpose.msra.mxu0 0
          %755 = vmatprep.subr.bf16.mxu0 0
          %756 = vmatpush1.bf16.xpose.msra.mxu0 0
          %757 = vmatprep.subr.bf16.mxu0 0
          %758 = vmatpush1.bf16.xpose.msra.mxu0 0
          %759 = vmatprep.subr.bf16.mxu0 0
          %760 = vmatpush1.bf16.xpose.msra.mxu0 0
          %761 = vmatprep.subr.bf16.mxu0 0
          %762 = vmatpush1.bf16.xpose.msra.mxu0 0
          %763 = vmatprep.subr.bf16.mxu0 0
          %764 = vmatpush1.bf16.xpose.msra.mxu0 0
          %765 = vmatprep.mubr.bf16.mxu0 0
          %766 = vmatmul.mubr.bf16.gmra.mrb[0].mxu0 %v427
          %v767 = vpop.f32.mrb[0].mxu0
          %v768 = vadd.f32 %v416, %v767
          %v769 = vpop.f32.mrb[0].mxu0
          %v770 = vpop.f32.mrb[0].mxu0
          %v771 = vpop.f32.mrb[0].mxu0
          %772 = vdwg.mxu0
          %v773 = vld [vmem:[%s6] sm:$0x3]
          %v774 = vld [vmem:[%s6 + $0x2] sm:$0x3]
          %v775 = vld [vmem:[%s6 + $0x4] sm:$0x3]
          %v776 = vld [vmem:[%s6 + $0x6] sm:$0x3]
          %v777 = vld [vmem:[%s6 + $0x8] sm:$0x3]
          %v778 = vld [vmem:[%s6 + $0xa] sm:$0x3]
          %v779 = vld [vmem:[%s6 + $0xc] sm:$0x3]
          %v780 = vld [vmem:[%s6 + $0xe] sm:$0x3]
          %v781 = vld [vmem:[%s7] sm:$0x1]
          %v782 = vld [vmem:[%s7 + $0x1] sm:$0x1]
          %v783 = vld [vmem:[%s7 + $0x2] sm:$0x1]
          %v784 = vld [vmem:[%s7 + $0x3] sm:$0x1]
          %v785 = vld [vmem:[%s7 + $0x4] sm:$0x1]
          %v786 = vld [vmem:[%s7 + $0x5] sm:$0x1]
          %v787 = vld [vmem:[%s7 + $0x6] sm:$0x1]
          %v788 = vld [vmem:[%s7 + $0x7] sm:$0x1]
          %v797 = vlaneseq
          %v798 = vshrl.u32 %v797, 7
          %v799 = vsub.s32 0, %v798
          %v800 = vrot.slane %v781, %v799
          %v801 = vlaneseq
          %v802 = vshrl.u32 %v801, 7
          %v803 = vsub.s32 0, %v802
          %v804 = vrot.slane %v782, %v803
          %v805 = vlaneseq
          %v806 = vshrl.u32 %v805, 7
          %v807 = vsub.s32 0, %v806
          %v808 = vrot.slane %v783, %v807
          %v809 = vlaneseq
          %v810 = vshrl.u32 %v809, 7
          %v811 = vsub.s32 0, %v810
          %v812 = vrot.slane %v784, %v811
          %v813 = vlaneseq
          %v814 = vshrl.u32 %v813, 7
          %v815 = vsub.s32 0, %v814
          %v816 = vrot.slane %v785, %v815
          %v817 = vlaneseq
          %v818 = vshrl.u32 %v817, 7
          %v819 = vsub.s32 0, %v818
          %v820 = vrot.slane %v786, %v819
          %v821 = vlaneseq
          %v822 = vshrl.u32 %v821, 7
          %v823 = vsub.s32 0, %v822
          %v824 = vrot.slane %v787, %v823
          %v825 = vlaneseq
          %v826 = vshrl.u32 %v825, 7
          %v827 = vsub.s32 0, %v826
          %v828 = vrot.slane %v788, %v827
          %v838 = vsel %vm425, %v773, 0
          %840 = vmatprep.subr.bf16.mxu0 0
          %841 = vmatpush1.bf16.xpose.msra.mxu0 %v838
          %842 = vmatprep.subr.bf16.mxu0 0
          %843 = vmatpush1.bf16.xpose.msra.mxu0 0
          %844 = vmatprep.subr.bf16.mxu0 0
          %845 = vmatpush1.bf16.xpose.msra.mxu0 0
          %846 = vmatprep.subr.bf16.mxu0 0
          %847 = vmatpush1.bf16.xpose.msra.mxu0 0
          %848 = vmatprep.subr.bf16.mxu0 0
          %849 = vmatpush1.bf16.xpose.msra.mxu0 0
          %850 = vmatprep.subr.bf16.mxu0 0
          %851 = vmatpush1.bf16.xpose.msra.mxu0 0
          %852 = vmatprep.subr.bf16.mxu0 0
          %853 = vmatpush1.bf16.xpose.msra.mxu0 0
          %854 = vmatprep.subr.bf16.mxu0 0
          %855 = vmatpush1.bf16.xpose.msra.mxu0 0
          %856 = vmatprep.subr.bf16.mxu0 0
          %857 = vmatpush1.bf16.xpose.msra.mxu0 0
          %858 = vmatprep.subr.bf16.mxu0 0
          %859 = vmatpush1.bf16.xpose.msra.mxu0 0
          %860 = vmatprep.subr.bf16.mxu0 0
          %861 = vmatpush1.bf16.xpose.msra.mxu0 0
          %862 = vmatprep.subr.bf16.mxu0 0
          %863 = vmatpush1.bf16.xpose.msra.mxu0 0
          %864 = vmatprep.subr.bf16.mxu0 0
          %865 = vmatpush1.bf16.xpose.msra.mxu0 0
          %866 = vmatprep.subr.bf16.mxu0 0
          %867 = vmatpush1.bf16.xpose.msra.mxu0 0
          %868 = vmatprep.subr.bf16.mxu0 0
          %869 = vmatpush1.bf16.xpose.msra.mxu0 0
          %870 = vmatprep.subr.bf16.mxu0 0
          %871 = vmatpush1.bf16.xpose.msra.mxu0 0
          %872 = vmatprep.mubr.bf16.mxu0 0
          %873 = vmatmul.mubr.bf16.gmra.mrb[0].mxu0 %v427
          %v874 = vpop.f32.mrb[0].mxu0
          %v875 = vadd.f32 %v800, %v874
          %v876 = vpop.f32.mrb[0].mxu0
          %v877 = vpop.f32.mrb[0].mxu0
          %v878 = vpop.f32.mrb[0].mxu0
          %879 = vdwg.mxu0
          %v881 = vsel %vm425, %v774, 0
          %883 = vmatprep.subr.bf16.mxu0 0
          %884 = vmatpush1.bf16.xpose.msra.mxu0 %v881
          %885 = vmatprep.subr.bf16.mxu0 0
          %886 = vmatpush1.bf16.xpose.msra.mxu0 0
          %887 = vmatprep.subr.bf16.mxu0 0
          %888 = vmatpush1.bf16.xpose.msra.mxu0 0
          %889 = vmatprep.subr.bf16.mxu0 0
          %890 = vmatpush1.bf16.xpose.msra.mxu0 0
          %891 = vmatprep.subr.bf16.mxu0 0
          %892 = vmatpush1.bf16.xpose.msra.mxu0 0
          %893 = vmatprep.subr.bf16.mxu0 0
          %894 = vmatpush1.bf16.xpose.msra.mxu0 0
          %895 = vmatprep.subr.bf16.mxu0 0
          %896 = vmatpush1.bf16.xpose.msra.mxu0 0
          %897 = vmatprep.subr.bf16.mxu0 0
          %898 = vmatpush1.bf16.xpose.msra.mxu0 0
          %899 = vmatprep.subr.bf16.mxu0 0
          %900 = vmatpush1.bf16.xpose.msra.mxu0 0
          %901 = vmatprep.subr.bf16.mxu0 0
          %902 = vmatpush1.bf16.xpose.msra.mxu0 0
          %903 = vmatprep.subr.bf16.mxu0 0
          %904 = vmatpush1.bf16.xpose.msra.mxu0 0
          %905 = vmatprep.subr.bf16.mxu0 0
          %906 = vmatpush1.bf16.xpose.msra.mxu0 0
          %907 = vmatprep.subr.bf16.mxu0 0
          %908 = vmatpush1.bf16.xpose.msra.mxu0 0
          %909 = vmatprep.subr.bf16.mxu0 0
          %910 = vmatpush1.bf16.xpose.msra.mxu0 0
          %911 = vmatprep.subr.bf16.mxu0 0
          %912 = vmatpush1.bf16.xpose.msra.mxu0 0
          %913 = vmatprep.subr.bf16.mxu0 0
          %914 = vmatpush1.bf16.xpose.msra.mxu0 0
          %915 = vmatprep.mubr.bf16.mxu0 0
          %916 = vmatmul.mubr.bf16.gmra.mrb[0].mxu0 %v427
          %v917 = vpop.f32.mrb[0].mxu0
          %v918 = vadd.f32 %v804, %v917
          %v919 = vpop.f32.mrb[0].mxu0
          %v920 = vpop.f32.mrb[0].mxu0
          %v921 = vpop.f32.mrb[0].mxu0
          %922 = vdwg.mxu0
          %v924 = vsel %vm425, %v775, 0
          %926 = vmatprep.subr.bf16.mxu0 0
          %927 = vmatpush1.bf16.xpose.msra.mxu0 %v924
          %928 = vmatprep.subr.bf16.mxu0 0
          %929 = vmatpush1.bf16.xpose.msra.mxu0 0
          %930 = vmatprep.subr.bf16.mxu0 0
          %931 = vmatpush1.bf16.xpose.msra.mxu0 0
          %932 = vmatprep.subr.bf16.mxu0 0
          %933 = vmatpush1.bf16.xpose.msra.mxu0 0
          %934 = vmatprep.subr.bf16.mxu0 0
          %935 = vmatpush1.bf16.xpose.msra.mxu0 0
          %936 = vmatprep.subr.bf16.mxu0 0
          %937 = vmatpush1.bf16.xpose.msra.mxu0 0
          %938 = vmatprep.subr.bf16.mxu0 0
          %939 = vmatpush1.bf16.xpose.msra.mxu0 0
          %940 = vmatprep.subr.bf16.mxu0 0
          %941 = vmatpush1.bf16.xpose.msra.mxu0 0
          %942 = vmatprep.subr.bf16.mxu0 0
          %943 = vmatpush1.bf16.xpose.msra.mxu0 0
          %944 = vmatprep.subr.bf16.mxu0 0
          %945 = vmatpush1.bf16.xpose.msra.mxu0 0
          %946 = vmatprep.subr.bf16.mxu0 0
          %947 = vmatpush1.bf16.xpose.msra.mxu0 0
          %948 = vmatprep.subr.bf16.mxu0 0
          %949 = vmatpush1.bf16.xpose.msra.mxu0 0
          %950 = vmatprep.subr.bf16.mxu0 0
          %951 = vmatpush1.bf16.xpose.msra.mxu0 0
          %952 = vmatprep.subr.bf16.mxu0 0
          %953 = vmatpush1.bf16.xpose.msra.mxu0 0
          %954 = vmatprep.subr.bf16.mxu0 0
          %955 = vmatpush1.bf16.xpose.msra.mxu0 0
          %956 = vmatprep.subr.bf16.mxu0 0
          %957 = vmatpush1.bf16.xpose.msra.mxu0 0
          %958 = vmatprep.mubr.bf16.mxu0 0
          %959 = vmatmul.mubr.bf16.gmra.mrb[0].mxu0 %v427
          %v960 = vpop.f32.mrb[0].mxu0
          %v961 = vadd.f32 %v808, %v960
          %v962 = vpop.f32.mrb[0].mxu0
          %v963 = vpop.f32.mrb[0].mxu0
          %v964 = vpop.f32.mrb[0].mxu0
          %965 = vdwg.mxu0
          %v967 = vsel %vm425, %v776, 0
          %969 = vmatprep.subr.bf16.mxu0 0
          %970 = vmatpush1.bf16.xpose.msra.mxu0 %v967
          %971 = vmatprep.subr.bf16.mxu0 0
          %972 = vmatpush1.bf16.xpose.msra.mxu0 0
          %973 = vmatprep.subr.bf16.mxu0 0
          %974 = vmatpush1.bf16.xpose.msra.mxu0 0
          %975 = vmatprep.subr.bf16.mxu0 0
          %976 = vmatpush1.bf16.xpose.msra.mxu0 0
          %977 = vmatprep.subr.bf16.mxu0 0
          %978 = vmatpush1.bf16.xpose.msra.mxu0 0
          %979 = vmatprep.subr.bf16.mxu0 0
          %980 = vmatpush1.bf16.xpose.msra.mxu0 0
          %981 = vmatprep.subr.bf16.mxu0 0
          %982 = vmatpush1.bf16.xpose.msra.mxu0 0
          %983 = vmatprep.subr.bf16.mxu0 0
          %984 = vmatpush1.bf16.xpose.msra.mxu0 0
          %985 = vmatprep.subr.bf16.mxu0 0
          %986 = vmatpush1.bf16.xpose.msra.mxu0 0
          %987 = vmatprep.subr.bf16.mxu0 0
          %988 = vmatpush1.bf16.xpose.msra.mxu0 0
          %989 = vmatprep.subr.bf16.mxu0 0
          %990 = vmatpush1.bf16.xpose.msra.mxu0 0
          %991 = vmatprep.subr.bf16.mxu0 0
          %992 = vmatpush1.bf16.xpose.msra.mxu0 0
          %993 = vmatprep.subr.bf16.mxu0 0
          %994 = vmatpush1.bf16.xpose.msra.mxu0 0
          %995 = vmatprep.subr.bf16.mxu0 0
          %996 = vmatpush1.bf16.xpose.msra.mxu0 0
          %997 = vmatprep.subr.bf16.mxu0 0
          %998 = vmatpush1.bf16.xpose.msra.mxu0 0
          %999 = vmatprep.subr.bf16.mxu0 0
          %1000 = vmatpush1.bf16.xpose.msra.mxu0 0
          %1001 = vmatprep.mubr.bf16.mxu0 0
          %1002 = vmatmul.mubr.bf16.gmra.mrb[0].mxu0 %v427
          %v1003 = vpop.f32.mrb[0].mxu0
          %v1004 = vadd.f32 %v812, %v1003
          %v1005 = vpop.f32.mrb[0].mxu0
          %v1006 = vpop.f32.mrb[0].mxu0
          %v1007 = vpop.f32.mrb[0].mxu0
          %1008 = vdwg.mxu0
          %v1010 = vsel %vm425, %v777, 0
          %1012 = vmatprep.subr.bf16.mxu0 0
          %1013 = vmatpush1.bf16.xpose.msra.mxu0 %v1010
          %1014 = vmatprep.subr.bf16.mxu0 0
          %1015 = vmatpush1.bf16.xpose.msra.mxu0 0
          %1016 = vmatprep.subr.bf16.mxu0 0
          %1017 = vmatpush1.bf16.xpose.msra.mxu0 0
          %1018 = vmatprep.subr.bf16.mxu0 0
          %1019 = vmatpush1.bf16.xpose.msra.mxu0 0
          %1020 = vmatprep.subr.bf16.mxu0 0
          %1021 = vmatpush1.bf16.xpose.msra.mxu0 0
          %1022 = vmatprep.subr.bf16.mxu0 0
          %1023 = vmatpush1.bf16.xpose.msra.mxu0 0
          %1024 = vmatprep.subr.bf16.mxu0 0
          %1025 = vmatpush1.bf16.xpose.msra.mxu0 0
          %1026 = vmatprep.subr.bf16.mxu0 0
          %1027 = vmatpush1.bf16.xpose.msra.mxu0 0
          %1028 = vmatprep.subr.bf16.mxu0 0
          %1029 = vmatpush1.bf16.xpose.msra.mxu0 0
          %1030 = vmatprep.subr.bf16.mxu0 0
          %1031 = vmatpush1.bf16.xpose.msra.mxu0 0
          %1032 = vmatprep.subr.bf16.mxu0 0
          %1033 = vmatpush1.bf16.xpose.msra.mxu0 0
          %1034 = vmatprep.subr.bf16.mxu0 0
          %1035 = vmatpush1.bf16.xpose.msra.mxu0 0
          %1036 = vmatprep.subr.bf16.mxu0 0
          %1037 = vmatpush1.bf16.xpose.msra.mxu0 0
          %1038 = vmatprep.subr.bf16.mxu0 0
          %1039 = vmatpush1.bf16.xpose.msra.mxu0 0
          %1040 = vmatprep.subr.bf16.mxu0 0
          %1041 = vmatpush1.bf16.xpose.msra.mxu0 0
          %1042 = vmatprep.subr.bf16.mxu0 0
          %1043 = vmatpush1.bf16.xpose.msra.mxu0 0
          %1044 = vmatprep.mubr.bf16.mxu0 0
          %1045 = vmatmul.mubr.bf16.gmra.mrb[0].mxu0 %v427
          %v1046 = vpop.f32.mrb[0].mxu0
          %v1047 = vadd.f32 %v816, %v1046
          %v1048 = vpop.f32.mrb[0].mxu0
          %v1049 = vpop.f32.mrb[0].mxu0
          %v1050 = vpop.f32.mrb[0].mxu0
          %1051 = vdwg.mxu0
          %v1053 = vsel %vm425, %v778, 0
          %1055 = vmatprep.subr.bf16.mxu0 0
          %1056 = vmatpush1.bf16.xpose.msra.mxu0 %v1053
          %1057 = vmatprep.subr.bf16.mxu0 0
          %1058 = vmatpush1.bf16.xpose.msra.mxu0 0
          %1059 = vmatprep.subr.bf16.mxu0 0
          %1060 = vmatpush1.bf16.xpose.msra.mxu0 0
          %1061 = vmatprep.subr.bf16.mxu0 0
          %1062 = vmatpush1.bf16.xpose.msra.mxu0 0
          %1063 = vmatprep.subr.bf16.mxu0 0
          %1064 = vmatpush1.bf16.xpose.msra.mxu0 0
          %1065 = vmatprep.subr.bf16.mxu0 0
          %1066 = vmatpush1.bf16.xpose.msra.mxu0 0
          %1067 = vmatprep.subr.bf16.mxu0 0
          %1068 = vmatpush1.bf16.xpose.msra.mxu0 0
          %1069 = vmatprep.subr.bf16.mxu0 0
          %1070 = vmatpush1.bf16.xpose.msra.mxu0 0
          %1071 = vmatprep.subr.bf16.mxu0 0
          %1072 = vmatpush1.bf16.xpose.msra.mxu0 0
          %1073 = vmatprep.subr.bf16.mxu0 0
          %1074 = vmatpush1.bf16.xpose.msra.mxu0 0
          %1075 = vmatprep.subr.bf16.mxu0 0
          %1076 = vmatpush1.bf16.xpose.msra.mxu0 0
          %1077 = vmatprep.subr.bf16.mxu0 0
          %1078 = vmatpush1.bf16.xpose.msra.mxu0 0
          %1079 = vmatprep.subr.bf16.mxu0 0
          %1080 = vmatpush1.bf16.xpose.msra.mxu0 0
          %1081 = vmatprep.subr.bf16.mxu0 0
          %1082 = vmatpush1.bf16.xpose.msra.mxu0 0
          %1083 = vmatprep.subr.bf16.mxu0 0
          %1084 = vmatpush1.bf16.xpose.msra.mxu0 0
          %1085 = vmatprep.subr.bf16.mxu0 0
          %1086 = vmatpush1.bf16.xpose.msra.mxu0 0
          %1087 = vmatprep.mubr.bf16.mxu0 0
          %1088 = vmatmul.mubr.bf16.gmra.mrb[0].mxu0 %v427
          %v1089 = vpop.f32.mrb[0].mxu0
          %v1090 = vadd.f32 %v820, %v1089
          %v1091 = vpop.f32.mrb[0].mxu0
          %v1092 = vpop.f32.mrb[0].mxu0
          %v1093 = vpop.f32.mrb[0].mxu0
          %1094 = vdwg.mxu0
          %v1096 = vsel %vm425, %v779, 0
          %1098 = vmatprep.subr.bf16.mxu0 0
          %1099 = vmatpush1.bf16.xpose.msra.mxu0 %v1096
          %1100 = vmatprep.subr.bf16.mxu0 0
          %1101 = vmatpush1.bf16.xpose.msra.mxu0 0
          %1102 = vmatprep.subr.bf16.mxu0 0
          %1103 = vmatpush1.bf16.xpose.msra.mxu0 0
          %1104 = vmatprep.subr.bf16.mxu0 0
          %1105 = vmatpush1.bf16.xpose.msra.mxu0 0
          %1106 = vmatprep.subr.bf16.mxu0 0
          %1107 = vmatpush1.bf16.xpose.msra.mxu0 0
          %1108 = vmatprep.subr.bf16.mxu0 0
          %1109 = vmatpush1.bf16.xpose.msra.mxu0 0
          %1110 = vmatprep.subr.bf16.mxu0 0
          %1111 = vmatpush1.bf16.xpose.msra.mxu0 0
          %1112 = vmatprep.subr.bf16.mxu0 0
          %1113 = vmatpush1.bf16.xpose.msra.mxu0 0
          %1114 = vmatprep.subr.bf16.mxu0 0
          %1115 = vmatpush1.bf16.xpose.msra.mxu0 0
          %1116 = vmatprep.subr.bf16.mxu0 0
          %1117 = vmatpush1.bf16.xpose.msra.mxu0 0
          %1118 = vmatprep.subr.bf16.mxu0 0
          %1119 = vmatpush1.bf16.xpose.msra.mxu0 0
          %1120 = vmatprep.subr.bf16.mxu0 0
          %1121 = vmatpush1.bf16.xpose.msra.mxu0 0
          %1122 = vmatprep.subr.bf16.mxu0 0
          %1123 = vmatpush1.bf16.xpose.msra.mxu0 0
          %1124 = vmatprep.subr.bf16.mxu0 0
          %1125 = vmatpush1.bf16.xpose.msra.mxu0 0
          %1126 = vmatprep.subr.bf16.mxu0 0
          %1127 = vmatpush1.bf16.xpose.msra.mxu0 0
          %1128 = vmatprep.subr.bf16.mxu0 0
          %1129 = vmatpush1.bf16.xpose.msra.mxu0 0
          %1130 = vmatprep.mubr.bf16.mxu0 0
          %1131 = vmatmul.mubr.bf16.gmra.mrb[0].mxu0 %v427
          %v1132 = vpop.f32.mrb[0].mxu0
          %v1133 = vadd.f32 %v824, %v1132
          %v1134 = vpop.f32.mrb[0].mxu0
          %v1135 = vpop.f32.mrb[0].mxu0
          %v1136 = vpop.f32.mrb[0].mxu0
          %1137 = vdwg.mxu0
          %v1139 = vsel %vm425, %v780, 0
          %1141 = vmatprep.subr.bf16.mxu0 0
          %1142 = vmatpush1.bf16.xpose.msra.mxu0 %v1139
          %1143 = vmatprep.subr.bf16.mxu0 0
          %1144 = vmatpush1.bf16.xpose.msra.mxu0 0
          %1145 = vmatprep.subr.bf16.mxu0 0
          %1146 = vmatpush1.bf16.xpose.msra.mxu0 0
          %1147 = vmatprep.subr.bf16.mxu0 0
          %1148 = vmatpush1.bf16.xpose.msra.mxu0 0
          %1149 = vmatprep.subr.bf16.mxu0 0
          %1150 = vmatpush1.bf16.xpose.msra.mxu0 0
          %1151 = vmatprep.subr.bf16.mxu0 0
          %1152 = vmatpush1.bf16.xpose.msra.mxu0 0
          %1153 = vmatprep.subr.bf16.mxu0 0
          %1154 = vmatpush1.bf16.xpose.msra.mxu0 0
          %1155 = vmatprep.subr.bf16.mxu0 0
          %1156 = vmatpush1.bf16.xpose.msra.mxu0 0
          %1157 = vmatprep.subr.bf16.mxu0 0
          %1158 = vmatpush1.bf16.xpose.msra.mxu0 0
          %1159 = vmatprep.subr.bf16.mxu0 0
          %1160 = vmatpush1.bf16.xpose.msra.mxu0 0
          %1161 = vmatprep.subr.bf16.mxu0 0
          %1162 = vmatpush1.bf16.xpose.msra.mxu0 0
          %1163 = vmatprep.subr.bf16.mxu0 0
          %1164 = vmatpush1.bf16.xpose.msra.mxu0 0
          %1165 = vmatprep.subr.bf16.mxu0 0
          %1166 = vmatpush1.bf16.xpose.msra.mxu0 0
          %1167 = vmatprep.subr.bf16.mxu0 0
          %1168 = vmatpush1.bf16.xpose.msra.mxu0 0
          %1169 = vmatprep.subr.bf16.mxu0 0
          %1170 = vmatpush1.bf16.xpose.msra.mxu0 0
          %1171 = vmatprep.subr.bf16.mxu0 0
          %1172 = vmatpush1.bf16.xpose.msra.mxu0 0
          %1173 = vmatprep.mubr.bf16.mxu0 0
          %1174 = vmatmul.mubr.bf16.gmra.mrb[0].mxu0 %v427
          %v1175 = vpop.f32.mrb[0].mxu0
          %v1176 = vadd.f32 %v828, %v1175
          %v1177 = vpop.f32.mrb[0].mxu0
          %v1178 = vpop.f32.mrb[0].mxu0
          %v1179 = vpop.f32.mrb[0].mxu0
          %1180 = vdwg.mxu0
          %v1181 = vpack.c.bf16 %v467, %v467
          %v1182 = vpack.c.bf16 %v510, %v510
          %v1183 = vpack.c.bf16 %v553, %v553
          %v1184 = vpack.c.bf16 %v596, %v596
          %v1185 = vpack.c.bf16 %v639, %v639
          %v1186 = vpack.c.bf16 %v682, %v682
          %v1187 = vpack.c.bf16 %v725, %v725
          %v1188 = vpack.c.bf16 %v768, %v768
          %vm1189 = vcmask 27648
          %1190 = vst.msk [vmem:[#allocation2] sm:$0xf] %vm1189, %v1181
          %1191 = vst.msk [vmem:[#allocation2 + $0x4] sm:$0xf] %vm1189, %v1182
          %1192 = vst.msk [vmem:[#allocation2 + $0x8] sm:$0xf] %vm1189, %v1183
          %1193 = vst.msk [vmem:[#allocation2 + $0xc] sm:$0xf] %vm1189, %v1184
          %1194 = vst.msk [vmem:[#allocation2 + $0x10] sm:$0xf] %vm1189, %v1185
          %1195 = vst.msk [vmem:[#allocation2 + $0x14] sm:$0xf] %vm1189, %v1186
          %1196 = vst.msk [vmem:[#allocation2 + $0x18] sm:$0xf] %vm1189, %v1187
          %1197 = vst.msk [vmem:[#allocation2 + $0x1c] sm:$0xf] %vm1189, %v1188
          %v1198 = vpack.c.bf16 %v875, %v875
          %v1199 = vpack.c.bf16 %v918, %v918
          %v1200 = vpack.c.bf16 %v961, %v961
          %v1201 = vpack.c.bf16 %v1004, %v1004
          %v1202 = vpack.c.bf16 %v1047, %v1047
          %v1203 = vpack.c.bf16 %v1090, %v1090
          %v1204 = vpack.c.bf16 %v1133, %v1133
          %v1205 = vpack.c.bf16 %v1176, %v1176
          %1206 = vst.msk [vmem:[#allocation3] sm:$0xf] %vm1189, %v1198
          %1207 = vst.msk [vmem:[#allocation3 + $0x4] sm:$0xf] %vm1189, %v1199
          %1208 = vst.msk [vmem:[#allocation3 + $0x8] sm:$0xf] %vm1189, %v1200
          %1209 = vst.msk [vmem:[#allocation3 + $0xc] sm:$0xf] %vm1189, %v1201
          %1210 = vst.msk [vmem:[#allocation3 + $0x10] sm:$0xf] %vm1189, %v1202
          %1211 = vst.msk [vmem:[#allocation3 + $0x14] sm:$0xf] %vm1189, %v1203
          %1212 = vst.msk [vmem:[#allocation3 + $0x18] sm:$0xf] %vm1189, %v1204
          %1213 = vst.msk [vmem:[#allocation3 + $0x1c] sm:$0xf] %vm1189, %v1205
        $region64: #{tpu_custom_call.1} parent=59 // pred_fallthru
          _
        %v1214 = vld [vmem:[%s354] sm:$0xf]
        %v1215 = vld [vmem:[%s2] sm:$0x3]
        %v1216 = vld [vmem:[%s2 + $0x2] sm:$0x3]
        %v1217 = vld [vmem:[%s2 + $0x4] sm:$0x3]
        %v1218 = vld [vmem:[%s2 + $0x6] sm:$0x3]
        %v1219 = vld [vmem:[%s2 + $0x8] sm:$0x3]
        %v1220 = vld [vmem:[%s2 + $0xa] sm:$0x3]
        %v1221 = vld [vmem:[%s2 + $0xc] sm:$0x3]
        %v1222 = vld [vmem:[%s2 + $0xe] sm:$0x3]
        %v1223 = vld [vmem:[%s3] sm:$0x1]
        %v1224 = vld [vmem:[%s3 + $0x1] sm:$0x1]
        %v1225 = vld [vmem:[%s3 + $0x2] sm:$0x1]
        %v1226 = vld [vmem:[%s3 + $0x3] sm:$0x1]
        %v1227 = vld [vmem:[%s3 + $0x4] sm:$0x1]
        %v1228 = vld [vmem:[%s3 + $0x5] sm:$0x1]
        %v1229 = vld [vmem:[%s3 + $0x6] sm:$0x1]
        %v1230 = vld [vmem:[%s3 + $0x7] sm:$0x1]
        %v1239 = vlaneseq
        %v1240 = vshrl.u32 %v1239, 7
        %v1241 = vsub.s32 0, %v1240
        %v1242 = vrot.slane %v1223, %v1241
        %v1243 = vlaneseq
        %v1244 = vshrl.u32 %v1243, 7
        %v1245 = vsub.s32 0, %v1244
        %v1246 = vrot.slane %v1224, %v1245
        %v1247 = vlaneseq
        %v1248 = vshrl.u32 %v1247, 7
        %v1249 = vsub.s32 0, %v1248
        %v1250 = vrot.slane %v1225, %v1249
        %v1251 = vlaneseq
        %v1252 = vshrl.u32 %v1251, 7
        %v1253 = vsub.s32 0, %v1252
        %v1254 = vrot.slane %v1226, %v1253
        %v1255 = vlaneseq
        %v1256 = vshrl.u32 %v1255, 7
        %v1257 = vsub.s32 0, %v1256
        %v1258 = vrot.slane %v1227, %v1257
        %v1259 = vlaneseq
        %v1260 = vshrl.u32 %v1259, 7
        %v1261 = vsub.s32 0, %v1260
        %v1262 = vrot.slane %v1228, %v1261
        %v1263 = vlaneseq
        %v1264 = vshrl.u32 %v1263, 7
        %v1265 = vsub.s32 0, %v1264
        %v1266 = vrot.slane %v1229, %v1265
        %v1267 = vlaneseq
        %v1268 = vshrl.u32 %v1267, 7
        %v1269 = vsub.s32 0, %v1268
        %v1270 = vrot.slane %v1230, %v1269
        %vm1279 = vcmask 261120
        %v1281 = vsel %vm1279, %v1214, 0
        %v1284 = vsel %vm1279, %v1215, 0
        %1286 = vmatprep.subr.bf16.mxu0 0
        %1287 = vmatpush1.bf16.xpose.msra.mxu0 %v1284
        %1288 = vmatprep.subr.bf16.mxu0 0
        %1289 = vmatpush1.bf16.xpose.msra.mxu0 0
        %1290 = vmatprep.subr.bf16.mxu0 0
        %1291 = vmatpush1.bf16.xpose.msra.mxu0 0
        %1292 = vmatprep.subr.bf16.mxu0 0
        %1293 = vmatpush1.bf16.xpose.msra.mxu0 0
        %1294 = vmatprep.subr.bf16.mxu0 0
        %1295 = vmatpush1.bf16.xpose.msra.mxu0 0
        %1296 = vmatprep.subr.bf16.mxu0 0
        %1297 = vmatpush1.bf16.xpose.msra.mxu0 0
        %1298 = vmatprep.subr.bf16.mxu0 0
        %1299 = vmatpush1.bf16.xpose.msra.mxu0 0
        %1300 = vmatprep.subr.bf16.mxu0 0
        %1301 = vmatpush1.bf16.xpose.msra.mxu0 0
        %1302 = vmatprep.subr.bf16.mxu0 0
        %1303 = vmatpush1.bf16.xpose.msra.mxu0 0
        %1304 = vmatprep.subr.bf16.mxu0 0
        %1305 = vmatpush1.bf16.xpose.msra.mxu0 0
        %1306 = vmatprep.subr.bf16.mxu0 0
        %1307 = vmatpush1.bf16.xpose.msra.mxu0 0
        %1308 = vmatprep.subr.bf16.mxu0 0
        %1309 = vmatpush1.bf16.xpose.msra.mxu0 0
        %1310 = vmatprep.subr.bf16.mxu0 0
        %1311 = vmatpush1.bf16.xpose.msra.mxu0 0
        %1312 = vmatprep.subr.bf16.mxu0 0
        %1313 = vmatpush1.bf16.xpose.msra.mxu0 0
        %1314 = vmatprep.subr.bf16.mxu0 0
        %1315 = vmatpush1.bf16.xpose.msra.mxu0 0
        %1316 = vmatprep.subr.bf16.mxu0 0
        %1317 = vmatpush1.bf16.xpose.msra.mxu0 0
        %1318 = vmatprep.mubr.bf16.mxu0 0
        %1319 = vmatmul.mubr.bf16.gmra.mrb[0].mxu0 %v1281
        %v1320 = vpop.f32.mrb[0].mxu0
        %v1321 = vadd.f32 %v1242, %v1320
        %v1322 = vpop.f32.mrb[0].mxu0
        %v1323 = vpop.f32.mrb[0].mxu0
        %v1324 = vpop.f32.mrb[0].mxu0
        %1325 = vdwg.mxu0
        %v1327 = vsel %vm1279, %v1216, 0
        %1329 = vmatprep.subr.bf16.mxu0 0
        %1330 = vmatpush1.bf16.xpose.msra.mxu0 %v1327
        %1331 = vmatprep.subr.bf16.mxu0 0
        %1332 = vmatpush1.bf16.xpose.msra.mxu0 0
        %1333 = vmatprep.subr.bf16.mxu0 0
        %1334 = vmatpush1.bf16.xpose.msra.mxu0 0
        %1335 = vmatprep.subr.bf16.mxu0 0
        %1336 = vmatpush1.bf16.xpose.msra.mxu0 0
        %1337 = vmatprep.subr.bf16.mxu0 0
        %1338 = vmatpush1.bf16.xpose.msra.mxu0 0
        %1339 = vmatprep.subr.bf16.mxu0 0
        %1340 = vmatpush1.bf16.xpose.msra.mxu0 0
        %1341 = vmatprep.subr.bf16.mxu0 0
        %1342 = vmatpush1.bf16.xpose.msra.mxu0 0
        %1343 = vmatprep.subr.bf16.mxu0 0
        %1344 = vmatpush1.bf16.xpose.msra.mxu0 0
        %1345 = vmatprep.subr.bf16.mxu0 0
        %1346 = vmatpush1.bf16.xpose.msra.mxu0 0
        %1347 = vmatprep.subr.bf16.mxu0 0
        %1348 = vmatpush1.bf16.xpose.msra.mxu0 0
        %1349 = vmatprep.subr.bf16.mxu0 0
        %1350 = vmatpush1.bf16.xpose.msra.mxu0 0
        %1351 = vmatprep.subr.bf16.mxu0 0
        %1352 = vmatpush1.bf16.xpose.msra.mxu0 0
        %1353 = vmatprep.subr.bf16.mxu0 0
        %1354 = vmatpush1.bf16.xpose.msra.mxu0 0
        %1355 = vmatprep.subr.bf16.mxu0 0
        %1356 = vmatpush1.bf16.xpose.msra.mxu0 0
        %1357 = vmatprep.subr.bf16.mxu0 0
        %1358 = vmatpush1.bf16.xpose.msra.mxu0 0
        %1359 = vmatprep.subr.bf16.mxu0 0
        %1360 = vmatpush1.bf16.xpose.msra.mxu0 0
        %1361 = vmatprep.mubr.bf16.mxu0 0
        %1362 = vmatmul.mubr.bf16.gmra.mrb[0].mxu0 %v1281
        %v1363 = vpop.f32.mrb[0].mxu0
        %v1364 = vadd.f32 %v1246, %v1363
        %v1365 = vpop.f32.mrb[0].mxu0
        %v1366 = vpop.f32.mrb[0].mxu0
        %v1367 = vpop.f32.mrb[0].mxu0
        %1368 = vdwg.mxu0
        %v1370 = vsel %vm1279, %v1217, 0
        %1372 = vmatprep.subr.bf16.mxu0 0
        %1373 = vmatpush1.bf16.xpose.msra.mxu0 %v1370
        %1374 = vmatprep.subr.bf16.mxu0 0
        %1375 = vmatpush1.bf16.xpose.msra.mxu0 0
        %1376 = vmatprep.subr.bf16.mxu0 0
        %1377 = vmatpush1.bf16.xpose.msra.mxu0 0
        %1378 = vmatprep.subr.bf16.mxu0 0
        %1379 = vmatpush1.bf16.xpose.msra.mxu0 0
        %1380 = vmatprep.subr.bf16.mxu0 0
        %1381 = vmatpush1.bf16.xpose.msra.mxu0 0
        %1382 = vmatprep.subr.bf16.mxu0 0
        %1383 = vmatpush1.bf16.xpose.msra.mxu0 0
        %1384 = vmatprep.subr.bf16.mxu0 0
        %1385 = vmatpush1.bf16.xpose.msra.mxu0 0
        %1386 = vmatprep.subr.bf16.mxu0 0
        %1387 = vmatpush1.bf16.xpose.msra.mxu0 0
        %1388 = vmatprep.subr.bf16.mxu0 0
        %1389 = vmatpush1.bf16.xpose.msra.mxu0 0
        %1390 = vmatprep.subr.bf16.mxu0 0
        %1391 = vmatpush1.bf16.xpose.msra.mxu0 0
        %1392 = vmatprep.subr.bf16.mxu0 0
        %1393 = vmatpush1.bf16.xpose.msra.mxu0 0
        %1394 = vmatprep.subr.bf16.mxu0 0
        %1395 = vmatpush1.bf16.xpose.msra.mxu0 0
        %1396 = vmatprep.subr.bf16.mxu0 0
        %1397 = vmatpush1.bf16.xpose.msra.mxu0 0
        %1398 = vmatprep.subr.bf16.mxu0 0
        %1399 = vmatpush1.bf16.xpose.msra.mxu0 0
        %1400 = vmatprep.subr.bf16.mxu0 0
        %1401 = vmatpush1.bf16.xpose.msra.mxu0 0
        %1402 = vmatprep.subr.bf16.mxu0 0
        %1403 = vmatpush1.bf16.xpose.msra.mxu0 0
        %1404 = vmatprep.mubr.bf16.mxu0 0
        %1405 = vmatmul.mubr.bf16.gmra.mrb[0].mxu0 %v1281
        %v1406 = vpop.f32.mrb[0].mxu0
        %v1407 = vadd.f32 %v1250, %v1406
        %v1408 = vpop.f32.mrb[0].mxu0
        %v1409 = vpop.f32.mrb[0].mxu0
        %v1410 = vpop.f32.mrb[0].mxu0
        %1411 = vdwg.mxu0
        %v1413 = vsel %vm1279, %v1218, 0
        %1415 = vmatprep.subr.bf16.mxu0 0
        %1416 = vmatpush1.bf16.xpose.msra.mxu0 %v1413
        %1417 = vmatprep.subr.bf16.mxu0 0
        %1418 = vmatpush1.bf16.xpose.msra.mxu0 0
        %1419 = vmatprep.subr.bf16.mxu0 0
        %1420 = vmatpush1.bf16.xpose.msra.mxu0 0
        %1421 = vmatprep.subr.bf16.mxu0 0
        %1422 = vmatpush1.bf16.xpose.msra.mxu0 0
        %1423 = vmatprep.subr.bf16.mxu0 0
        %1424 = vmatpush1.bf16.xpose.msra.mxu0 0
        %1425 = vmatprep.subr.bf16.mxu0 0
        %1426 = vmatpush1.bf16.xpose.msra.mxu0 0
        %1427 = vmatprep.subr.bf16.mxu0 0
        %1428 = vmatpush1.bf16.xpose.msra.mxu0 0
        %1429 = vmatprep.subr.bf16.mxu0 0
        %1430 = vmatpush1.bf16.xpose.msra.mxu0 0
        %1431 = vmatprep.subr.bf16.mxu0 0
        %1432 = vmatpush1.bf16.xpose.msra.mxu0 0
        %1433 = vmatprep.subr.bf16.mxu0 0
        %1434 = vmatpush1.bf16.xpose.msra.mxu0 0
        %1435 = vmatprep.subr.bf16.mxu0 0
        %1436 = vmatpush1.bf16.xpose.msra.mxu0 0
        %1437 = vmatprep.subr.bf16.mxu0 0
        %1438 = vmatpush1.bf16.xpose.msra.mxu0 0
        %1439 = vmatprep.subr.bf16.mxu0 0
        %1440 = vmatpush1.bf16.xpose.msra.mxu0 0
        %1441 = vmatprep.subr.bf16.mxu0 0
        %1442 = vmatpush1.bf16.xpose.msra.mxu0 0
        %1443 = vmatprep.subr.bf16.mxu0 0
        %1444 = vmatpush1.bf16.xpose.msra.mxu0 0
        %1445 = vmatprep.subr.bf16.mxu0 0
        %1446 = vmatpush1.bf16.xpose.msra.mxu0 0
        %1447 = vmatprep.mubr.bf16.mxu0 0
        %1448 = vmatmul.mubr.bf16.gmra.mrb[0].mxu0 %v1281
        %v1449 = vpop.f32.mrb[0].mxu0
        %v1450 = vadd.f32 %v1254, %v1449
        %v1451 = vpop.f32.mrb[0].mxu0
        %v1452 = vpop.f32.mrb[0].mxu0
        %v1453 = vpop.f32.mrb[0].mxu0
        %1454 = vdwg.mxu0
        %v1456 = vsel %vm1279, %v1219, 0
        %1458 = vmatprep.subr.bf16.mxu0 0
        %1459 = vmatpush1.bf16.xpose.msra.mxu0 %v1456
        %1460 = vmatprep.subr.bf16.mxu0 0
        %1461 = vmatpush1.bf16.xpose.msra.mxu0 0
        %1462 = vmatprep.subr.bf16.mxu0 0
        %1463 = vmatpush1.bf16.xpose.msra.mxu0 0
        %1464 = vmatprep.subr.bf16.mxu0 0
        %1465 = vmatpush1.bf16.xpose.msra.mxu0 0
        %1466 = vmatprep.subr.bf16.mxu0 0
        %1467 = vmatpush1.bf16.xpose.msra.mxu0 0
        %1468 = vmatprep.subr.bf16.mxu0 0
        %1469 = vmatpush1.bf16.xpose.msra.mxu0 0
        %1470 = vmatprep.subr.bf16.mxu0 0
        %1471 = vmatpush1.bf16.xpose.msra.mxu0 0
        %1472 = vmatprep.subr.bf16.mxu0 0
        %1473 = vmatpush1.bf16.xpose.msra.mxu0 0
        %1474 = vmatprep.subr.bf16.mxu0 0
        %1475 = vmatpush1.bf16.xpose.msra.mxu0 0
        %1476 = vmatprep.subr.bf16.mxu0 0
        %1477 = vmatpush1.bf16.xpose.msra.mxu0 0
        %1478 = vmatprep.subr.bf16.mxu0 0
        %1479 = vmatpush1.bf16.xpose.msra.mxu0 0
        %1480 = vmatprep.subr.bf16.mxu0 0
        %1481 = vmatpush1.bf16.xpose.msra.mxu0 0
        %1482 = vmatprep.subr.bf16.mxu0 0
        %1483 = vmatpush1.bf16.xpose.msra.mxu0 0
        %1484 = vmatprep.subr.bf16.mxu0 0
        %1485 = vmatpush1.bf16.xpose.msra.mxu0 0
        %1486 = vmatprep.subr.bf16.mxu0 0
        %1487 = vmatpush1.bf16.xpose.msra.mxu0 0
        %1488 = vmatprep.subr.bf16.mxu0 0
        %1489 = vmatpush1.bf16.xpose.msra.mxu0 0
        %1490 = vmatprep.mubr.bf16.mxu0 0
        %1491 = vmatmul.mubr.bf16.gmra.mrb[0].mxu0 %v1281
        %v1492 = vpop.f32.mrb[0].mxu0
        %v1493 = vadd.f32 %v1258, %v1492
        %v1494 = vpop.f32.mrb[0].mxu0
        %v1495 = vpop.f32.mrb[0].mxu0
        %v1496 = vpop.f32.mrb[0].mxu0
        %1497 = vdwg.mxu0
        %v1499 = vsel %vm1279, %v1220, 0
        %1501 = vmatprep.subr.bf16.mxu0 0
        %1502 = vmatpush1.bf16.xpose.msra.mxu0 %v1499
        %1503 = vmatprep.subr.bf16.mxu0 0
        %1504 = vmatpush1.bf16.xpose.msra.mxu0 0
        %1505 = vmatprep.subr.bf16.mxu0 0
        %1506 = vmatpush1.bf16.xpose.msra.mxu0 0
        %1507 = vmatprep.subr.bf16.mxu0 0
        %1508 = vmatpush1.bf16.xpose.msra.mxu0 0
        %1509 = vmatprep.subr.bf16.mxu0 0
        %1510 = vmatpush1.bf16.xpose.msra.mxu0 0
        %1511 = vmatprep.subr.bf16.mxu0 0
        %1512 = vmatpush1.bf16.xpose.msra.mxu0 0
        %1513 = vmatprep.subr.bf16.mxu0 0
        %1514 = vmatpush1.bf16.xpose.msra.mxu0 0
        %1515 = vmatprep.subr.bf16.mxu0 0
        %1516 = vmatpush1.bf16.xpose.msra.mxu0 0
        %1517 = vmatprep.subr.bf16.mxu0 0
        %1518 = vmatpush1.bf16.xpose.msra.mxu0 0
        %1519 = vmatprep.subr.bf16.mxu0 0
        %1520 = vmatpush1.bf16.xpose.msra.mxu0 0
        %1521 = vmatprep.subr.bf16.mxu0 0
        %1522 = vmatpush1.bf16.xpose.msra.mxu0 0
        %1523 = vmatprep.subr.bf16.mxu0 0
        %1524 = vmatpush1.bf16.xpose.msra.mxu0 0
        %1525 = vmatprep.subr.bf16.mxu0 0
        %1526 = vmatpush1.bf16.xpose.msra.mxu0 0
        %1527 = vmatprep.subr.bf16.mxu0 0
        %1528 = vmatpush1.bf16.xpose.msra.mxu0 0
        %1529 = vmatprep.subr.bf16.mxu0 0
        %1530 = vmatpush1.bf16.xpose.msra.mxu0 0
        %1531 = vmatprep.subr.bf16.mxu0 0
        %1532 = vmatpush1.bf16.xpose.msra.mxu0 0
        %1533 = vmatprep.mubr.bf16.mxu0 0
        %1534 = vmatmul.mubr.bf16.gmra.mrb[0].mxu0 %v1281
        %v1535 = vpop.f32.mrb[0].mxu0
        %v1536 = vadd.f32 %v1262, %v1535
        %v1537 = vpop.f32.mrb[0].mxu0
        %v1538 = vpop.f32.mrb[0].mxu0
        %v1539 = vpop.f32.mrb[0].mxu0
        %1540 = vdwg.mxu0
        %v1542 = vsel %vm1279, %v1221, 0
        %1544 = vmatprep.subr.bf16.mxu0 0
        %1545 = vmatpush1.bf16.xpose.msra.mxu0 %v1542
        %1546 = vmatprep.subr.bf16.mxu0 0
        %1547 = vmatpush1.bf16.xpose.msra.mxu0 0
        %1548 = vmatprep.subr.bf16.mxu0 0
        %1549 = vmatpush1.bf16.xpose.msra.mxu0 0
        %1550 = vmatprep.subr.bf16.mxu0 0
        %1551 = vmatpush1.bf16.xpose.msra.mxu0 0
        %1552 = vmatprep.subr.bf16.mxu0 0
        %1553 = vmatpush1.bf16.xpose.msra.mxu0 0
        %1554 = vmatprep.subr.bf16.mxu0 0
        %1555 = vmatpush1.bf16.xpose.msra.mxu0 0
        %1556 = vmatprep.subr.bf16.mxu0 0
        %1557 = vmatpush1.bf16.xpose.msra.mxu0 0
        %1558 = vmatprep.subr.bf16.mxu0 0
        %1559 = vmatpush1.bf16.xpose.msra.mxu0 0
        %1560 = vmatprep.subr.bf16.mxu0 0
        %1561 = vmatpush1.bf16.xpose.msra.mxu0 0
        %1562 = vmatprep.subr.bf16.mxu0 0
        %1563 = vmatpush1.bf16.xpose.msra.mxu0 0
        %1564 = vmatprep.subr.bf16.mxu0 0
        %1565 = vmatpush1.bf16.xpose.msra.mxu0 0
        %1566 = vmatprep.subr.bf16.mxu0 0
        %1567 = vmatpush1.bf16.xpose.msra.mxu0 0
        %1568 = vmatprep.subr.bf16.mxu0 0
        %1569 = vmatpush1.bf16.xpose.msra.mxu0 0
        %1570 = vmatprep.subr.bf16.mxu0 0
        %1571 = vmatpush1.bf16.xpose.msra.mxu0 0
        %1572 = vmatprep.subr.bf16.mxu0 0
        %1573 = vmatpush1.bf16.xpose.msra.mxu0 0
        %1574 = vmatprep.subr.bf16.mxu0 0
        %1575 = vmatpush1.bf16.xpose.msra.mxu0 0
        %1576 = vmatprep.mubr.bf16.mxu0 0
        %1577 = vmatmul.mubr.bf16.gmra.mrb[0].mxu0 %v1281
        %v1578 = vpop.f32.mrb[0].mxu0
        %v1579 = vadd.f32 %v1266, %v1578
        %v1580 = vpop.f32.mrb[0].mxu0
        %v1581 = vpop.f32.mrb[0].mxu0
        %v1582 = vpop.f32.mrb[0].mxu0
        %1583 = vdwg.mxu0
        %v1585 = vsel %vm1279, %v1222, 0
        %1587 = vmatprep.subr.bf16.mxu0 0
        %1588 = vmatpush1.bf16.xpose.msra.mxu0 %v1585
        %1589 = vmatprep.subr.bf16.mxu0 0
        %1590 = vmatpush1.bf16.xpose.msra.mxu0 0
        %1591 = vmatprep.subr.bf16.mxu0 0
        %1592 = vmatpush1.bf16.xpose.msra.mxu0 0
        %1593 = vmatprep.subr.bf16.mxu0 0
        %1594 = vmatpush1.bf16.xpose.msra.mxu0 0
        %1595 = vmatprep.subr.bf16.mxu0 0
        %1596 = vmatpush1.bf16.xpose.msra.mxu0 0
        %1597 = vmatprep.subr.bf16.mxu0 0
        %1598 = vmatpush1.bf16.xpose.msra.mxu0 0
        %1599 = vmatprep.subr.bf16.mxu0 0
        %1600 = vmatpush1.bf16.xpose.msra.mxu0 0
        %1601 = vmatprep.subr.bf16.mxu0 0
        %1602 = vmatpush1.bf16.xpose.msra.mxu0 0
        %1603 = vmatprep.subr.bf16.mxu0 0
        %1604 = vmatpush1.bf16.xpose.msra.mxu0 0
        %1605 = vmatprep.subr.bf16.mxu0 0
        %1606 = vmatpush1.bf16.xpose.msra.mxu0 0
        %1607 = vmatprep.subr.bf16.mxu0 0
        %1608 = vmatpush1.bf16.xpose.msra.mxu0 0
        %1609 = vmatprep.subr.bf16.mxu0 0
        %1610 = vmatpush1.bf16.xpose.msra.mxu0 0
        %1611 = vmatprep.subr.bf16.mxu0 0
        %1612 = vmatpush1.bf16.xpose.msra.mxu0 0
        %1613 = vmatprep.subr.bf16.mxu0 0
        %1614 = vmatpush1.bf16.xpose.msra.mxu0 0
        %1615 = vmatprep.subr.bf16.mxu0 0
        %1616 = vmatpush1.bf16.xpose.msra.mxu0 0
        %1617 = vmatprep.subr.bf16.mxu0 0
        %1618 = vmatpush1.bf16.xpose.msra.mxu0 0
        %1619 = vmatprep.mubr.bf16.mxu0 0
        %1620 = vmatmul.mubr.bf16.gmra.mrb[0].mxu0 %v1281
        %v1621 = vpop.f32.mrb[0].mxu0
        %v1622 = vadd.f32 %v1270, %v1621
        %v1623 = vpop.f32.mrb[0].mxu0
        %v1624 = vpop.f32.mrb[0].mxu0
        %v1625 = vpop.f32.mrb[0].mxu0
        %1626 = vdwg.mxu0
        %v1627 = vpack.c.bf16 %v1321, %v1321
        %v1628 = vpack.c.bf16 %v1364, %v1364
        %v1629 = vpack.c.bf16 %v1407, %v1407
        %v1630 = vpack.c.bf16 %v1450, %v1450
        %v1631 = vpack.c.bf16 %v1493, %v1493
        %v1632 = vpack.c.bf16 %v1536, %v1536
        %v1633 = vpack.c.bf16 %v1579, %v1579
        %v1634 = vpack.c.bf16 %v1622, %v1622
        %v1635 = vld [vmem:[#allocation2] sm:$0xf]
        %v1636 = vld [vmem:[#allocation2 + $0x4] sm:$0xf]
        %v1637 = vld [vmem:[#allocation2 + $0x8] sm:$0xf]
        %v1638 = vld [vmem:[#allocation2 + $0xc] sm:$0xf]
        %v1639 = vld [vmem:[#allocation2 + $0x10] sm:$0xf]
        %v1640 = vld [vmem:[#allocation2 + $0x14] sm:$0xf]
        %v1641 = vld [vmem:[#allocation2 + $0x18] sm:$0xf]
        %v1642 = vld [vmem:[#allocation2 + $0x1c] sm:$0xf]
        %vm1643 = vcmask 31744
        %v1645 = vsel %vm1643, %v1627, 0
        %v1648 = vsel %vm1643, %v1635, 0
        %1650 = vmatprep.subr.bf16.mxu0 0
        %1651 = vmatpush1.bf16.xpose.msra.mxu0 %v1648
        %1652 = vmatprep.subr.bf16.mxu0 0
        %1653 = vmatpush1.bf16.xpose.msra.mxu0 0
        %1654 = vmatprep.subr.bf16.mxu0 0
        %1655 = vmatpush1.bf16.xpose.msra.mxu0 0
        %1656 = vmatprep.subr.bf16.mxu0 0
        %1657 = vmatpush1.bf16.xpose.msra.mxu0 0
        %1658 = vmatprep.subr.bf16.mxu0 0
        %1659 = vmatpush1.bf16.xpose.msra.mxu0 0
        %1660 = vmatprep.subr.bf16.mxu0 0
        %1661 = vmatpush1.bf16.xpose.msra.mxu0 0
        %1662 = vmatprep.subr.bf16.mxu0 0
        %1663 = vmatpush1.bf16.xpose.msra.mxu0 0
        %1664 = vmatprep.subr.bf16.mxu0 0
        %1665 = vmatpush1.bf16.xpose.msra.mxu0 0
        %1666 = vmatprep.subr.bf16.mxu0 0
        %1667 = vmatpush1.bf16.xpose.msra.mxu0 0
        %1668 = vmatprep.subr.bf16.mxu0 0
        %1669 = vmatpush1.bf16.xpose.msra.mxu0 0
        %1670 = vmatprep.subr.bf16.mxu0 0
        %1671 = vmatpush1.bf16.xpose.msra.mxu0 0
        %1672 = vmatprep.subr.bf16.mxu0 0
        %1673 = vmatpush1.bf16.xpose.msra.mxu0 0
        %1674 = vmatprep.subr.bf16.mxu0 0
        %1675 = vmatpush1.bf16.xpose.msra.mxu0 0
        %1676 = vmatprep.subr.bf16.mxu0 0
        %1677 = vmatpush1.bf16.xpose.msra.mxu0 0
        %1678 = vmatprep.subr.bf16.mxu0 0
        %1679 = vmatpush1.bf16.xpose.msra.mxu0 0
        %1680 = vmatprep.subr.bf16.mxu0 0
        %1681 = vmatpush1.bf16.xpose.msra.mxu0 0
        %1682 = vmatprep.mubr.bf16.mxu0 0
        %1683 = vmatmul.mubr.bf16.gmra.mrb[0].mxu0 %v1645
        %v1684 = vpop.f32.mrb[0].mxu0
        %v1685 = vadd.f32 0.0, %v1684
        %v1686 = vpop.f32.mrb[0].mxu0
        %v1687 = vpop.f32.mrb[0].mxu0
        %v1688 = vpop.f32.mrb[0].mxu0
        %1689 = vdwg.mxu0
        %v1691 = vsel %vm1643, %v1628, 0
        %v1694 = vsel %vm1643, %v1636, 0
        %1696 = vmatprep.subr.bf16.mxu0 0
        %1697 = vmatpush1.bf16.xpose.msra.mxu0 %v1694
        %1698 = vmatprep.subr.bf16.mxu0 0
        %1699 = vmatpush1.bf16.xpose.msra.mxu0 0
        %1700 = vmatprep.subr.bf16.mxu0 0
        %1701 = vmatpush1.bf16.xpose.msra.mxu0 0
        %1702 = vmatprep.subr.bf16.mxu0 0
        %1703 = vmatpush1.bf16.xpose.msra.mxu0 0
        %1704 = vmatprep.subr.bf16.mxu0 0
        %1705 = vmatpush1.bf16.xpose.msra.mxu0 0
        %1706 = vmatprep.subr.bf16.mxu0 0
        %1707 = vmatpush1.bf16.xpose.msra.mxu0 0
        %1708 = vmatprep.subr.bf16.mxu0 0
        %1709 = vmatpush1.bf16.xpose.msra.mxu0 0
        %1710 = vmatprep.subr.bf16.mxu0 0
        %1711 = vmatpush1.bf16.xpose.msra.mxu0 0
        %1712 = vmatprep.subr.bf16.mxu0 0
        %1713 = vmatpush1.bf16.xpose.msra.mxu0 0
        %1714 = vmatprep.subr.bf16.mxu0 0
        %1715 = vmatpush1.bf16.xpose.msra.mxu0 0
        %1716 = vmatprep.subr.bf16.mxu0 0
        %1717 = vmatpush1.bf16.xpose.msra.mxu0 0
        %1718 = vmatprep.subr.bf16.mxu0 0
        %1719 = vmatpush1.bf16.xpose.msra.mxu0 0
        %1720 = vmatprep.subr.bf16.mxu0 0
        %1721 = vmatpush1.bf16.xpose.msra.mxu0 0
        %1722 = vmatprep.subr.bf16.mxu0 0
        %1723 = vmatpush1.bf16.xpose.msra.mxu0 0
        %1724 = vmatprep.subr.bf16.mxu0 0
        %1725 = vmatpush1.bf16.xpose.msra.mxu0 0
        %1726 = vmatprep.subr.bf16.mxu0 0
        %1727 = vmatpush1.bf16.xpose.msra.mxu0 0
        %1728 = vmatprep.mubr.bf16.mxu0 0
        %1729 = vmatmul.mubr.bf16.gmra.mrb[0].mxu0 %v1691
        %v1730 = vpop.f32.mrb[0].mxu0
        %v1731 = vadd.f32 0.0, %v1730
        %v1732 = vpop.f32.mrb[0].mxu0
        %v1733 = vpop.f32.mrb[0].mxu0
        %v1734 = vpop.f32.mrb[0].mxu0
        %1735 = vdwg.mxu0
        %v1737 = vsel %vm1643, %v1629, 0
        %v1740 = vsel %vm1643, %v1637, 0
        %1742 = vmatprep.subr.bf16.mxu0 0
        %1743 = vmatpush1.bf16.xpose.msra.mxu0 %v1740
        %1744 = vmatprep.subr.bf16.mxu0 0
        %1745 = vmatpush1.bf16.xpose.msra.mxu0 0
        %1746 = vmatprep.subr.bf16.mxu0 0
        %1747 = vmatpush1.bf16.xpose.msra.mxu0 0
        %1748 = vmatprep.subr.bf16.mxu0 0
        %1749 = vmatpush1.bf16.xpose.msra.mxu0 0
        %1750 = vmatprep.subr.bf16.mxu0 0
        %1751 = vmatpush1.bf16.xpose.msra.mxu0 0
        %1752 = vmatprep.subr.bf16.mxu0 0
        %1753 = vmatpush1.bf16.xpose.msra.mxu0 0
        %1754 = vmatprep.subr.bf16.mxu0 0
        %1755 = vmatpush1.bf16.xpose.msra.mxu0 0
        %1756 = vmatprep.subr.bf16.mxu0 0
        %1757 = vmatpush1.bf16.xpose.msra.mxu0 0
        %1758 = vmatprep.subr.bf16.mxu0 0
        %1759 = vmatpush1.bf16.xpose.msra.mxu0 0
        %1760 = vmatprep.subr.bf16.mxu0 0
        %1761 = vmatpush1.bf16.xpose.msra.mxu0 0
        %1762 = vmatprep.subr.bf16.mxu0 0
        %1763 = vmatpush1.bf16.xpose.msra.mxu0 0
        %1764 = vmatprep.subr.bf16.mxu0 0
        %1765 = vmatpush1.bf16.xpose.msra.mxu0 0
        %1766 = vmatprep.subr.bf16.mxu0 0
        %1767 = vmatpush1.bf16.xpose.msra.mxu0 0
        %1768 = vmatprep.subr.bf16.mxu0 0
        %1769 = vmatpush1.bf16.xpose.msra.mxu0 0
        %1770 = vmatprep.subr.bf16.mxu0 0
        %1771 = vmatpush1.bf16.xpose.msra.mxu0 0
        %1772 = vmatprep.subr.bf16.mxu0 0
        %1773 = vmatpush1.bf16.xpose.msra.mxu0 0
        %1774 = vmatprep.mubr.bf16.mxu0 0
        %1775 = vmatmul.mubr.bf16.gmra.mrb[0].mxu0 %v1737
        %v1776 = vpop.f32.mrb[0].mxu0
        %v1777 = vadd.f32 0.0, %v1776
        %v1778 = vpop.f32.mrb[0].mxu0
        %v1779 = vpop.f32.mrb[0].mxu0
        %v1780 = vpop.f32.mrb[0].mxu0
        %1781 = vdwg.mxu0
        %v1783 = vsel %vm1643, %v1630, 0
        %v1786 = vsel %vm1643, %v1638, 0
        %1788 = vmatprep.subr.bf16.mxu0 0
        %1789 = vmatpush1.bf16.xpose.msra.mxu0 %v1786
        %1790 = vmatprep.subr.bf16.mxu0 0
        %1791 = vmatpush1.bf16.xpose.msra.mxu0 0
        %1792 = vmatprep.subr.bf16.mxu0 0
        %1793 = vmatpush1.bf16.xpose.msra.mxu0 0
        %1794 = vmatprep.subr.bf16.mxu0 0
        %1795 = vmatpush1.bf16.xpose.msra.mxu0 0
        %1796 = vmatprep.subr.bf16.mxu0 0
        %1797 = vmatpush1.bf16.xpose.msra.mxu0 0
        %1798 = vmatprep.subr.bf16.mxu0 0
        %1799 = vmatpush1.bf16.xpose.msra.mxu0 0
        %1800 = vmatprep.subr.bf16.mxu0 0
        %1801 = vmatpush1.bf16.xpose.msra.mxu0 0
        %1802 = vmatprep.subr.bf16.mxu0 0
        %1803 = vmatpush1.bf16.xpose.msra.mxu0 0
        %1804 = vmatprep.subr.bf16.mxu0 0
        %1805 = vmatpush1.bf16.xpose.msra.mxu0 0
        %1806 = vmatprep.subr.bf16.mxu0 0
        %1807 = vmatpush1.bf16.xpose.msra.mxu0 0
        %1808 = vmatprep.subr.bf16.mxu0 0
        %1809 = vmatpush1.bf16.xpose.msra.mxu0 0
        %1810 = vmatprep.subr.bf16.mxu0 0
        %1811 = vmatpush1.bf16.xpose.msra.mxu0 0
        %1812 = vmatprep.subr.bf16.mxu0 0
        %1813 = vmatpush1.bf16.xpose.msra.mxu0 0
        %1814 = vmatprep.subr.bf16.mxu0 0
        %1815 = vmatpush1.bf16.xpose.msra.mxu0 0
        %1816 = vmatprep.subr.bf16.mxu0 0
        %1817 = vmatpush1.bf16.xpose.msra.mxu0 0
        %1818 = vmatprep.subr.bf16.mxu0 0
        %1819 = vmatpush1.bf16.xpose.msra.mxu0 0
        %1820 = vmatprep.mubr.bf16.mxu0 0
        %1821 = vmatmul.mubr.bf16.gmra.mrb[0].mxu0 %v1783
        %v1822 = vpop.f32.mrb[0].mxu0
        %v1823 = vadd.f32 0.0, %v1822
        %v1824 = vpop.f32.mrb[0].mxu0
        %v1825 = vpop.f32.mrb[0].mxu0
        %v1826 = vpop.f32.mrb[0].mxu0
        %1827 = vdwg.mxu0
        %v1829 = vsel %vm1643, %v1631, 0
        %v1832 = vsel %vm1643, %v1639, 0
        %1834 = vmatprep.subr.bf16.mxu0 0
        %1835 = vmatpush1.bf16.xpose.msra.mxu0 %v1832
        %1836 = vmatprep.subr.bf16.mxu0 0
        %1837 = vmatpush1.bf16.xpose.msra.mxu0 0
        %1838 = vmatprep.subr.bf16.mxu0 0
        %1839 = vmatpush1.bf16.xpose.msra.mxu0 0
        %1840 = vmatprep.subr.bf16.mxu0 0
        %1841 = vmatpush1.bf16.xpose.msra.mxu0 0
        %1842 = vmatprep.subr.bf16.mxu0 0
        %1843 = vmatpush1.bf16.xpose.msra.mxu0 0
        %1844 = vmatprep.subr.bf16.mxu0 0
        %1845 = vmatpush1.bf16.xpose.msra.mxu0 0
        %1846 = vmatprep.subr.bf16.mxu0 0
        %1847 = vmatpush1.bf16.xpose.msra.mxu0 0
        %1848 = vmatprep.subr.bf16.mxu0 0
        %1849 = vmatpush1.bf16.xpose.msra.mxu0 0
        %1850 = vmatprep.subr.bf16.mxu0 0
        %1851 = vmatpush1.bf16.xpose.msra.mxu0 0
        %1852 = vmatprep.subr.bf16.mxu0 0
        %1853 = vmatpush1.bf16.xpose.msra.mxu0 0
        %1854 = vmatprep.subr.bf16.mxu0 0
        %1855 = vmatpush1.bf16.xpose.msra.mxu0 0
        %1856 = vmatprep.subr.bf16.mxu0 0
        %1857 = vmatpush1.bf16.xpose.msra.mxu0 0
        %1858 = vmatprep.subr.bf16.mxu0 0
        %1859 = vmatpush1.bf16.xpose.msra.mxu0 0
        %1860 = vmatprep.subr.bf16.mxu0 0
        %1861 = vmatpush1.bf16.xpose.msra.mxu0 0
        %1862 = vmatprep.subr.bf16.mxu0 0
        %1863 = vmatpush1.bf16.xpose.msra.mxu0 0
        %1864 = vmatprep.subr.bf16.mxu0 0
        %1865 = vmatpush1.bf16.xpose.msra.mxu0 0
        %1866 = vmatprep.mubr.bf16.mxu0 0
        %1867 = vmatmul.mubr.bf16.gmra.mrb[0].mxu0 %v1829
        %v1868 = vpop.f32.mrb[0].mxu0
        %v1869 = vadd.f32 0.0, %v1868
        %v1870 = vpop.f32.mrb[0].mxu0
        %v1871 = vpop.f32.mrb[0].mxu0
        %v1872 = vpop.f32.mrb[0].mxu0
        %1873 = vdwg.mxu0
        %v1875 = vsel %vm1643, %v1632, 0
        %v1878 = vsel %vm1643, %v1640, 0
        %1880 = vmatprep.subr.bf16.mxu0 0
        %1881 = vmatpush1.bf16.xpose.msra.mxu0 %v1878
        %1882 = vmatprep.subr.bf16.mxu0 0
        %1883 = vmatpush1.bf16.xpose.msra.mxu0 0
        %1884 = vmatprep.subr.bf16.mxu0 0
        %1885 = vmatpush1.bf16.xpose.msra.mxu0 0
        %1886 = vmatprep.subr.bf16.mxu0 0
        %1887 = vmatpush1.bf16.xpose.msra.mxu0 0
        %1888 = vmatprep.subr.bf16.mxu0 0
        %1889 = vmatpush1.bf16.xpose.msra.mxu0 0
        %1890 = vmatprep.subr.bf16.mxu0 0
        %1891 = vmatpush1.bf16.xpose.msra.mxu0 0
        %1892 = vmatprep.subr.bf16.mxu0 0
        %1893 = vmatpush1.bf16.xpose.msra.mxu0 0
        %1894 = vmatprep.subr.bf16.mxu0 0
        %1895 = vmatpush1.bf16.xpose.msra.mxu0 0
        %1896 = vmatprep.subr.bf16.mxu0 0
        %1897 = vmatpush1.bf16.xpose.msra.mxu0 0
        %1898 = vmatprep.subr.bf16.mxu0 0
        %1899 = vmatpush1.bf16.xpose.msra.mxu0 0
        %1900 = vmatprep.subr.bf16.mxu0 0
        %1901 = vmatpush1.bf16.xpose.msra.mxu0 0
        %1902 = vmatprep.subr.bf16.mxu0 0
        %1903 = vmatpush1.bf16.xpose.msra.mxu0 0
        %1904 = vmatprep.subr.bf16.mxu0 0
        %1905 = vmatpush1.bf16.xpose.msra.mxu0 0
        %1906 = vmatprep.subr.bf16.mxu0 0
        %1907 = vmatpush1.bf16.xpose.msra.mxu0 0
        %1908 = vmatprep.subr.bf16.mxu0 0
        %1909 = vmatpush1.bf16.xpose.msra.mxu0 0
        %1910 = vmatprep.subr.bf16.mxu0 0
        %1911 = vmatpush1.bf16.xpose.msra.mxu0 0
        %1912 = vmatprep.mubr.bf16.mxu0 0
        %1913 = vmatmul.mubr.bf16.gmra.mrb[0].mxu0 %v1875
        %v1914 = vpop.f32.mrb[0].mxu0
        %v1915 = vadd.f32 0.0, %v1914
        %v1916 = vpop.f32.mrb[0].mxu0
        %v1917 = vpop.f32.mrb[0].mxu0
        %v1918 = vpop.f32.mrb[0].mxu0
        %1919 = vdwg.mxu0
        %v1921 = vsel %vm1643, %v1633, 0
        %v1924 = vsel %vm1643, %v1641, 0
        %1926 = vmatprep.subr.bf16.mxu0 0
        %1927 = vmatpush1.bf16.xpose.msra.mxu0 %v1924
        %1928 = vmatprep.subr.bf16.mxu0 0
        %1929 = vmatpush1.bf16.xpose.msra.mxu0 0
        %1930 = vmatprep.subr.bf16.mxu0 0
        %1931 = vmatpush1.bf16.xpose.msra.mxu0 0
        %1932 = vmatprep.subr.bf16.mxu0 0
        %1933 = vmatpush1.bf16.xpose.msra.mxu0 0
        %1934 = vmatprep.subr.bf16.mxu0 0
        %1935 = vmatpush1.bf16.xpose.msra.mxu0 0
        %1936 = vmatprep.subr.bf16.mxu0 0
        %1937 = vmatpush1.bf16.xpose.msra.mxu0 0
        %1938 = vmatprep.subr.bf16.mxu0 0
        %1939 = vmatpush1.bf16.xpose.msra.mxu0 0
        %1940 = vmatprep.subr.bf16.mxu0 0
        %1941 = vmatpush1.bf16.xpose.msra.mxu0 0
        %1942 = vmatprep.subr.bf16.mxu0 0
        %1943 = vmatpush1.bf16.xpose.msra.mxu0 0
        %1944 = vmatprep.subr.bf16.mxu0 0
        %1945 = vmatpush1.bf16.xpose.msra.mxu0 0
        %1946 = vmatprep.subr.bf16.mxu0 0
        %1947 = vmatpush1.bf16.xpose.msra.mxu0 0
        %1948 = vmatprep.subr.bf16.mxu0 0
        %1949 = vmatpush1.bf16.xpose.msra.mxu0 0
        %1950 = vmatprep.subr.bf16.mxu0 0
        %1951 = vmatpush1.bf16.xpose.msra.mxu0 0
        %1952 = vmatprep.subr.bf16.mxu0 0
        %1953 = vmatpush1.bf16.xpose.msra.mxu0 0
        %1954 = vmatprep.subr.bf16.mxu0 0
        %1955 = vmatpush1.bf16.xpose.msra.mxu0 0
        %1956 = vmatprep.subr.bf16.mxu0 0
        %1957 = vmatpush1.bf16.xpose.msra.mxu0 0
        %1958 = vmatprep.mubr.bf16.mxu0 0
        %1959 = vmatmul.mubr.bf16.gmra.mrb[0].mxu0 %v1921
        %v1960 = vpop.f32.mrb[0].mxu0
        %v1961 = vadd.f32 0.0, %v1960
        %v1962 = vpop.f32.mrb[0].mxu0
        %v1963 = vpop.f32.mrb[0].mxu0
        %v1964 = vpop.f32.mrb[0].mxu0
        %1965 = vdwg.mxu0
        %v1967 = vsel %vm1643, %v1634, 0
        %v1970 = vsel %vm1643, %v1642, 0
        %1972 = vmatprep.subr.bf16.mxu0 0
        %1973 = vmatpush1.bf16.xpose.msra.mxu0 %v1970
        %1974 = vmatprep.subr.bf16.mxu0 0
        %1975 = vmatpush1.bf16.xpose.msra.mxu0 0
        %1976 = vmatprep.subr.bf16.mxu0 0
        %1977 = vmatpush1.bf16.xpose.msra.mxu0 0
        %1978 = vmatprep.subr.bf16.mxu0 0
        %1979 = vmatpush1.bf16.xpose.msra.mxu0 0
        %1980 = vmatprep.subr.bf16.mxu0 0
        %1981 = vmatpush1.bf16.xpose.msra.mxu0 0
        %1982 = vmatprep.subr.bf16.mxu0 0
        %1983 = vmatpush1.bf16.xpose.msra.mxu0 0
        %1984 = vmatprep.subr.bf16.mxu0 0
        %1985 = vmatpush1.bf16.xpose.msra.mxu0 0
        %1986 = vmatprep.subr.bf16.mxu0 0
        %1987 = vmatpush1.bf16.xpose.msra.mxu0 0
        %1988 = vmatprep.subr.bf16.mxu0 0
        %1989 = vmatpush1.bf16.xpose.msra.mxu0 0
        %1990 = vmatprep.subr.bf16.mxu0 0
        %1991 = vmatpush1.bf16.xpose.msra.mxu0 0
        %1992 = vmatprep.subr.bf16.mxu0 0
        %1993 = vmatpush1.bf16.xpose.msra.mxu0 0
        %1994 = vmatprep.subr.bf16.mxu0 0
        %1995 = vmatpush1.bf16.xpose.msra.mxu0 0
        %1996 = vmatprep.subr.bf16.mxu0 0
        %1997 = vmatpush1.bf16.xpose.msra.mxu0 0
        %1998 = vmatprep.subr.bf16.mxu0 0
        %1999 = vmatpush1.bf16.xpose.msra.mxu0 0
        %2000 = vmatprep.subr.bf16.mxu0 0
        %2001 = vmatpush1.bf16.xpose.msra.mxu0 0
        %2002 = vmatprep.subr.bf16.mxu0 0
        %2003 = vmatpush1.bf16.xpose.msra.mxu0 0
        %2004 = vmatprep.mubr.bf16.mxu0 0
        %2005 = vmatmul.mubr.bf16.gmra.mrb[0].mxu0 %v1967
        %v2006 = vpop.f32.mrb[0].mxu0
        %v2007 = vadd.f32 0.0, %v2006
        %v2008 = vpop.f32.mrb[0].mxu0
        %v2009 = vpop.f32.mrb[0].mxu0
        %v2010 = vpop.f32.mrb[0].mxu0
        %2011 = vdwg.mxu0
        %v2012 = vmul.f32 %v1685, 0.5
        %v2013 = vmul.f32 %v1731, 0.5
        %v2014 = vmul.f32 %v1777, 0.5
        %v2015 = vmul.f32 %v1823, 0.5
        %v2016 = vmul.f32 %v1869, 0.5
        %v2017 = vmul.f32 %v1915, 0.5
        %v2018 = vmul.f32 %v1961, 0.5
        %v2019 = vmul.f32 %v2007, 0.5
        %vm2020 = vcmask 64512
        %v2021 = vsel %vm2020, %v2012, -inf
        %2022 = vmax.xlane.f32.xlu0 %v2021
        %v2023 = vpop.xlane.xlu0 %2022
        %v2024 = vsel %vm2020, %v2013, -inf
        %2025 = vmax.xlane.f32.xlu0 %v2024
        %v2026 = vpop.xlane.xlu0 %2025
        %v2027 = vsel %vm2020, %v2014, -inf
        %2028 = vmax.xlane.f32.xlu0 %v2027
        %v2029 = vpop.xlane.xlu0 %2028
        %v2030 = vsel %vm2020, %v2015, -inf
        %2031 = vmax.xlane.f32.xlu0 %v2030
        %v2032 = vpop.xlane.xlu0 %2031
        %v2033 = vsel %vm2020, %v2016, -inf
        %2034 = vmax.xlane.f32.xlu0 %v2033
        %v2035 = vpop.xlane.xlu0 %2034
        %v2036 = vsel %vm2020, %v2017, -inf
        %2037 = vmax.xlane.f32.xlu0 %v2036
        %v2038 = vpop.xlane.xlu0 %2037
        %v2039 = vsel %vm2020, %v2018, -inf
        %2040 = vmax.xlane.f32.xlu0 %v2039
        %v2041 = vpop.xlane.xlu0 %2040
        %v2042 = vsel %vm2020, %v2019, -inf
        %2043 = vmax.xlane.f32.xlu0 %v2042
        %v2044 = vpop.xlane.xlu0 %2043
        %v2045 = vsub.f32 %v2012, %v2023
        %v2046 = vsub.f32 %v2013, %v2026
        %v2047 = vsub.f32 %v2014, %v2029
        %v2048 = vsub.f32 %v2015, %v2032
        %v2049 = vsub.f32 %v2016, %v2035
        %v2050 = vsub.f32 %v2017, %v2038
        %v2051 = vsub.f32 %v2018, %v2041
        %v2052 = vsub.f32 %v2019, %v2044
        %v2053 = vmul.f32 %v2045, 1.442695
        %v2054 = vpow.pop %v2053
        %v2055 = vmul.f32 %v2046, 1.442695
        %v2056 = vpow.pop %v2055
        %v2057 = vmul.f32 %v2047, 1.442695
        %v2058 = vpow.pop %v2057
        %v2059 = vmul.f32 %v2048, 1.442695
        %v2060 = vpow.pop %v2059
        %v2061 = vmul.f32 %v2049, 1.442695
        %v2062 = vpow.pop %v2061
        %v2063 = vmul.f32 %v2050, 1.442695
        %v2064 = vpow.pop %v2063
        %v2065 = vmul.f32 %v2051, 1.442695
        %v2066 = vpow.pop %v2065
        %v2067 = vmul.f32 %v2052, 1.442695
        %v2068 = vpow.pop %v2067
        %v2069 = vsel %vm2020, %v2054, 0.0
        %2070 = vadd.xlane.f32.xlu0 %v2069
        %v2071 = vpop.xlane.xlu0 %2070
        %v2072 = vsel %vm2020, %v2056, 0.0
        %2073 = vadd.xlane.f32.xlu0 %v2072
        %v2074 = vpop.xlane.xlu0 %2073
        %v2075 = vsel %vm2020, %v2058, 0.0
        %2076 = vadd.xlane.f32.xlu0 %v2075
        %v2077 = vpop.xlane.xlu0 %2076
        %v2078 = vsel %vm2020, %v2060, 0.0
        %2079 = vadd.xlane.f32.xlu0 %v2078
        %v2080 = vpop.xlane.xlu0 %2079
        %v2081 = vsel %vm2020, %v2062, 0.0
        %2082 = vadd.xlane.f32.xlu0 %v2081
        %v2083 = vpop.xlane.xlu0 %2082
        %v2084 = vsel %vm2020, %v2064, 0.0
        %2085 = vadd.xlane.f32.xlu0 %v2084
        %v2086 = vpop.xlane.xlu0 %2085
        %v2087 = vsel %vm2020, %v2066, 0.0
        %2088 = vadd.xlane.f32.xlu0 %v2087
        %v2089 = vpop.xlane.xlu0 %2088
        %v2090 = vsel %vm2020, %v2068, 0.0
        %2091 = vadd.xlane.f32.xlu0 %v2090
        %v2092 = vpop.xlane.xlu0 %2091
        %v2093 = vrcp.pop %v2071
        %v2094 = vrcp.pop %v2074
        %v2095 = vrcp.pop %v2077
        %v2096 = vrcp.pop %v2080
        %v2097 = vrcp.pop %v2083
        %v2098 = vrcp.pop %v2086
        %v2099 = vrcp.pop %v2089
        %v2100 = vrcp.pop %v2092
        %v2101 = vmul.f32 %v2054, %v2093
        %v2102 = vmul.f32 %v2056, %v2094
        %v2103 = vmul.f32 %v2058, %v2095
        %v2104 = vmul.f32 %v2060, %v2096
        %v2105 = vmul.f32 %v2062, %v2097
        %v2106 = vmul.f32 %v2064, %v2098
        %v2107 = vmul.f32 %v2066, %v2099
        %v2108 = vmul.f32 %v2068, %v2100
        %v2109 = vpack.c.bf16 %v2101, %v2101
        %v2110 = vpack.c.bf16 %v2102, %v2102
        %v2111 = vpack.c.bf16 %v2103, %v2103
        %v2112 = vpack.c.bf16 %v2104, %v2104
        %v2113 = vpack.c.bf16 %v2105, %v2105
        %v2114 = vpack.c.bf16 %v2106, %v2106
        %v2115 = vpack.c.bf16 %v2107, %v2107
        %v2116 = vpack.c.bf16 %v2108, %v2108
        %v2117 = vld [vmem:[#allocation3] sm:$0xf]
        %v2118 = vld [vmem:[#allocation3 + $0x4] sm:$0xf]
        %v2119 = vld [vmem:[#allocation3 + $0x8] sm:$0xf]
        %v2120 = vld [vmem:[#allocation3 + $0xc] sm:$0xf]
        %v2121 = vld [vmem:[#allocation3 + $0x10] sm:$0xf]
        %v2122 = vld [vmem:[#allocation3 + $0x14] sm:$0xf]
        %v2123 = vld [vmem:[#allocation3 + $0x18] sm:$0xf]
        %v2124 = vld [vmem:[#allocation3 + $0x1c] sm:$0xf]
        %v2126 = vsel %vm2020, %v2109, 0
        %vm2128 = vcmask 1043456
        %v2130 = vsel %vm2128, %v2117, 0
        %2132 = vmatprep.subr.bf16.mxu0 0
        %2133 = vmatpush1.bf16.msra.mxu0 %v2130
        %2134 = vmatprep.subr.bf16.mxu0 0
        %2135 = vmatpush1.bf16.msra.mxu0 0
        %2136 = vmatprep.subr.bf16.mxu0 0
        %2137 = vmatpush1.bf16.msra.mxu0 0
        %2138 = vmatprep.subr.bf16.mxu0 0
        %2139 = vmatpush1.bf16.msra.mxu0 0
        %2140 = vmatprep.subr.bf16.mxu0 0
        %2141 = vmatpush1.bf16.msra.mxu0 0
        %2142 = vmatprep.subr.bf16.mxu0 0
        %2143 = vmatpush1.bf16.msra.mxu0 0
        %2144 = vmatprep.subr.bf16.mxu0 0
        %2145 = vmatpush1.bf16.msra.mxu0 0
        %2146 = vmatprep.subr.bf16.mxu0 0
        %2147 = vmatpush1.bf16.msra.mxu0 0
        %2148 = vmatprep.subr.bf16.mxu0 0
        %2149 = vmatpush1.bf16.msra.mxu0 0
        %2150 = vmatprep.subr.bf16.mxu0 0
        %2151 = vmatpush1.bf16.msra.mxu0 0
        %2152 = vmatprep.subr.bf16.mxu0 0
        %2153 = vmatpush1.bf16.msra.mxu0 0
        %2154 = vmatprep.subr.bf16.mxu0 0
        %2155 = vmatpush1.bf16.msra.mxu0 0
        %2156 = vmatprep.subr.bf16.mxu0 0
        %2157 = vmatpush1.bf16.msra.mxu0 0
        %2158 = vmatprep.subr.bf16.mxu0 0
        %2159 = vmatpush1.bf16.msra.mxu0 0
        %2160 = vmatprep.subr.bf16.mxu0 0
        %2161 = vmatpush1.bf16.msra.mxu0 0
        %2162 = vmatprep.subr.bf16.mxu0 0
        %2163 = vmatpush1.bf16.msra.mxu0 0
        %2164 = vmatprep.mubr.bf16.mxu0 0
        %2165 = vmatmul.mubr.bf16.gmra.mrb[0].mxu0 %v2126
        %v2166 = vpop.f32.mrb[0].mxu0
        %v2167 = vadd.f32 0.0, %v2166
        %v2168 = vpop.f32.mrb[0].mxu0
        %v2169 = vpop.f32.mrb[0].mxu0
        %v2170 = vpop.f32.mrb[0].mxu0
        %2171 = vdwg.mxu0
        %v2173 = vsel %vm2020, %v2110, 0
        %v2176 = vsel %vm2128, %v2118, 0
        %2178 = vmatprep.subr.bf16.mxu0 0
        %2179 = vmatpush1.bf16.msra.mxu0 %v2176
        %2180 = vmatprep.subr.bf16.mxu0 0
        %2181 = vmatpush1.bf16.msra.mxu0 0
        %2182 = vmatprep.subr.bf16.mxu0 0
        %2183 = vmatpush1.bf16.msra.mxu0 0
        %2184 = vmatprep.subr.bf16.mxu0 0
        %2185 = vmatpush1.bf16.msra.mxu0 0
        %2186 = vmatprep.subr.bf16.mxu0 0
        %2187 = vmatpush1.bf16.msra.mxu0 0
        %2188 = vmatprep.subr.bf16.mxu0 0
        %2189 = vmatpush1.bf16.msra.mxu0 0
        %2190 = vmatprep.subr.bf16.mxu0 0
        %2191 = vmatpush1.bf16.msra.mxu0 0
        %2192 = vmatprep.subr.bf16.mxu0 0
        %2193 = vmatpush1.bf16.msra.mxu0 0
        %2194 = vmatprep.subr.bf16.mxu0 0
        %2195 = vmatpush1.bf16.msra.mxu0 0
        %2196 = vmatprep.subr.bf16.mxu0 0
        %2197 = vmatpush1.bf16.msra.mxu0 0
        %2198 = vmatprep.subr.bf16.mxu0 0
        %2199 = vmatpush1.bf16.msra.mxu0 0
        %2200 = vmatprep.subr.bf16.mxu0 0
        %2201 = vmatpush1.bf16.msra.mxu0 0
        %2202 = vmatprep.subr.bf16.mxu0 0
        %2203 = vmatpush1.bf16.msra.mxu0 0
        %2204 = vmatprep.subr.bf16.mxu0 0
        %2205 = vmatpush1.bf16.msra.mxu0 0
        %2206 = vmatprep.subr.bf16.mxu0 0
        %2207 = vmatpush1.bf16.msra.mxu0 0
        %2208 = vmatprep.subr.bf16.mxu0 0
        %2209 = vmatpush1.bf16.msra.mxu0 0
        %2210 = vmatprep.mubr.bf16.mxu0 0
        %2211 = vmatmul.mubr.bf16.gmra.mrb[0].mxu0 %v2173
        %v2212 = vpop.f32.mrb[0].mxu0
        %v2213 = vadd.f32 0.0, %v2212
        %v2214 = vpop.f32.mrb[0].mxu0
        %v2215 = vpop.f32.mrb[0].mxu0
        %v2216 = vpop.f32.mrb[0].mxu0
        %2217 = vdwg.mxu0
        %v2219 = vsel %vm2020, %v2111, 0
        %v2222 = vsel %vm2128, %v2119, 0
        %2224 = vmatprep.subr.bf16.mxu0 0
        %2225 = vmatpush1.bf16.msra.mxu0 %v2222
        %2226 = vmatprep.subr.bf16.mxu0 0
        %2227 = vmatpush1.bf16.msra.mxu0 0
        %2228 = vmatprep.subr.bf16.mxu0 0
        %2229 = vmatpush1.bf16.msra.mxu0 0
        %2230 = vmatprep.subr.bf16.mxu0 0
        %2231 = vmatpush1.bf16.msra.mxu0 0
        %2232 = vmatprep.subr.bf16.mxu0 0
        %2233 = vmatpush1.bf16.msra.mxu0 0
        %2234 = vmatprep.subr.bf16.mxu0 0
        %2235 = vmatpush1.bf16.msra.mxu0 0
        %2236 = vmatprep.subr.bf16.mxu0 0
        %2237 = vmatpush1.bf16.msra.mxu0 0
        %2238 = vmatprep.subr.bf16.mxu0 0
        %2239 = vmatpush1.bf16.msra.mxu0 0
        %2240 = vmatprep.subr.bf16.mxu0 0
        %2241 = vmatpush1.bf16.msra.mxu0 0
        %2242 = vmatprep.subr.bf16.mxu0 0
        %2243 = vmatpush1.bf16.msra.mxu0 0
        %2244 = vmatprep.subr.bf16.mxu0 0
        %2245 = vmatpush1.bf16.msra.mxu0 0
        %2246 = vmatprep.subr.bf16.mxu0 0
        %2247 = vmatpush1.bf16.msra.mxu0 0
        %2248 = vmatprep.subr.bf16.mxu0 0
        %2249 = vmatpush1.bf16.msra.mxu0 0
        %2250 = vmatprep.subr.bf16.mxu0 0
        %2251 = vmatpush1.bf16.msra.mxu0 0
        %2252 = vmatprep.subr.bf16.mxu0 0
        %2253 = vmatpush1.bf16.msra.mxu0 0
        %2254 = vmatprep.subr.bf16.mxu0 0
        %2255 = vmatpush1.bf16.msra.mxu0 0
        %2256 = vmatprep.mubr.bf16.mxu0 0
        %2257 = vmatmul.mubr.bf16.gmra.mrb[0].mxu0 %v2219
        %v2258 = vpop.f32.mrb[0].mxu0
        %v2259 = vadd.f32 0.0, %v2258
        %v2260 = vpop.f32.mrb[0].mxu0
        %v2261 = vpop.f32.mrb[0].mxu0
        %v2262 = vpop.f32.mrb[0].mxu0
        %2263 = vdwg.mxu0
        %v2265 = vsel %vm2020, %v2112, 0
        %v2268 = vsel %vm2128, %v2120, 0
        %2270 = vmatprep.subr.bf16.mxu0 0
        %2271 = vmatpush1.bf16.msra.mxu0 %v2268
        %2272 = vmatprep.subr.bf16.mxu0 0
        %2273 = vmatpush1.bf16.msra.mxu0 0
        %2274 = vmatprep.subr.bf16.mxu0 0
        %2275 = vmatpush1.bf16.msra.mxu0 0
        %2276 = vmatprep.subr.bf16.mxu0 0
        %2277 = vmatpush1.bf16.msra.mxu0 0
        %2278 = vmatprep.subr.bf16.mxu0 0
        %2279 = vmatpush1.bf16.msra.mxu0 0
        %2280 = vmatprep.subr.bf16.mxu0 0
        %2281 = vmatpush1.bf16.msra.mxu0 0
        %2282 = vmatprep.subr.bf16.mxu0 0
        %2283 = vmatpush1.bf16.msra.mxu0 0
        %2284 = vmatprep.subr.bf16.mxu0 0
        %2285 = vmatpush1.bf16.msra.mxu0 0
        %2286 = vmatprep.subr.bf16.mxu0 0
        %2287 = vmatpush1.bf16.msra.mxu0 0
        %2288 = vmatprep.subr.bf16.mxu0 0
        %2289 = vmatpush1.bf16.msra.mxu0 0
        %2290 = vmatprep.subr.bf16.mxu0 0
        %2291 = vmatpush1.bf16.msra.mxu0 0
        %2292 = vmatprep.subr.bf16.mxu0 0
        %2293 = vmatpush1.bf16.msra.mxu0 0
        %2294 = vmatprep.subr.bf16.mxu0 0
        %2295 = vmatpush1.bf16.msra.mxu0 0
        %2296 = vmatprep.subr.bf16.mxu0 0
        %2297 = vmatpush1.bf16.msra.mxu0 0
        %2298 = vmatprep.subr.bf16.mxu0 0
        %2299 = vmatpush1.bf16.msra.mxu0 0
        %2300 = vmatprep.subr.bf16.mxu0 0
        %2301 = vmatpush1.bf16.msra.mxu0 0
        %2302 = vmatprep.mubr.bf16.mxu0 0
        %2303 = vmatmul.mubr.bf16.gmra.mrb[0].mxu0 %v2265
        %v2304 = vpop.f32.mrb[0].mxu0
        %v2305 = vadd.f32 0.0, %v2304
        %v2306 = vpop.f32.mrb[0].mxu0
        %v2307 = vpop.f32.mrb[0].mxu0
        %v2308 = vpop.f32.mrb[0].mxu0
        %2309 = vdwg.mxu0
        %v2311 = vsel %vm2020, %v2113, 0
        %v2314 = vsel %vm2128, %v2121, 0
        %2316 = vmatprep.subr.bf16.mxu0 0
        %2317 = vmatpush1.bf16.msra.mxu0 %v2314
        %2318 = vmatprep.subr.bf16.mxu0 0
        %2319 = vmatpush1.bf16.msra.mxu0 0
        %2320 = vmatprep.subr.bf16.mxu0 0
        %2321 = vmatpush1.bf16.msra.mxu0 0
        %2322 = vmatprep.subr.bf16.mxu0 0
        %2323 = vmatpush1.bf16.msra.mxu0 0
        %2324 = vmatprep.subr.bf16.mxu0 0
        %2325 = vmatpush1.bf16.msra.mxu0 0
        %2326 = vmatprep.subr.bf16.mxu0 0
        %2327 = vmatpush1.bf16.msra.mxu0 0
        %2328 = vmatprep.subr.bf16.mxu0 0
        %2329 = vmatpush1.bf16.msra.mxu0 0
        %2330 = vmatprep.subr.bf16.mxu0 0
        %2331 = vmatpush1.bf16.msra.mxu0 0
        %2332 = vmatprep.subr.bf16.mxu0 0
        %2333 = vmatpush1.bf16.msra.mxu0 0
        %2334 = vmatprep.subr.bf16.mxu0 0
        %2335 = vmatpush1.bf16.msra.mxu0 0
        %2336 = vmatprep.subr.bf16.mxu0 0
        %2337 = vmatpush1.bf16.msra.mxu0 0
        %2338 = vmatprep.subr.bf16.mxu0 0
        %2339 = vmatpush1.bf16.msra.mxu0 0
        %2340 = vmatprep.subr.bf16.mxu0 0
        %2341 = vmatpush1.bf16.msra.mxu0 0
        %2342 = vmatprep.subr.bf16.mxu0 0
        %2343 = vmatpush1.bf16.msra.mxu0 0
        %2344 = vmatprep.subr.bf16.mxu0 0
        %2345 = vmatpush1.bf16.msra.mxu0 0
        %2346 = vmatprep.subr.bf16.mxu0 0
        %2347 = vmatpush1.bf16.msra.mxu0 0
        %2348 = vmatprep.mubr.bf16.mxu0 0
        %2349 = vmatmul.mubr.bf16.gmra.mrb[0].mxu0 %v2311
        %v2350 = vpop.f32.mrb[0].mxu0
        %v2351 = vadd.f32 0.0, %v2350
        %v2352 = vpop.f32.mrb[0].mxu0
        %v2353 = vpop.f32.mrb[0].mxu0
        %v2354 = vpop.f32.mrb[0].mxu0
        %2355 = vdwg.mxu0
        %v2357 = vsel %vm2020, %v2114, 0
        %v2360 = vsel %vm2128, %v2122, 0
        %2362 = vmatprep.subr.bf16.mxu0 0
        %2363 = vmatpush1.bf16.msra.mxu0 %v2360
        %2364 = vmatprep.subr.bf16.mxu0 0
        %2365 = vmatpush1.bf16.msra.mxu0 0
        %2366 = vmatprep.subr.bf16.mxu0 0
        %2367 = vmatpush1.bf16.msra.mxu0 0
        %2368 = vmatprep.subr.bf16.mxu0 0
        %2369 = vmatpush1.bf16.msra.mxu0 0
        %2370 = vmatprep.subr.bf16.mxu0 0
        %2371 = vmatpush1.bf16.msra.mxu0 0
        %2372 = vmatprep.subr.bf16.mxu0 0
        %2373 = vmatpush1.bf16.msra.mxu0 0
        %2374 = vmatprep.subr.bf16.mxu0 0
        %2375 = vmatpush1.bf16.msra.mxu0 0
        %2376 = vmatprep.subr.bf16.mxu0 0
        %2377 = vmatpush1.bf16.msra.mxu0 0
        %2378 = vmatprep.subr.bf16.mxu0 0
        %2379 = vmatpush1.bf16.msra.mxu0 0
        %2380 = vmatprep.subr.bf16.mxu0 0
        %2381 = vmatpush1.bf16.msra.mxu0 0
        %2382 = vmatprep.subr.bf16.mxu0 0
        %2383 = vmatpush1.bf16.msra.mxu0 0
        %2384 = vmatprep.subr.bf16.mxu0 0
        %2385 = vmatpush1.bf16.msra.mxu0 0
        %2386 = vmatprep.subr.bf16.mxu0 0
        %2387 = vmatpush1.bf16.msra.mxu0 0
        %2388 = vmatprep.subr.bf16.mxu0 0
        %2389 = vmatpush1.bf16.msra.mxu0 0
        %2390 = vmatprep.subr.bf16.mxu0 0
        %2391 = vmatpush1.bf16.msra.mxu0 0
        %2392 = vmatprep.subr.bf16.mxu0 0
        %2393 = vmatpush1.bf16.msra.mxu0 0
        %2394 = vmatprep.mubr.bf16.mxu0 0
        %2395 = vmatmul.mubr.bf16.gmra.mrb[0].mxu0 %v2357
        %v2396 = vpop.f32.mrb[0].mxu0
        %v2397 = vadd.f32 0.0, %v2396
        %v2398 = vpop.f32.mrb[0].mxu0
        %v2399 = vpop.f32.mrb[0].mxu0
        %v2400 = vpop.f32.mrb[0].mxu0
        %2401 = vdwg.mxu0
        %v2403 = vsel %vm2020, %v2115, 0
        %v2406 = vsel %vm2128, %v2123, 0
        %2408 = vmatprep.subr.bf16.mxu0 0
        %2409 = vmatpush1.bf16.msra.mxu0 %v2406
        %2410 = vmatprep.subr.bf16.mxu0 0
        %2411 = vmatpush1.bf16.msra.mxu0 0
        %2412 = vmatprep.subr.bf16.mxu0 0
        %2413 = vmatpush1.bf16.msra.mxu0 0
        %2414 = vmatprep.subr.bf16.mxu0 0
        %2415 = vmatpush1.bf16.msra.mxu0 0
        %2416 = vmatprep.subr.bf16.mxu0 0
        %2417 = vmatpush1.bf16.msra.mxu0 0
        %2418 = vmatprep.subr.bf16.mxu0 0
        %2419 = vmatpush1.bf16.msra.mxu0 0
        %2420 = vmatprep.subr.bf16.mxu0 0
        %2421 = vmatpush1.bf16.msra.mxu0 0
        %2422 = vmatprep.subr.bf16.mxu0 0
        %2423 = vmatpush1.bf16.msra.mxu0 0
        %2424 = vmatprep.subr.bf16.mxu0 0
        %2425 = vmatpush1.bf16.msra.mxu0 0
        %2426 = vmatprep.subr.bf16.mxu0 0
        %2427 = vmatpush1.bf16.msra.mxu0 0
        %2428 = vmatprep.subr.bf16.mxu0 0
        %2429 = vmatpush1.bf16.msra.mxu0 0
        %2430 = vmatprep.subr.bf16.mxu0 0
        %2431 = vmatpush1.bf16.msra.mxu0 0
        %2432 = vmatprep.subr.bf16.mxu0 0
        %2433 = vmatpush1.bf16.msra.mxu0 0
        %2434 = vmatprep.subr.bf16.mxu0 0
        %2435 = vmatpush1.bf16.msra.mxu0 0
        %2436 = vmatprep.subr.bf16.mxu0 0
        %2437 = vmatpush1.bf16.msra.mxu0 0
        %2438 = vmatprep.subr.bf16.mxu0 0
        %2439 = vmatpush1.bf16.msra.mxu0 0
        %2440 = vmatprep.mubr.bf16.mxu0 0
        %2441 = vmatmul.mubr.bf16.gmra.mrb[0].mxu0 %v2403
        %v2442 = vpop.f32.mrb[0].mxu0
        %v2443 = vadd.f32 0.0, %v2442
        %v2444 = vpop.f32.mrb[0].mxu0
        %v2445 = vpop.f32.mrb[0].mxu0
        %v2446 = vpop.f32.mrb[0].mxu0
        %2447 = vdwg.mxu0
        %v2449 = vsel %vm2020, %v2116, 0
        %v2452 = vsel %vm2128, %v2124, 0
        %2454 = vmatprep.subr.bf16.mxu0 0
        %2455 = vmatpush1.bf16.msra.mxu0 %v2452
        %2456 = vmatprep.subr.bf16.mxu0 0
        %2457 = vmatpush1.bf16.msra.mxu0 0
        %2458 = vmatprep.subr.bf16.mxu0 0
        %2459 = vmatpush1.bf16.msra.mxu0 0
        %2460 = vmatprep.subr.bf16.mxu0 0
        %2461 = vmatpush1.bf16.msra.mxu0 0
        %2462 = vmatprep.subr.bf16.mxu0 0
        %2463 = vmatpush1.bf16.msra.mxu0 0
        %2464 = vmatprep.subr.bf16.mxu0 0
        %2465 = vmatpush1.bf16.msra.mxu0 0
        %2466 = vmatprep.subr.bf16.mxu0 0
        %2467 = vmatpush1.bf16.msra.mxu0 0
        %2468 = vmatprep.subr.bf16.mxu0 0
        %2469 = vmatpush1.bf16.msra.mxu0 0
        %2470 = vmatprep.subr.bf16.mxu0 0
        %2471 = vmatpush1.bf16.msra.mxu0 0
        %2472 = vmatprep.subr.bf16.mxu0 0
        %2473 = vmatpush1.bf16.msra.mxu0 0
        %2474 = vmatprep.subr.bf16.mxu0 0
        %2475 = vmatpush1.bf16.msra.mxu0 0
        %2476 = vmatprep.subr.bf16.mxu0 0
        %2477 = vmatpush1.bf16.msra.mxu0 0
        %2478 = vmatprep.subr.bf16.mxu0 0
        %2479 = vmatpush1.bf16.msra.mxu0 0
        %2480 = vmatprep.subr.bf16.mxu0 0
        %2481 = vmatpush1.bf16.msra.mxu0 0
        %2482 = vmatprep.subr.bf16.mxu0 0
        %2483 = vmatpush1.bf16.msra.mxu0 0
        %2484 = vmatprep.subr.bf16.mxu0 0
        %2485 = vmatpush1.bf16.msra.mxu0 0
        %2486 = vmatprep.mubr.bf16.mxu0 0
        %2487 = vmatmul.mubr.bf16.gmra.mrb[0].mxu0 %v2449
        %v2488 = vpop.f32.mrb[0].mxu0
        %v2489 = vadd.f32 0.0, %v2488
        %v2490 = vpop.f32.mrb[0].mxu0
        %v2491 = vpop.f32.mrb[0].mxu0
        %v2492 = vpop.f32.mrb[0].mxu0
        %2493 = vdwg.mxu0
        %v2494 = vpack.c.bf16 %v2167, %v2167
        %v2495 = vpack.c.bf16 %v2213, %v2213
        %v2496 = vpack.c.bf16 %v2259, %v2259
        %v2497 = vpack.c.bf16 %v2305, %v2305
        %v2498 = vpack.c.bf16 %v2351, %v2351
        %v2499 = vpack.c.bf16 %v2397, %v2397
        %v2500 = vpack.c.bf16 %v2443, %v2443
        %v2501 = vpack.c.bf16 %v2489, %v2489
        %v2502 = vld [vmem:[%s8] sm:$0xf]
        %v2503 = vld [vmem:[%s8 + $0x4] sm:$0xf]
        %v2504 = vld [vmem:[%s8 + $0x8] sm:$0xf]
        %v2505 = vld [vmem:[%s8 + $0xc] sm:$0xf]
        %v2506 = vld [vmem:[%s8 + $0x10] sm:$0xf]
        %v2507 = vld [vmem:[%s8 + $0x14] sm:$0xf]
        %v2508 = vld [vmem:[%s8 + $0x18] sm:$0xf]
        %v2509 = vld [vmem:[%s8 + $0x1c] sm:$0xf]
        %v2510 = vld [vmem:[%s8 + $0x20] sm:$0xf]
        %v2511 = vld [vmem:[%s8 + $0x24] sm:$0xf]
        %v2512 = vld [vmem:[%s8 + $0x28] sm:$0xf]
        %v2513 = vld [vmem:[%s8 + $0x2c] sm:$0xf]
        %v2514 = vld [vmem:[%s8 + $0x30] sm:$0xf]
        %v2515 = vld [vmem:[%s8 + $0x34] sm:$0xf]
        %v2516 = vld [vmem:[%s8 + $0x38] sm:$0xf]
        %v2517 = vld [vmem:[%s8 + $0x3c] sm:$0xf]
        %v2518 = vld [vmem:[%s8 + $0x40] sm:$0xf]
        %v2519 = vld [vmem:[%s8 + $0x44] sm:$0xf]
        %v2520 = vld [vmem:[%s8 + $0x48] sm:$0xf]
        %v2521 = vld [vmem:[%s8 + $0x4c] sm:$0xf]
        %v2522 = vld [vmem:[%s8 + $0x50] sm:$0xf]
        %v2523 = vld [vmem:[%s8 + $0x54] sm:$0xf]
        %v2524 = vld [vmem:[%s8 + $0x58] sm:$0xf]
        %v2525 = vld [vmem:[%s8 + $0x5c] sm:$0xf]
        %v2526 = vld [vmem:[%s8 + $0x60] sm:$0xf]
        %v2527 = vld [vmem:[%s8 + $0x64] sm:$0xf]
        %v2528 = vld [vmem:[%s8 + $0x68] sm:$0xf]
        %v2529 = vld [vmem:[%s8 + $0x6c] sm:$0xf]
        %v2530 = vld [vmem:[%s8 + $0x70] sm:$0xf]
        %v2531 = vld [vmem:[%s8 + $0x74] sm:$0xf]
        %v2532 = vld [vmem:[%s8 + $0x78] sm:$0xf]
        %v2533 = vld [vmem:[%s8 + $0x7c] sm:$0xf]
        %v2538 = vunpack.c.l.b16 %v2502
        %v2539 = vunpack.c.l.b16 %v2503
        %v2540 = vunpack.c.l.b16 %v2504
        %v2541 = vunpack.c.l.b16 %v2505
        %v2542 = vpack.c.b16 %v2539, %v2538
        %v2543 = vpack.c.b16 %v2541, %v2540
        %v2545 = vsel %vm1643, %v2494, 0
        %v2548 = vsel %vm1643, %v2542, 0
        %v2551 = vsel %vm1643, %v2543, 0
        %2553 = vmatprep.subr.bf16.mxu0 0
        %2554 = vmatpush1.bf16.xpose.msra.mxu0 %v2548
        %2555 = vmatprep.subr.bf16.mxu0 0
        %2556 = vmatpush1.bf16.xpose.msra.mxu0 %v2551
        %2557 = vmatprep.subr.bf16.mxu0 0
        %2558 = vmatpush1.bf16.xpose.msra.mxu0 0
        %2559 = vmatprep.subr.bf16.mxu0 0
        %2560 = vmatpush1.bf16.xpose.msra.mxu0 0
        %2561 = vmatprep.subr.bf16.mxu0 0
        %2562 = vmatpush1.bf16.xpose.msra.mxu0 0
        %2563 = vmatprep.subr.bf16.mxu0 0
        %2564 = vmatpush1.bf16.xpose.msra.mxu0 0
        %2565 = vmatprep.subr.bf16.mxu0 0
        %2566 = vmatpush1.bf16.xpose.msra.mxu0 0
        %2567 = vmatprep.subr.bf16.mxu0 0
        %2568 = vmatpush1.bf16.xpose.msra.mxu0 0
        %2569 = vmatprep.subr.bf16.mxu0 0
        %2570 = vmatpush1.bf16.xpose.msra.mxu0 0
        %2571 = vmatprep.subr.bf16.mxu0 0
        %2572 = vmatpush1.bf16.xpose.msra.mxu0 0
        %2573 = vmatprep.subr.bf16.mxu0 0
        %2574 = vmatpush1.bf16.xpose.msra.mxu0 0
        %2575 = vmatprep.subr.bf16.mxu0 0
        %2576 = vmatpush1.bf16.xpose.msra.mxu0 0
        %2577 = vmatprep.subr.bf16.mxu0 0
        %2578 = vmatpush1.bf16.xpose.msra.mxu0 0
        %2579 = vmatprep.subr.bf16.mxu0 0
        %2580 = vmatpush1.bf16.xpose.msra.mxu0 0
        %2581 = vmatprep.subr.bf16.mxu0 0
        %2582 = vmatpush1.bf16.xpose.msra.mxu0 0
        %2583 = vmatprep.subr.bf16.mxu0 0
        %2584 = vmatpush1.bf16.xpose.msra.mxu0 0
        %2585 = vmatprep.mubr.bf16.mxu0 0
        %2586 = vmatmul.mubr.bf16.gmra.mrb[0].mxu0 %v2545
        %v2587 = vpop.f32.mrb[0].mxu0
        %v2588 = vadd.f32 0.0, %v2587
        %v2589 = vpop.f32.mrb[0].mxu0
        %v2590 = vpop.f32.mrb[0].mxu0
        %v2591 = vpop.f32.mrb[0].mxu0
        %2592 = vdwg.mxu0
        %v2597 = vunpack.c.l.b16 %v2506
        %v2598 = vunpack.c.l.b16 %v2507
        %v2599 = vunpack.c.l.b16 %v2508
        %v2600 = vunpack.c.l.b16 %v2509
        %v2601 = vpack.c.b16 %v2598, %v2597
        %v2602 = vpack.c.b16 %v2600, %v2599
        %v2604 = vsel %vm1643, %v2495, 0
        %v2607 = vsel %vm1643, %v2601, 0
        %v2610 = vsel %vm1643, %v2602, 0
        %2612 = vmatprep.subr.bf16.mxu0 0
        %2613 = vmatpush1.bf16.xpose.msra.mxu0 %v2607
        %2614 = vmatprep.subr.bf16.mxu0 0
        %2615 = vmatpush1.bf16.xpose.msra.mxu0 %v2610
        %2616 = vmatprep.subr.bf16.mxu0 0
        %2617 = vmatpush1.bf16.xpose.msra.mxu0 0
        %2618 = vmatprep.subr.bf16.mxu0 0
        %2619 = vmatpush1.bf16.xpose.msra.mxu0 0
        %2620 = vmatprep.subr.bf16.mxu0 0
        %2621 = vmatpush1.bf16.xpose.msra.mxu0 0
        %2622 = vmatprep.subr.bf16.mxu0 0
        %2623 = vmatpush1.bf16.xpose.msra.mxu0 0
        %2624 = vmatprep.subr.bf16.mxu0 0
        %2625 = vmatpush1.bf16.xpose.msra.mxu0 0
        %2626 = vmatprep.subr.bf16.mxu0 0
        %2627 = vmatpush1.bf16.xpose.msra.mxu0 0
        %2628 = vmatprep.subr.bf16.mxu0 0
        %2629 = vmatpush1.bf16.xpose.msra.mxu0 0
        %2630 = vmatprep.subr.bf16.mxu0 0
        %2631 = vmatpush1.bf16.xpose.msra.mxu0 0
        %2632 = vmatprep.subr.bf16.mxu0 0
        %2633 = vmatpush1.bf16.xpose.msra.mxu0 0
        %2634 = vmatprep.subr.bf16.mxu0 0
        %2635 = vmatpush1.bf16.xpose.msra.mxu0 0
        %2636 = vmatprep.subr.bf16.mxu0 0
        %2637 = vmatpush1.bf16.xpose.msra.mxu0 0
        %2638 = vmatprep.subr.bf16.mxu0 0
        %2639 = vmatpush1.bf16.xpose.msra.mxu0 0
        %2640 = vmatprep.subr.bf16.mxu0 0
        %2641 = vmatpush1.bf16.xpose.msra.mxu0 0
        %2642 = vmatprep.subr.bf16.mxu0 0
        %2643 = vmatpush1.bf16.xpose.msra.mxu0 0
        %2644 = vmatprep.mubr.bf16.mxu0 0
        %2645 = vmatmul.mubr.bf16.gmra.mrb[0].mxu0 %v2604
        %v2646 = vpop.f32.mrb[0].mxu0
        %v2647 = vadd.f32 0.0, %v2646
        %v2648 = vpop.f32.mrb[0].mxu0
        %v2649 = vpop.f32.mrb[0].mxu0
        %v2650 = vpop.f32.mrb[0].mxu0
        %2651 = vdwg.mxu0
        %v2656 = vunpack.c.l.b16 %v2510
        %v2657 = vunpack.c.l.b16 %v2511
        %v2658 = vunpack.c.l.b16 %v2512
        %v2659 = vunpack.c.l.b16 %v2513
        %v2660 = vpack.c.b16 %v2657, %v2656
        %v2661 = vpack.c.b16 %v2659, %v2658
        %v2663 = vsel %vm1643, %v2496, 0
        %v2666 = vsel %vm1643, %v2660, 0
        %v2669 = vsel %vm1643, %v2661, 0
        %2671 = vmatprep.subr.bf16.mxu0 0
        %2672 = vmatpush1.bf16.xpose.msra.mxu0 %v2666
        %2673 = vmatprep.subr.bf16.mxu0 0
        %2674 = vmatpush1.bf16.xpose.msra.mxu0 %v2669
        %2675 = vmatprep.subr.bf16.mxu0 0
        %2676 = vmatpush1.bf16.xpose.msra.mxu0 0
        %2677 = vmatprep.subr.bf16.mxu0 0
        %2678 = vmatpush1.bf16.xpose.msra.mxu0 0
        %2679 = vmatprep.subr.bf16.mxu0 0
        %2680 = vmatpush1.bf16.xpose.msra.mxu0 0
        %2681 = vmatprep.subr.bf16.mxu0 0
        %2682 = vmatpush1.bf16.xpose.msra.mxu0 0
        %2683 = vmatprep.subr.bf16.mxu0 0
        %2684 = vmatpush1.bf16.xpose.msra.mxu0 0
        %2685 = vmatprep.subr.bf16.mxu0 0
        %2686 = vmatpush1.bf16.xpose.msra.mxu0 0
        %2687 = vmatprep.subr.bf16.mxu0 0
        %2688 = vmatpush1.bf16.xpose.msra.mxu0 0
        %2689 = vmatprep.subr.bf16.mxu0 0
        %2690 = vmatpush1.bf16.xpose.msra.mxu0 0
        %2691 = vmatprep.subr.bf16.mxu0 0
        %2692 = vmatpush1.bf16.xpose.msra.mxu0 0
        %2693 = vmatprep.subr.bf16.mxu0 0
        %2694 = vmatpush1.bf16.xpose.msra.mxu0 0
        %2695 = vmatprep.subr.bf16.mxu0 0
        %2696 = vmatpush1.bf16.xpose.msra.mxu0 0
        %2697 = vmatprep.subr.bf16.mxu0 0
        %2698 = vmatpush1.bf16.xpose.msra.mxu0 0
        %2699 = vmatprep.subr.bf16.mxu0 0
        %2700 = vmatpush1.bf16.xpose.msra.mxu0 0
        %2701 = vmatprep.subr.bf16.mxu0 0
        %2702 = vmatpush1.bf16.xpose.msra.mxu0 0
        %2703 = vmatprep.mubr.bf16.mxu0 0
        %2704 = vmatmul.mubr.bf16.gmra.mrb[0].mxu0 %v2663
        %v2705 = vpop.f32.mrb[0].mxu0
        %v2706 = vadd.f32 0.0, %v2705
        %v2707 = vpop.f32.mrb[0].mxu0
        %v2708 = vpop.f32.mrb[0].mxu0
        %v2709 = vpop.f32.mrb[0].mxu0
        %2710 = vdwg.mxu0
        %v2715 = vunpack.c.l.b16 %v2514
        %v2716 = vunpack.c.l.b16 %v2515
        %v2717 = vunpack.c.l.b16 %v2516
        %v2718 = vunpack.c.l.b16 %v2517
        %v2719 = vpack.c.b16 %v2716, %v2715
        %v2720 = vpack.c.b16 %v2718, %v2717
        %v2722 = vsel %vm1643, %v2497, 0
        %v2725 = vsel %vm1643, %v2719, 0
        %v2728 = vsel %vm1643, %v2720, 0
        %2730 = vmatprep.subr.bf16.mxu0 0
        %2731 = vmatpush1.bf16.xpose.msra.mxu0 %v2725
        %2732 = vmatprep.subr.bf16.mxu0 0
        %2733 = vmatpush1.bf16.xpose.msra.mxu0 %v2728
        %2734 = vmatprep.subr.bf16.mxu0 0
        %2735 = vmatpush1.bf16.xpose.msra.mxu0 0
        %2736 = vmatprep.subr.bf16.mxu0 0
        %2737 = vmatpush1.bf16.xpose.msra.mxu0 0
        %2738 = vmatprep.subr.bf16.mxu0 0
        %2739 = vmatpush1.bf16.xpose.msra.mxu0 0
        %2740 = vmatprep.subr.bf16.mxu0 0
        %2741 = vmatpush1.bf16.xpose.msra.mxu0 0
        %2742 = vmatprep.subr.bf16.mxu0 0
        %2743 = vmatpush1.bf16.xpose.msra.mxu0 0
        %2744 = vmatprep.subr.bf16.mxu0 0
        %2745 = vmatpush1.bf16.xpose.msra.mxu0 0
        %2746 = vmatprep.subr.bf16.mxu0 0
        %2747 = vmatpush1.bf16.xpose.msra.mxu0 0
        %2748 = vmatprep.subr.bf16.mxu0 0
        %2749 = vmatpush1.bf16.xpose.msra.mxu0 0
        %2750 = vmatprep.subr.bf16.mxu0 0
        %2751 = vmatpush1.bf16.xpose.msra.mxu0 0
        %2752 = vmatprep.subr.bf16.mxu0 0
        %2753 = vmatpush1.bf16.xpose.msra.mxu0 0
        %2754 = vmatprep.subr.bf16.mxu0 0
        %2755 = vmatpush1.bf16.xpose.msra.mxu0 0
        %2756 = vmatprep.subr.bf16.mxu0 0
        %2757 = vmatpush1.bf16.xpose.msra.mxu0 0
        %2758 = vmatprep.subr.bf16.mxu0 0
        %2759 = vmatpush1.bf16.xpose.msra.mxu0 0
        %2760 = vmatprep.subr.bf16.mxu0 0
        %2761 = vmatpush1.bf16.xpose.msra.mxu0 0
        %2762 = vmatprep.mubr.bf16.mxu0 0
        %2763 = vmatmul.mubr.bf16.gmra.mrb[0].mxu0 %v2722
        %v2764 = vpop.f32.mrb[0].mxu0
        %v2765 = vadd.f32 0.0, %v2764
        %v2766 = vpop.f32.mrb[0].mxu0
        %v2767 = vpop.f32.mrb[0].mxu0
        %v2768 = vpop.f32.mrb[0].mxu0
        %2769 = vdwg.mxu0
        %v2774 = vunpack.c.l.b16 %v2518
        %v2775 = vunpack.c.l.b16 %v2519
        %v2776 = vunpack.c.l.b16 %v2520
        %v2777 = vunpack.c.l.b16 %v2521
        %v2778 = vpack.c.b16 %v2775, %v2774
        %v2779 = vpack.c.b16 %v2777, %v2776
        %v2781 = vsel %vm1643, %v2498, 0
        %v2784 = vsel %vm1643, %v2778, 0
        %v2787 = vsel %vm1643, %v2779, 0
        %2789 = vmatprep.subr.bf16.mxu0 0
        %2790 = vmatpush1.bf16.xpose.msra.mxu0 %v2784
        %2791 = vmatprep.subr.bf16.mxu0 0
        %2792 = vmatpush1.bf16.xpose.msra.mxu0 %v2787
        %2793 = vmatprep.subr.bf16.mxu0 0
        %2794 = vmatpush1.bf16.xpose.msra.mxu0 0
        %2795 = vmatprep.subr.bf16.mxu0 0
        %2796 = vmatpush1.bf16.xpose.msra.mxu0 0
        %2797 = vmatprep.subr.bf16.mxu0 0
        %2798 = vmatpush1.bf16.xpose.msra.mxu0 0
        %2799 = vmatprep.subr.bf16.mxu0 0
        %2800 = vmatpush1.bf16.xpose.msra.mxu0 0
        %2801 = vmatprep.subr.bf16.mxu0 0
        %2802 = vmatpush1.bf16.xpose.msra.mxu0 0
        %2803 = vmatprep.subr.bf16.mxu0 0
        %2804 = vmatpush1.bf16.xpose.msra.mxu0 0
        %2805 = vmatprep.subr.bf16.mxu0 0
        %2806 = vmatpush1.bf16.xpose.msra.mxu0 0
        %2807 = vmatprep.subr.bf16.mxu0 0
        %2808 = vmatpush1.bf16.xpose.msra.mxu0 0
        %2809 = vmatprep.subr.bf16.mxu0 0
        %2810 = vmatpush1.bf16.xpose.msra.mxu0 0
        %2811 = vmatprep.subr.bf16.mxu0 0
        %2812 = vmatpush1.bf16.xpose.msra.mxu0 0
        %2813 = vmatprep.subr.bf16.mxu0 0
        %2814 = vmatpush1.bf16.xpose.msra.mxu0 0
        %2815 = vmatprep.subr.bf16.mxu0 0
        %2816 = vmatpush1.bf16.xpose.msra.mxu0 0
        %2817 = vmatprep.subr.bf16.mxu0 0
        %2818 = vmatpush1.bf16.xpose.msra.mxu0 0
        %2819 = vmatprep.subr.bf16.mxu0 0
        %2820 = vmatpush1.bf16.xpose.msra.mxu0 0
        %2821 = vmatprep.mubr.bf16.mxu0 0
        %2822 = vmatmul.mubr.bf16.gmra.mrb[0].mxu0 %v2781
        %v2823 = vpop.f32.mrb[0].mxu0
        %v2824 = vadd.f32 0.0, %v2823
        %v2825 = vpop.f32.mrb[0].mxu0
        %v2826 = vpop.f32.mrb[0].mxu0
        %v2827 = vpop.f32.mrb[0].mxu0
        %2828 = vdwg.mxu0
        %v2833 = vunpack.c.l.b16 %v2522
        %v2834 = vunpack.c.l.b16 %v2523
        %v2835 = vunpack.c.l.b16 %v2524
        %v2836 = vunpack.c.l.b16 %v2525
        %v2837 = vpack.c.b16 %v2834, %v2833
        %v2838 = vpack.c.b16 %v2836, %v2835
        %v2840 = vsel %vm1643, %v2499, 0
        %v2843 = vsel %vm1643, %v2837, 0
        %v2846 = vsel %vm1643, %v2838, 0
        %2848 = vmatprep.subr.bf16.mxu0 0
        %2849 = vmatpush1.bf16.xpose.msra.mxu0 %v2843
        %2850 = vmatprep.subr.bf16.mxu0 0
        %2851 = vmatpush1.bf16.xpose.msra.mxu0 %v2846
        %2852 = vmatprep.subr.bf16.mxu0 0
        %2853 = vmatpush1.bf16.xpose.msra.mxu0 0
        %2854 = vmatprep.subr.bf16.mxu0 0
        %2855 = vmatpush1.bf16.xpose.msra.mxu0 0
        %2856 = vmatprep.subr.bf16.mxu0 0
        %2857 = vmatpush1.bf16.xpose.msra.mxu0 0
        %2858 = vmatprep.subr.bf16.mxu0 0
        %2859 = vmatpush1.bf16.xpose.msra.mxu0 0
        %2860 = vmatprep.subr.bf16.mxu0 0
        %2861 = vmatpush1.bf16.xpose.msra.mxu0 0
        %2862 = vmatprep.subr.bf16.mxu0 0
        %2863 = vmatpush1.bf16.xpose.msra.mxu0 0
        %2864 = vmatprep.subr.bf16.mxu0 0
        %2865 = vmatpush1.bf16.xpose.msra.mxu0 0
        %2866 = vmatprep.subr.bf16.mxu0 0
        %2867 = vmatpush1.bf16.xpose.msra.mxu0 0
        %2868 = vmatprep.subr.bf16.mxu0 0
        %2869 = vmatpush1.bf16.xpose.msra.mxu0 0
        %2870 = vmatprep.subr.bf16.mxu0 0
        %2871 = vmatpush1.bf16.xpose.msra.mxu0 0
        %2872 = vmatprep.subr.bf16.mxu0 0
        %2873 = vmatpush1.bf16.xpose.msra.mxu0 0
        %2874 = vmatprep.subr.bf16.mxu0 0
        %2875 = vmatpush1.bf16.xpose.msra.mxu0 0
        %2876 = vmatprep.subr.bf16.mxu0 0
        %2877 = vmatpush1.bf16.xpose.msra.mxu0 0
        %2878 = vmatprep.subr.bf16.mxu0 0
        %2879 = vmatpush1.bf16.xpose.msra.mxu0 0
        %2880 = vmatprep.mubr.bf16.mxu0 0
        %2881 = vmatmul.mubr.bf16.gmra.mrb[0].mxu0 %v2840
        %v2882 = vpop.f32.mrb[0].mxu0
        %v2883 = vadd.f32 0.0, %v2882
        %v2884 = vpop.f32.mrb[0].mxu0
        %v2885 = vpop.f32.mrb[0].mxu0
        %v2886 = vpop.f32.mrb[0].mxu0
        %2887 = vdwg.mxu0
        %v2892 = vunpack.c.l.b16 %v2526
        %v2893 = vunpack.c.l.b16 %v2527
        %v2894 = vunpack.c.l.b16 %v2528
        %v2895 = vunpack.c.l.b16 %v2529
        %v2896 = vpack.c.b16 %v2893, %v2892
        %v2897 = vpack.c.b16 %v2895, %v2894
        %v2899 = vsel %vm1643, %v2500, 0
        %v2902 = vsel %vm1643, %v2896, 0
        %v2905 = vsel %vm1643, %v2897, 0
        %2907 = vmatprep.subr.bf16.mxu0 0
        %2908 = vmatpush1.bf16.xpose.msra.mxu0 %v2902
        %2909 = vmatprep.subr.bf16.mxu0 0
        %2910 = vmatpush1.bf16.xpose.msra.mxu0 %v2905
        %2911 = vmatprep.subr.bf16.mxu0 0
        %2912 = vmatpush1.bf16.xpose.msra.mxu0 0
        %2913 = vmatprep.subr.bf16.mxu0 0
        %2914 = vmatpush1.bf16.xpose.msra.mxu0 0
        %2915 = vmatprep.subr.bf16.mxu0 0
        %2916 = vmatpush1.bf16.xpose.msra.mxu0 0
        %2917 = vmatprep.subr.bf16.mxu0 0
        %2918 = vmatpush1.bf16.xpose.msra.mxu0 0
        %2919 = vmatprep.subr.bf16.mxu0 0
        %2920 = vmatpush1.bf16.xpose.msra.mxu0 0
        %2921 = vmatprep.subr.bf16.mxu0 0
        %2922 = vmatpush1.bf16.xpose.msra.mxu0 0
        %2923 = vmatprep.subr.bf16.mxu0 0
        %2924 = vmatpush1.bf16.xpose.msra.mxu0 0
        %2925 = vmatprep.subr.bf16.mxu0 0
        %2926 = vmatpush1.bf16.xpose.msra.mxu0 0
        %2927 = vmatprep.subr.bf16.mxu0 0
        %2928 = vmatpush1.bf16.xpose.msra.mxu0 0
        %2929 = vmatprep.subr.bf16.mxu0 0
        %2930 = vmatpush1.bf16.xpose.msra.mxu0 0
        %2931 = vmatprep.subr.bf16.mxu0 0
        %2932 = vmatpush1.bf16.xpose.msra.mxu0 0
        %2933 = vmatprep.subr.bf16.mxu0 0
        %2934 = vmatpush1.bf16.xpose.msra.mxu0 0
        %2935 = vmatprep.subr.bf16.mxu0 0
        %2936 = vmatpush1.bf16.xpose.msra.mxu0 0
        %2937 = vmatprep.subr.bf16.mxu0 0
        %2938 = vmatpush1.bf16.xpose.msra.mxu0 0
        %2939 = vmatprep.mubr.bf16.mxu0 0
        %2940 = vmatmul.mubr.bf16.gmra.mrb[0].mxu0 %v2899
        %v2941 = vpop.f32.mrb[0].mxu0
        %v2942 = vadd.f32 0.0, %v2941
        %v2943 = vpop.f32.mrb[0].mxu0
        %v2944 = vpop.f32.mrb[0].mxu0
        %v2945 = vpop.f32.mrb[0].mxu0
        %2946 = vdwg.mxu0
        %v2951 = vunpack.c.l.b16 %v2530
        %v2952 = vunpack.c.l.b16 %v2531
        %v2953 = vunpack.c.l.b16 %v2532
        %v2954 = vunpack.c.l.b16 %v2533
        %v2955 = vpack.c.b16 %v2952, %v2951
        %v2956 = vpack.c.b16 %v2954, %v2953
        %v2958 = vsel %vm1643, %v2501, 0
        %v2961 = vsel %vm1643, %v2955, 0
        %v2964 = vsel %vm1643, %v2956, 0
        %2966 = vmatprep.subr.bf16.mxu0 0
        %2967 = vmatpush1.bf16.xpose.msra.mxu0 %v2961
        %2968 = vmatprep.subr.bf16.mxu0 0
        %2969 = vmatpush1.bf16.xpose.msra.mxu0 %v2964
        %2970 = vmatprep.subr.bf16.mxu0 0
        %2971 = vmatpush1.bf16.xpose.msra.mxu0 0
        %2972 = vmatprep.subr.bf16.mxu0 0
        %2973 = vmatpush1.bf16.xpose.msra.mxu0 0
        %2974 = vmatprep.subr.bf16.mxu0 0
        %2975 = vmatpush1.bf16.xpose.msra.mxu0 0
        %2976 = vmatprep.subr.bf16.mxu0 0
        %2977 = vmatpush1.bf16.xpose.msra.mxu0 0
        %2978 = vmatprep.subr.bf16.mxu0 0
        %2979 = vmatpush1.bf16.xpose.msra.mxu0 0
        %2980 = vmatprep.subr.bf16.mxu0 0
        %2981 = vmatpush1.bf16.xpose.msra.mxu0 0
        %2982 = vmatprep.subr.bf16.mxu0 0
        %2983 = vmatpush1.bf16.xpose.msra.mxu0 0
        %2984 = vmatprep.subr.bf16.mxu0 0
        %2985 = vmatpush1.bf16.xpose.msra.mxu0 0
        %2986 = vmatprep.subr.bf16.mxu0 0
        %2987 = vmatpush1.bf16.xpose.msra.mxu0 0
        %2988 = vmatprep.subr.bf16.mxu0 0
        %2989 = vmatpush1.bf16.xpose.msra.mxu0 0
        %2990 = vmatprep.subr.bf16.mxu0 0
        %2991 = vmatpush1.bf16.xpose.msra.mxu0 0
        %2992 = vmatprep.subr.bf16.mxu0 0
        %2993 = vmatpush1.bf16.xpose.msra.mxu0 0
        %2994 = vmatprep.subr.bf16.mxu0 0
        %2995 = vmatpush1.bf16.xpose.msra.mxu0 0
        %2996 = vmatprep.subr.bf16.mxu0 0
        %2997 = vmatpush1.bf16.xpose.msra.mxu0 0
        %2998 = vmatprep.mubr.bf16.mxu0 0
        %2999 = vmatmul.mubr.bf16.gmra.mrb[0].mxu0 %v2958
        %v3000 = vpop.f32.mrb[0].mxu0
        %v3001 = vadd.f32 0.0, %v3000
        %v3002 = vpop.f32.mrb[0].mxu0
        %v3003 = vpop.f32.mrb[0].mxu0
        %v3004 = vpop.f32.mrb[0].mxu0
        %3005 = vdwg.mxu0
        %v3006 = vsel %vm1279, %v2588, 0.0
        %v3007 = vsel %vm1279, %v2647, 0.0
        %v3008 = vadd.f32 %v3006, %v3007
        %v3009 = vsel %vm1279, %v2706, 0.0
        %v3010 = vadd.f32 %v3008, %v3009
        %v3011 = vsel %vm1279, %v2765, 0.0
        %v3012 = vadd.f32 %v3010, %v3011
        %v3013 = vsel %vm1279, %v2824, 0.0
        %v3014 = vadd.f32 %v3012, %v3013
        %v3015 = vsel %vm1279, %v2883, 0.0
        %v3016 = vadd.f32 %v3014, %v3015
        %v3017 = vsel %vm1279, %v2942, 0.0
        %v3018 = vadd.f32 %v3016, %v3017
        %v3019 = vsel %vm1279, %v3001, 0.0
        %v3020 = vadd.f32 %v3018, %v3019
        %v3021 = vld [vmem:[%s9] sm:$0x1]
        %v3023 = vlaneseq
        %v3024 = vshrl.u32 %v3023, 7
        %v3025 = vsub.s32 0, %v3024
        %v3026 = vrot.slane %v3021, %v3025
        %v3028 = vadd.f32 %v3020, %v3026
        %3029 = vst.msk [vmem:[%s350] sm:$0xff] %vm1279, %v3028
        %s3030 = sand.u32 %s247, 1
        %s3031 = scalar_lea.sflag [#allocation5], %s3030
        %s3032 = sand.u32 %s247, 1
        %s3033 = smul.addr %s3032, 8
        %s3034 = scalar_lea.vmem [#allocation4], %s3033
        // Predicated region
        $region65: #{tpu_custom_call.1} parent=59 // pred_check
          %p3035 = pneg %p257
        $region66: #{tpu_custom_call.1} parent=59 // pred_check_branch
          %3037 = sbr.rel (%p3035) target = $region68
        $region67: #{tpu_custom_call.1} parent=59 // pred_region
          %s3039 = ssub.s32 128, 128
          %3040 = vsyncadd %s3031, %s3039
          %s3041 = smul.addr %s24, 128
          %s3042 = scalar_lea.hbm %s10, %s3041
          %s3044 = sshll.u32 %s3034, 4
          %s3045 = int_to_ptr.vmem [resolvable:$true] %s3044
          %3047 = dma.vmem_to_hbm [thread:$0]  %s3045, 128, %s3042, %s3031
        $region68: #{tpu_custom_call.1} parent=59 // pred_fallthru
          _
      $region60: #{tpu_custom_call.1} parent=5 // pred_fallthru
        _
      %p3048 = scmp.le.s32.totalorder 2, %s19
      // Predicated region
      $region69: #{tpu_custom_call.1} parent=5 // pred_check
        %p3049 = pneg %p3048
      $region70: #{tpu_custom_call.1} parent=5 // pred_check_branch
        %3051 = sbr.rel (%p3049) target = $region72
      $region71: #{tpu_custom_call.1} parent=5 // pred_region
        %s3052 = ssub.s32 %s19, 2
        // Predicated region
        $region73: #{tpu_custom_call.1} parent=71 // pred_check
          %p3053 = pneg %p263
        $region74: #{tpu_custom_call.1} parent=71 // pred_check_branch
          %3055 = sbr.rel (%p3053) target = $region76
        $region75: #{tpu_custom_call.1} parent=71 // pred_region
          %s3056 = sand.u32 %s248, 1
          %s3057 = scalar_lea.sflag [#allocation5], %s3056
          %s3058 = sand.u32 %s248, 1
          %s3059 = smul.addr %s3058, 8
          %s3060 = scalar_lea.vmem [#allocation4], %s3059
          %3061 = dma.done %s3057, 128
        $region76: #{tpu_custom_call.1} parent=71 // pred_fallthru
          _
      $region72: #{tpu_custom_call.1} parent=5 // pred_fallthru
        _
    $region6: #{tpu_custom_call.1} parent=1 // loop_footer
      %s23 = sadd.s32 1, %s19
    $region7: #{tpu_custom_call.1} parent=1 // loop_footer_branch
      %18 = sbr.rel target = $region3
    $region8: #{tpu_custom_call.1} parent=1 // loop_exit
      _
    %3062 = vsyncpa [#allocation5], 1
    %s3063 = scalar_lea.sflag [#allocation5], 1
    %3064 = vsyncpa %s3063, 1

</llo_original>
